<compile_context>
chip_gen: v7x
topology: tpu7x:2x2x1
jax: 0.10.0
libtpu: 0.0.40
codegen_flags: <defaults>
</compile_context>

<pallas_src>
import math

import jax
import jax.numpy as jnp
from jax.experimental import pallas as pl
from jax.experimental.pallas import tpu as pltpu

# ----------------------------- small ALBERT-like config -----------------------------
VOCAB = 50
MAX_POS = 16
MAX_NBR = 4            # neighbour-table width for the ASCC convex hull
EMBED = 16             # ALBERT embedding_size (< hidden_size, mapped up in the encoder)
HIDDEN = 32
NUM_HEADS = 4
HEAD_DIM = HIDDEN // NUM_HEADS
INTERMEDIATE = 64
NUM_LAYERS = 2         # num_hidden_layers; ALBERT shares ONE layer's weights across all of them
NUM_LABELS = 2
BATCH = 2
SEQ = 8
LN_EPS = 1e-12
ATT_SCALE = 1.0 / math.sqrt(HEAD_DIM)
OUT_W = 128            # lane-dense classifier output width (cols >= NUM_LABELS are zero)
VEC_W = 128            # packed 1-D parameter slab width (>= max(3H, I, OUT_W))
N_VEC = 13

# vec-slab row layout:
#  0 emb_ln_gamma(E)   1 emb_ln_beta(E)   2 b_map(H)       3 b_qkv(3H, q-part scaled)
#  4 b_attn_out(H)     5 attn_ln_g(H)     6 attn_ln_b(H)   7 b_ffn_in(I)
#  8 b_ffn_out(H)      9 ffn_ln_g(H)     10 ffn_ln_b(H)   11 b_pool(H)   12 b_cls(OUT_W)


# ----------------------------- in-kernel helpers -----------------------------
def _layer_norm(x, gamma, beta):
    mu = jnp.mean(x, axis=-1, keepdims=True)
    var = jnp.mean(jnp.square(x - mu), axis=-1, keepdims=True)
    return (x - mu) * jax.lax.rsqrt(var + LN_EPS) * gamma + beta


def _gelu_new(x):
    # ALBERT's default hidden_act is "gelu_new" (tanh approximation), which this matches.
    c = math.sqrt(2.0 / math.pi)
    return 0.5 * x * (1.0 + jnp.tanh(c * (x + 0.044715 * x * x * x)))


# ----------------------------- the fused ALBERT-classifier kernel -----------------------------
def albert_fwd_kernel(emb_ref, bias_ref, wqkv_ref, wao_ref, wi_ref, wo_ref,
                      proj_ref, vec_ref, out_ref):
    bs = emb_ref.shape[0]                       # B*S rows of this half (clean or adv)

    V = vec_ref[...]                            # [N_VEC, VEC_W]  all biases / gammas / betas
    PW = proj_ref[...]                          # [E+2H, OUT_W]   mapping | pooler | classifier
    w_map = PW[:EMBED, :HIDDEN]
    w_pool = PW[EMBED:EMBED + HIDDEN, :HIDDEN]
    w_cls = PW[EMBED + HIDDEN:, :]              # [H, OUT_W] (lane-padded)

    wqkv = wqkv_ref[...]                        # [H, 3H] (q-columns pre-scaled by 1/sqrt(dh))
    wao = wao_ref[...]                          # [H, H]
    wi = wi_ref[...]                            # [H, I]
    wo = wo_ref[...]                            # [I, H]
    bias = bias_ref[...]                        # [BS, BS] additive attention bias (2-D, shared
                                                #   by every head via implicit broadcast)

    # ---- embeddings: LayerNorm + embedding_hidden_mapping_in (dropout = eval identity) ----
    x = emb_ref[...]                                                     # [BS, E]
    x = _layer_norm(x, V[0:1, :EMBED], V[1:2, :EMBED])
    h = jnp.dot(x, w_map, preferred_element_type=jnp.float32) + V[2:3, :HIDDEN]   # [BS, H]

    # ---- shared ALBERT layer applied NUM_LAYERS times; weights stay resident in VMEM ----
    # TODO(synk): with the real 12 layers, switch this static unroll to lax.fori_loop carrying
    # h to bound vreg live ranges; at NUM_LAYERS=2 the unroll is fine.
    for _ in range(NUM_LAYERS):
        # one fused QKV matmul: [BS,H] x [H,3H]
        qkv = jnp.dot(h, wqkv, preferred_element_type=jnp.float32) + V[3:4, :3 * HIDDEN]

        attn = jnp.zeros((bs, HIDDEN), jnp.float32)
        for n in range(NUM_HEADS):
            lo = n * HEAD_DIM
            hi = lo + HEAD_DIM
            q_n = qkv[:, lo:hi]                                 # [BS, DH]
            k_n = qkv[:, HIDDEN + lo:HIDDEN + hi]               # [BS, DH]
            v_n = qkv[:, 2 * HIDDEN + lo:2 * HIDDEN + hi]       # [BS, DH]

            # Q.K^T without materializing a transposed K (contract dim 1 of both operands)
            s = jax.lax.dot_general(q_n, k_n, (((1,), (1,)), ((), ())),
                                    preferred_element_type=jnp.float32)   # [BS, BS]
            s = s + bias
            m = jnp.max(s, axis=-1, keepdims=True)
            e = jnp.exp(s - m)
            p = e * pl.reciprocal(jnp.sum(e, axis=-1, keepdims=True), approx=True)

            ctx = jnp.dot(p, v_n, preferred_element_type=jnp.float32)     # [BS, DH]
            # accumulate the output projection per head -> no merged-head buffer needed
            attn = attn + jnp.dot(ctx, wao[lo:hi, :], preferred_element_type=jnp.float32)

        attn = attn + V[4:5, :HIDDEN]
        h = _layer_norm(attn + h, V[5:6, :HIDDEN], V[6:7, :HIDDEN])

        inter = _gelu_new(jnp.dot(h, wi, preferred_element_type=jnp.float32)
                          + V[7:8, :INTERMEDIATE])
        ffn = jnp.dot(inter, wo, preferred_element_type=jnp.float32) + V[8:9, :HIDDEN]
        h = _layer_norm(ffn + h, V[9:10, :HIDDEN], V[10:11, :HIDDEN])

    # ---- pooler + classifier on the B [CLS] rows only (one-hot select matmul) ----
    row_i = jax.lax.broadcasted_iota(jnp.int32, (BATCH, bs), 0)
    col_i = jax.lax.broadcasted_iota(jnp.int32, (BATCH, bs), 1)
    sel = (col_i == row_i * SEQ).astype(jnp.float32)                      # [B, BS]
    h_cls = jnp.dot(sel, h, preferred_element_type=jnp.float32)           # [B, H]

    pooled = jnp.tanh(jnp.dot(h_cls, w_pool, preferred_element_type=jnp.float32)
                      + V[11:12, :HIDDEN])
    logits = jnp.dot(pooled, w_cls, preferred_element_type=jnp.float32) + V[12:13, :]
    out_ref[0] = logits                        # [B, OUT_W] lane-dense (cols >= NUM_LABELS = 0)


def albert_classifier_apply(emb2d, attn_bias, slabs):
    """One pallas_call, grid=(2,): clean half and adversarial half in parallel."""
    w_qkv, wao, wi, wo, proj_w, vecs = slabs
    tbs = emb2d.shape[0]
    bs = tbs // 2

    def cspec(arr):
        nd = arr.ndim
        return pl.BlockSpec(arr.shape, lambda i, _n=nd: (0,) * _n)   # resident across grid

    return pl.pallas_call(
        albert_fwd_kernel,
        out_shape=jax.ShapeDtypeStruct((2, BATCH, OUT_W), jnp.float32),
        grid=(2,),
        in_specs=[
            pl.BlockSpec((bs, EMBED), lambda i: (i, 0)),   # clean rows | adv rows
            cspec(attn_bias),                              # [BS, BS] additive bias (shared)
            cspec(w_qkv), cspec(wao), cspec(wi), cspec(wo),
            cspec(proj_w), cspec(vecs),
        ],
        out_specs=pl.BlockSpec((1, BATCH, OUT_W), lambda i: (i, 0, 0)),
        compiler_params=pltpu.CompilerParams(dimension_semantics=("parallel",)),
    )(emb2d, attn_bias, w_qkv, wao, wi, wo, proj_w, vecs)


# ----------------------------- ASCCAlbertModel.forward (num_steps = 0 path) -----------------------------
def ascc_albert_forward(params, input_ids, attention_mask, token_type_ids, key):
    """Returns (clean_logits, adv_logits) like ASCCAlbertModel.forward.

    Dropouts are eval-mode identities.  The num_steps Adam refinement of the neighbour
    weights `w` is not run (num_steps = 0 path).
    """
    B, S = input_ids.shape
    tbs = 2 * B * S
    word_emb = params["word_embeddings"]        # [V, E]
    pos_emb = params["position_embeddings"]     # [MAX_POS, E]
    type_emb = params["token_type_embeddings"]  # [2, E]
    nbrs = params["nbrs"]                       # [V, MAX_NBR] int32 (0 = no neighbour)

    # ---- embedding-side gathers (left to XLA; gather has no clean Pallas TPU equivalent) ----
    clean_tok = word_emb[input_ids]                              # [B,S,E]
    nbr_ids = nbrs[input_ids]                                    # [B,S,N]
    nbr_emb = word_emb[nbr_ids]                                  # [B,S,N,E]
    wmask = (nbr_ids != 0).astype(jnp.float32)[..., None]        # [B,S,N,1]

    # ASCC adversarial convex combination over the neighbour simplex (kaiming-normal init w).
    # TODO(synk): the num_steps Adam refinement of w (adv KL loss backward through the
    # encoder) is not implemented; it would need a custom_vjp for the Pallas encoder.
    std = math.sqrt(2.0 / (S * MAX_NBR))
    w_adv = std * jax.random.normal(key, (B, S, MAX_NBR, 1), jnp.float32)
    w_after_mask = wmask * w_adv + (1.0 - wmask) * (-999.0)
    p = jax.nn.softmax(w_after_mask, axis=-2)
    adv_tok = jnp.sum(nbr_emb * p * wmask, axis=2)               # [B,S,E]

    pos = pos_emb[:S][None, :, :]
    typ = type_emb[token_type_ids]
    emb_clean = clean_tok + pos + typ
    emb_adv = adv_tok + pos + typ

    # stack clean + adv along the batch axis -> one launch; grid axis 0 splits the halves
    emb2d = jnp.concatenate([emb_clean, emb_adv], axis=0).reshape(tbs, EMBED)

    # additive attention bias for ONE half (both halves use the same attention_mask):
    # keep key j for query i iff same sequence AND key j not padded; else -1e4 (HF-style).
    # TODO(synk): at real sequence lengths, synthesize this in-kernel from a per-key keep
    # vector + segment ids instead of a dense O((BS)^2) input.
    key_keep = attention_mask.astype(jnp.float32).reshape(B * S)
    seg = jnp.repeat(jnp.arange(B, dtype=jnp.int32), S)
    same_seq = seg[:, None] == seg[None, :]
    keep = jnp.where(same_seq, key_keep[None, :], 0.0)
    attn_bias = (1.0 - keep) * -10000.0                          # [BS, BS]

    logits_pad = albert_classifier_apply(emb2d, attn_bias, params["slabs"])   # [2, B, OUT_W]
    clean_logits = logits_pad[0, :, :NUM_LABELS]
    adv_logits = logits_pad[1, :, :NUM_LABELS]
    return clean_logits, adv_logits


# ----------------------------- deterministic parameter construction -----------------------------
def init_params(key):
    ks = jax.random.split(key, 18)

    def rnd(k, shape):
        return 0.02 * jax.random.normal(k, shape, jnp.float32)

    word_emb = rnd(ks[0], (VOCAB, EMBED))
    pos_emb = rnd(ks[1], (MAX_POS, EMBED))
    type_emb = rnd(ks[2], (2, EMBED))
    emb_ln_g = jnp.ones((EMBED,), jnp.float32)
    emb_ln_b = jnp.zeros((EMBED,), jnp.float32)

    w_map = rnd(ks[3], (EMBED, HIDDEN));        b_map = rnd(ks[4], (HIDDEN,))
    wq = rnd(ks[5], (HIDDEN, HIDDEN));          bq = rnd(ks[6], (HIDDEN,))
    wk = rnd(ks[7], (HIDDEN, HIDDEN));          bk = jnp.zeros((HIDDEN,), jnp.float32)
    wv = rnd(ks[8], (HIDDEN, HIDDEN));          bv = jnp.zeros((HIDDEN,), jnp.float32)
    wao = rnd(ks[9], (HIDDEN, HIDDEN));         bao = jnp.zeros((HIDDEN,), jnp.float32)
    attn_ln_g = jnp.ones((HIDDEN,), jnp.float32)
    attn_ln_b = jnp.zeros((HIDDEN,), jnp.float32)
    wi = rnd(ks[10], (HIDDEN, INTERMEDIATE));   bi = jnp.zeros((INTERMEDIATE,), jnp.float32)
    wo = rnd(ks[11], (INTERMEDIATE, HIDDEN));   bo = jnp.zeros((HIDDEN,), jnp.float32)
    ffn_ln_g = jnp.ones((HIDDEN,), jnp.float32)
    ffn_ln_b = jnp.zeros((HIDDEN,), jnp.float32)
    w_pool = rnd(ks[12], (HIDDEN, HIDDEN));     b_pool = jnp.zeros((HIDDEN,), jnp.float32)
    w_cls = rnd(ks[13], (HIDDEN, NUM_LABELS));  b_cls = rnd(ks[14], (NUM_LABELS,))

    # ---- pack into a few slabs (few large DMAs; single shared set for all ALBERT layers) ----
    # fused QKV weight slab; 1/sqrt(head_dim) folded into the Q columns
    w_qkv = jnp.concatenate([wq * ATT_SCALE, wk, wv], axis=1)            # [H, 3H]
    b_qkv = jnp.concatenate([bq * ATT_SCALE, bk, bv], axis=0)            # [3H]

    def pad_cols(w, width):
        return jnp.zeros((w.shape[0], width), jnp.float32).at[:, :w.shape[1]].set(w)

    # mapping | pooler | classifier, all lane-padded to OUT_W -> one [E+2H, OUT_W] slab
    proj_w = jnp.concatenate([pad_cols(w_map, OUT_W), pad_cols(w_pool, OUT_W),
                              pad_cols(w_cls, OUT_W)], axis=0)           # [E+2H, OUT_W]

    def vec_row(v):
        return jnp.zeros((VEC_W,), jnp.float32).at[:v.shape[0]].set(v)

    vec_rows = [emb_ln_g, emb_ln_b, b_map, b_qkv, bao, attn_ln_g, attn_ln_b,
                bi, bo, ffn_ln_g, ffn_ln_b, b_pool, b_cls]
    vecs = jnp.stack([vec_row(v) for v in vec_rows], axis=0)             # [N_VEC, VEC_W]
    assert vecs.shape == (N_VEC, VEC_W)

    # deterministic synonym-neighbour table (column 0 = the token itself, 0 = "no neighbour")
    nbr_extra = jax.random.randint(ks[15], (VOCAB, MAX_NBR - 1), 1, VOCAB)
    keep = jax.random.bernoulli(ks[16], 0.6, (VOCAB, MAX_NBR - 1))
    nbr_extra = jnp.where(keep, nbr_extra, 0).astype(jnp.int32)
    nbrs = jnp.concatenate([jnp.arange(VOCAB, dtype=jnp.int32)[:, None], nbr_extra], axis=1)

    return dict(word_embeddings=word_emb, position_embeddings=pos_emb,
                token_type_embeddings=type_emb, nbrs=nbrs,
                slabs=(w_qkv, wao, wi, wo, proj_w, vecs))


if __name__ == "__main__":
    root = jax.random.PRNGKey(0)
    kp, kin, kw = jax.random.split(root, 3)

    params = init_params(kp)
    input_ids = jax.random.randint(kin, (BATCH, SEQ), 1, VOCAB)
    attention_mask = jnp.ones((BATCH, SEQ), jnp.int32).at[1, SEQ - 2:].set(0)  # pad 2 tokens
    token_type_ids = jnp.zeros((BATCH, SEQ), jnp.int32)

    fwd = jax.jit(ascc_albert_forward)
    clean_logits, adv_logits = fwd(params, input_ids, attention_mask, token_type_ids, kw)
    clean_logits, adv_logits = jax.block_until_ready((clean_logits, adv_logits))

    assert clean_logits.shape == (BATCH, NUM_LABELS)
    assert adv_logits.shape == (BATCH, NUM_LABELS)
    assert bool(jnp.all(jnp.isfinite(clean_logits)))
    assert bool(jnp.all(jnp.isfinite(adv_logits)))
    print("KERNEL_OK")
</pallas_src>

<mosaic_0001>
module attributes {stable_mosaic.version = 11 : i64} {
  func.func @albert_fwd_kernel(%arg0: i32, %arg1: memref<16x16xf32, #tpu.memory_space<vmem>>, %arg2: memref<16x16xf32, #tpu.memory_space<vmem>>, %arg3: memref<32x96xf32, #tpu.memory_space<vmem>>, %arg4: memref<32x32xf32, #tpu.memory_space<vmem>>, %arg5: memref<32x64xf32, #tpu.memory_space<vmem>>, %arg6: memref<64x32xf32, #tpu.memory_space<vmem>>, %arg7: memref<80x128xf32, #tpu.memory_space<vmem>>, %arg8: memref<13x128xf32, #tpu.memory_space<vmem>>, %arg9: memref<1x2x128xf32, #tpu.memory_space<vmem>>) attributes {dimension_semantics = [#tpu.dimension_semantics<parallel>], iteration_bounds = array<i64: 2>, scalar_prefetch = 0 : i64, scratch_operands = 0 : i64, tpu.core_type = #tpu.core_type<tc>, window_params = [{transform_indices = @transform_0, window_bounds = array<i64: 16, 16>}, {pipeline_mode = #tpu.pipeline_mode<synchronous>, transform_indices = @transform_1, window_bounds = array<i64: 16, 16>}, {pipeline_mode = #tpu.pipeline_mode<synchronous>, transform_indices = @transform_2, window_bounds = array<i64: 32, 96>}, {pipeline_mode = #tpu.pipeline_mode<synchronous>, transform_indices = @transform_3, window_bounds = array<i64: 32, 32>}, {pipeline_mode = #tpu.pipeline_mode<synchronous>, transform_indices = @transform_4, window_bounds = array<i64: 32, 64>}, {pipeline_mode = #tpu.pipeline_mode<synchronous>, transform_indices = @transform_5, window_bounds = array<i64: 64, 32>}, {pipeline_mode = #tpu.pipeline_mode<synchronous>, transform_indices = @transform_6, window_bounds = array<i64: 80, 128>}, {pipeline_mode = #tpu.pipeline_mode<synchronous>, transform_indices = @transform_7, window_bounds = array<i64: 13, 128>}, {transform_indices = @transform_8, window_bounds = array<i64: 1, 2, 128>}]} {
    %c0 = arith.constant 0 : index
    %c0_0 = arith.constant 0 : index
    %0 = vector.load %arg8[%c0, %c0_0] : memref<13x128xf32, #tpu.memory_space<vmem>>, vector<13x128xf32>
    %c0_1 = arith.constant 0 : index
    %c0_2 = arith.constant 0 : index
    %1 = vector.load %arg7[%c0_1, %c0_2] : memref<80x128xf32, #tpu.memory_space<vmem>>, vector<80x128xf32>
    %2 = vector.extract_strided_slice %1 {offsets = [0, 0], sizes = [16, 32], strides = [1, 1]} : vector<80x128xf32> to vector<16x32xf32>
    %3 = vector.extract_strided_slice %1 {offsets = [16, 0], sizes = [32, 32], strides = [1, 1]} : vector<80x128xf32> to vector<32x32xf32>
    %4 = vector.extract_strided_slice %1 {offsets = [48, 0], sizes = [32, 128], strides = [1, 1]} : vector<80x128xf32> to vector<32x128xf32>
    %c0_3 = arith.constant 0 : index
    %c0_4 = arith.constant 0 : index
    %5 = vector.load %arg3[%c0_3, %c0_4] : memref<32x96xf32, #tpu.memory_space<vmem>>, vector<32x96xf32>
    %c0_5 = arith.constant 0 : index
    %c0_6 = arith.constant 0 : index
    %6 = vector.load %arg4[%c0_5, %c0_6] : memref<32x32xf32, #tpu.memory_space<vmem>>, vector<32x32xf32>
    %c0_7 = arith.constant 0 : index
    %c0_8 = arith.constant 0 : index
    %7 = vector.load %arg5[%c0_7, %c0_8] : memref<32x64xf32, #tpu.memory_space<vmem>>, vector<32x64xf32>
    %c0_9 = arith.constant 0 : index
    %c0_10 = arith.constant 0 : index
    %8 = vector.load %arg6[%c0_9, %c0_10] : memref<64x32xf32, #tpu.memory_space<vmem>>, vector<64x32xf32>
    %c0_11 = arith.constant 0 : index
    %c0_12 = arith.constant 0 : index
    %9 = vector.load %arg2[%c0_11, %c0_12] : memref<16x16xf32, #tpu.memory_space<vmem>>, vector<16x16xf32>
    %c0_13 = arith.constant 0 : index
    %c0_14 = arith.constant 0 : index
    %10 = vector.load %arg1[%c0_13, %c0_14] : memref<16x16xf32, #tpu.memory_space<vmem>>, vector<16x16xf32>
    %11 = vector.extract_strided_slice %0 {offsets = [0, 0], sizes = [1, 16], strides = [1, 1]} : vector<13x128xf32> to vector<1x16xf32>
    %12 = vector.extract_strided_slice %0 {offsets = [1, 0], sizes = [1, 16], strides = [1, 1]} : vector<13x128xf32> to vector<1x16xf32>
    %cst = arith.constant dense<0.000000e+00> : vector<16xf32>
    %13 = vector.multi_reduction <add>, %10, %cst [1] : vector<16x16xf32> to vector<16xf32>
    %14 = vector.shape_cast %13 : vector<16xf32> to vector<16x1xf32>
    %cst_15 = arith.constant 1.600000e+01 : f32
    %15 = vector.broadcast %cst_15 : f32 to vector<16x1xf32>
    %16 = arith.divf %14, %15 : vector<16x1xf32>
    %17 = vector.broadcast %16 : vector<16x1xf32> to vector<16x16xf32>
    %18 = arith.subf %10, %17 : vector<16x16xf32>
    %19 = arith.mulf %18, %18 : vector<16x16xf32>
    %cst_16 = arith.constant dense<0.000000e+00> : vector<16xf32>
    %20 = vector.multi_reduction <add>, %19, %cst_16 [1] : vector<16x16xf32> to vector<16xf32>
    %21 = vector.shape_cast %20 : vector<16xf32> to vector<16x1xf32>
    %cst_17 = arith.constant 1.600000e+01 : f32
    %22 = vector.broadcast %cst_17 : f32 to vector<16x1xf32>
    %23 = arith.divf %21, %22 : vector<16x1xf32>
    %24 = vector.broadcast %16 : vector<16x1xf32> to vector<16x16xf32>
    %25 = arith.subf %10, %24 : vector<16x16xf32>
    %cst_18 = arith.constant 9.99999996E-13 : f32
    %26 = vector.broadcast %cst_18 : f32 to vector<16x1xf32>
    %27 = arith.addf %23, %26 : vector<16x1xf32>
    %28 = math.rsqrt %27 : vector<16x1xf32>
    %29 = vector.broadcast %28 : vector<16x1xf32> to vector<16x16xf32>
    %30 = arith.mulf %25, %29 : vector<16x16xf32>
    %31 = vector.broadcast %11 : vector<1x16xf32> to vector<16x16xf32>
    %32 = arith.mulf %30, %31 : vector<16x16xf32>
    %33 = vector.broadcast %12 : vector<1x16xf32> to vector<16x16xf32>
    %34 = arith.addf %32, %33 : vector<16x16xf32>
    %cst_19 = arith.constant dense<0.000000e+00> : vector<16x32xf32>
    %35 = tpu.matmul %34, %2, %cst_19 {dimension_numbers = #tpu.dot_dimension_numbers<[1], [0], [0], [1], [0, 0, 1, 1], [], []>} : vector<16x16xf32>, vector<16x32xf32>, vector<16x32xf32> -> vector<16x32xf32>
    %36 = vector.extract_strided_slice %0 {offsets = [2, 0], sizes = [1, 32], strides = [1, 1]} : vector<13x128xf32> to vector<1x32xf32>
    %37 = vector.broadcast %36 : vector<1x32xf32> to vector<16x32xf32>
    %38 = arith.addf %35, %37 : vector<16x32xf32>
    %cst_20 = arith.constant dense<0.000000e+00> : vector<16x96xf32>
    %39 = tpu.matmul %38, %5, %cst_20 {dimension_numbers = #tpu.dot_dimension_numbers<[1], [0], [0], [1], [0, 0, 1, 1], [], []>} : vector<16x32xf32>, vector<32x96xf32>, vector<16x96xf32> -> vector<16x96xf32>
    %40 = vector.extract_strided_slice %0 {offsets = [3, 0], sizes = [1, 96], strides = [1, 1]} : vector<13x128xf32> to vector<1x96xf32>
    %41 = vector.broadcast %40 : vector<1x96xf32> to vector<16x96xf32>
    %42 = arith.addf %39, %41 : vector<16x96xf32>
    %cst_21 = arith.constant 0.000000e+00 : f32
    %43 = vector.broadcast %cst_21 : f32 to vector<16x32xf32>
    %44 = vector.extract_strided_slice %42 {offsets = [0, 0], sizes = [16, 8], strides = [1, 1]} : vector<16x96xf32> to vector<16x8xf32>
    %45 = vector.extract_strided_slice %42 {offsets = [0, 32], sizes = [16, 8], strides = [1, 1]} : vector<16x96xf32> to vector<16x8xf32>
    %46 = vector.extract_strided_slice %42 {offsets = [0, 64], sizes = [16, 8], strides = [1, 1]} : vector<16x96xf32> to vector<16x8xf32>
    %cst_22 = arith.constant dense<0.000000e+00> : vector<16x16xf32>
    %47 = tpu.matmul %44, %45, %cst_22 {dimension_numbers = #tpu.dot_dimension_numbers<[1], [1], [0], [0], [0, 0, 1, 0], [], []>} : vector<16x8xf32>, vector<16x8xf32>, vector<16x16xf32> -> vector<16x16xf32>
    %48 = arith.addf %47, %9 : vector<16x16xf32>
    %cst_23 = arith.constant dense<0xFF800000> : vector<16xf32>
    %49 = vector.multi_reduction <maximumf>, %48, %cst_23 [1] : vector<16x16xf32> to vector<16xf32>
    %50 = vector.shape_cast %49 : vector<16xf32> to vector<16x1xf32>
    %51 = vector.broadcast %50 : vector<16x1xf32> to vector<16x16xf32>
    %52 = arith.subf %48, %51 : vector<16x16xf32>
    %53 = math.exp %52 : vector<16x16xf32>
    %cst_24 = arith.constant dense<0.000000e+00> : vector<16xf32>
    %54 = vector.multi_reduction <add>, %53, %cst_24 [1] : vector<16x16xf32> to vector<16xf32>
    %55 = vector.shape_cast %54 : vector<16xf32> to vector<16x1xf32>
    %56 = tpu.reciprocal %55 {approx = true} : vector<16x1xf32> -> vector<16x1xf32>
    %57 = vector.broadcast %56 : vector<16x1xf32> to vector<16x16xf32>
    %58 = arith.mulf %53, %57 : vector<16x16xf32>
    %cst_25 = arith.constant dense<0.000000e+00> : vector<16x8xf32>
    %59 = tpu.matmul %58, %46, %cst_25 {dimension_numbers = #tpu.dot_dimension_numbers<[1], [0], [0], [1], [0, 0, 1, 1], [], []>} : vector<16x16xf32>, vector<16x8xf32>, vector<16x8xf32> -> vector<16x8xf32>
    %60 = vector.extract_strided_slice %6 {offsets = [0, 0], sizes = [8, 32], strides = [1, 1]} : vector<32x32xf32> to vector<8x32xf32>
    %cst_26 = arith.constant dense<0.000000e+00> : vector<16x32xf32>
    %61 = tpu.matmul %59, %60, %cst_26 {dimension_numbers = #tpu.dot_dimension_numbers<[1], [0], [0], [1], [0, 0, 1, 1], [], []>} : vector<16x8xf32>, vector<8x32xf32>, vector<16x32xf32> -> vector<16x32xf32>
    %62 = arith.addf %43, %61 : vector<16x32xf32>
    %63 = vector.extract_strided_slice %42 {offsets = [0, 8], sizes = [16, 8], strides = [1, 1]} : vector<16x96xf32> to vector<16x8xf32>
    %64 = vector.extract_strided_slice %42 {offsets = [0, 40], sizes = [16, 8], strides = [1, 1]} : vector<16x96xf32> to vector<16x8xf32>
    %65 = vector.extract_strided_slice %42 {offsets = [0, 72], sizes = [16, 8], strides = [1, 1]} : vector<16x96xf32> to vector<16x8xf32>
    %cst_27 = arith.constant dense<0.000000e+00> : vector<16x16xf32>
    %66 = tpu.matmul %63, %64, %cst_27 {dimension_numbers = #tpu.dot_dimension_numbers<[1], [1], [0], [0], [0, 0, 1, 0], [], []>} : vector<16x8xf32>, vector<16x8xf32>, vector<16x16xf32> -> vector<16x16xf32>
    %67 = arith.addf %66, %9 : vector<16x16xf32>
    %cst_28 = arith.constant dense<0xFF800000> : vector<16xf32>
    %68 = vector.multi_reduction <maximumf>, %67, %cst_28 [1] : vector<16x16xf32> to vector<16xf32>
    %69 = vector.shape_cast %68 : vector<16xf32> to vector<16x1xf32>
    %70 = vector.broadcast %69 : vector<16x1xf32> to vector<16x16xf32>
    %71 = arith.subf %67, %70 : vector<16x16xf32>
    %72 = math.exp %71 : vector<16x16xf32>
    %cst_29 = arith.constant dense<0.000000e+00> : vector<16xf32>
    %73 = vector.multi_reduction <add>, %72, %cst_29 [1] : vector<16x16xf32> to vector<16xf32>
    %74 = vector.shape_cast %73 : vector<16xf32> to vector<16x1xf32>
    %75 = tpu.reciprocal %74 {approx = true} : vector<16x1xf32> -> vector<16x1xf32>
    %76 = vector.broadcast %75 : vector<16x1xf32> to vector<16x16xf32>
    %77 = arith.mulf %72, %76 : vector<16x16xf32>
    %cst_30 = arith.constant dense<0.000000e+00> : vector<16x8xf32>
    %78 = tpu.matmul %77, %65, %cst_30 {dimension_numbers = #tpu.dot_dimension_numbers<[1], [0], [0], [1], [0, 0, 1, 1], [], []>} : vector<16x16xf32>, vector<16x8xf32>, vector<16x8xf32> -> vector<16x8xf32>
    %79 = vector.extract_strided_slice %6 {offsets = [8, 0], sizes = [8, 32], strides = [1, 1]} : vector<32x32xf32> to vector<8x32xf32>
    %cst_31 = arith.constant dense<0.000000e+00> : vector<16x32xf32>
    %80 = tpu.matmul %78, %79, %cst_31 {dimension_numbers = #tpu.dot_dimension_numbers<[1], [0], [0], [1], [0, 0, 1, 1], [], []>} : vector<16x8xf32>, vector<8x32xf32>, vector<16x32xf32> -> vector<16x32xf32>
    %81 = arith.addf %62, %80 : vector<16x32xf32>
    %82 = vector.extract_strided_slice %42 {offsets = [0, 16], sizes = [16, 8], strides = [1, 1]} : vector<16x96xf32> to vector<16x8xf32>
    %83 = vector.extract_strided_slice %42 {offsets = [0, 48], sizes = [16, 8], strides = [1, 1]} : vector<16x96xf32> to vector<16x8xf32>
    %84 = vector.extract_strided_slice %42 {offsets = [0, 80], sizes = [16, 8], strides = [1, 1]} : vector<16x96xf32> to vector<16x8xf32>
    %cst_32 = arith.constant dense<0.000000e+00> : vector<16x16xf32>
    %85 = tpu.matmul %82, %83, %cst_32 {dimension_numbers = #tpu.dot_dimension_numbers<[1], [1], [0], [0], [0, 0, 1, 0], [], []>} : vector<16x8xf32>, vector<16x8xf32>, vector<16x16xf32> -> vector<16x16xf32>
    %86 = arith.addf %85, %9 : vector<16x16xf32>
    %cst_33 = arith.constant dense<0xFF800000> : vector<16xf32>
    %87 = vector.multi_reduction <maximumf>, %86, %cst_33 [1] : vector<16x16xf32> to vector<16xf32>
    %88 = vector.shape_cast %87 : vector<16xf32> to vector<16x1xf32>
    %89 = vector.broadcast %88 : vector<16x1xf32> to vector<16x16xf32>
    %90 = arith.subf %86, %89 : vector<16x16xf32>
    %91 = math.exp %90 : vector<16x16xf32>
    %cst_34 = arith.constant dense<0.000000e+00> : vector<16xf32>
    %92 = vector.multi_reduction <add>, %91, %cst_34 [1] : vector<16x16xf32> to vector<16xf32>
    %93 = vector.shape_cast %92 : vector<16xf32> to vector<16x1xf32>
    %94 = tpu.reciprocal %93 {approx = true} : vector<16x1xf32> -> vector<16x1xf32>
    %95 = vector.broadcast %94 : vector<16x1xf32> to vector<16x16xf32>
    %96 = arith.mulf %91, %95 : vector<16x16xf32>
    %cst_35 = arith.constant dense<0.000000e+00> : vector<16x8xf32>
    %97 = tpu.matmul %96, %84, %cst_35 {dimension_numbers = #tpu.dot_dimension_numbers<[1], [0], [0], [1], [0, 0, 1, 1], [], []>} : vector<16x16xf32>, vector<16x8xf32>, vector<16x8xf32> -> vector<16x8xf32>
    %98 = vector.extract_strided_slice %6 {offsets = [16, 0], sizes = [8, 32], strides = [1, 1]} : vector<32x32xf32> to vector<8x32xf32>
    %cst_36 = arith.constant dense<0.000000e+00> : vector<16x32xf32>
    %99 = tpu.matmul %97, %98, %cst_36 {dimension_numbers = #tpu.dot_dimension_numbers<[1], [0], [0], [1], [0, 0, 1, 1], [], []>} : vector<16x8xf32>, vector<8x32xf32>, vector<16x32xf32> -> vector<16x32xf32>
    %100 = arith.addf %81, %99 : vector<16x32xf32>
    %101 = vector.extract_strided_slice %42 {offsets = [0, 24], sizes = [16, 8], strides = [1, 1]} : vector<16x96xf32> to vector<16x8xf32>
    %102 = vector.extract_strided_slice %42 {offsets = [0, 56], sizes = [16, 8], strides = [1, 1]} : vector<16x96xf32> to vector<16x8xf32>
    %103 = vector.extract_strided_slice %42 {offsets = [0, 88], sizes = [16, 8], strides = [1, 1]} : vector<16x96xf32> to vector<16x8xf32>
    %cst_37 = arith.constant dense<0.000000e+00> : vector<16x16xf32>
    %104 = tpu.matmul %101, %102, %cst_37 {dimension_numbers = #tpu.dot_dimension_numbers<[1], [1], [0], [0], [0, 0, 1, 0], [], []>} : vector<16x8xf32>, vector<16x8xf32>, vector<16x16xf32> -> vector<16x16xf32>
    %105 = arith.addf %104, %9 : vector<16x16xf32>
    %cst_38 = arith.constant dense<0xFF800000> : vector<16xf32>
    %106 = vector.multi_reduction <maximumf>, %105, %cst_38 [1] : vector<16x16xf32> to vector<16xf32>
    %107 = vector.shape_cast %106 : vector<16xf32> to vector<16x1xf32>
    %108 = vector.broadcast %107 : vector<16x1xf32> to vector<16x16xf32>
    %109 = arith.subf %105, %108 : vector<16x16xf32>
    %110 = math.exp %109 : vector<16x16xf32>
    %cst_39 = arith.constant dense<0.000000e+00> : vector<16xf32>
    %111 = vector.multi_reduction <add>, %110, %cst_39 [1] : vector<16x16xf32> to vector<16xf32>
    %112 = vector.shape_cast %111 : vector<16xf32> to vector<16x1xf32>
    %113 = tpu.reciprocal %112 {approx = true} : vector<16x1xf32> -> vector<16x1xf32>
    %114 = vector.broadcast %113 : vector<16x1xf32> to vector<16x16xf32>
    %115 = arith.mulf %110, %114 : vector<16x16xf32>
    %cst_40 = arith.constant dense<0.000000e+00> : vector<16x8xf32>
    %116 = tpu.matmul %115, %103, %cst_40 {dimension_numbers = #tpu.dot_dimension_numbers<[1], [0], [0], [1], [0, 0, 1, 1], [], []>} : vector<16x16xf32>, vector<16x8xf32>, vector<16x8xf32> -> vector<16x8xf32>
    %117 = vector.extract_strided_slice %6 {offsets = [24, 0], sizes = [8, 32], strides = [1, 1]} : vector<32x32xf32> to vector<8x32xf32>
    %cst_41 = arith.constant dense<0.000000e+00> : vector<16x32xf32>
    %118 = tpu.matmul %116, %117, %cst_41 {dimension_numbers = #tpu.dot_dimension_numbers<[1], [0], [0], [1], [0, 0, 1, 1], [], []>} : vector<16x8xf32>, vector<8x32xf32>, vector<16x32xf32> -> vector<16x32xf32>
    %119 = arith.addf %100, %118 : vector<16x32xf32>
    %120 = vector.extract_strided_slice %0 {offsets = [4, 0], sizes = [1, 32], strides = [1, 1]} : vector<13x128xf32> to vector<1x32xf32>
    %121 = vector.broadcast %120 : vector<1x32xf32> to vector<16x32xf32>
    %122 = arith.addf %119, %121 : vector<16x32xf32>
    %123 = arith.addf %122, %38 : vector<16x32xf32>
    %124 = vector.extract_strided_slice %0 {offsets = [5, 0], sizes = [1, 32], strides = [1, 1]} : vector<13x128xf32> to vector<1x32xf32>
    %125 = vector.extract_strided_slice %0 {offsets = [6, 0], sizes = [1, 32], strides = [1, 1]} : vector<13x128xf32> to vector<1x32xf32>
    %cst_42 = arith.constant dense<0.000000e+00> : vector<16xf32>
    %126 = vector.multi_reduction <add>, %123, %cst_42 [1] : vector<16x32xf32> to vector<16xf32>
    %127 = vector.shape_cast %126 : vector<16xf32> to vector<16x1xf32>
    %cst_43 = arith.constant 3.200000e+01 : f32
    %128 = vector.broadcast %cst_43 : f32 to vector<16x1xf32>
    %129 = arith.divf %127, %128 : vector<16x1xf32>
    %130 = vector.broadcast %129 : vector<16x1xf32> to vector<16x32xf32>
    %131 = arith.subf %123, %130 : vector<16x32xf32>
    %132 = arith.mulf %131, %131 : vector<16x32xf32>
    %cst_44 = arith.constant dense<0.000000e+00> : vector<16xf32>
    %133 = vector.multi_reduction <add>, %132, %cst_44 [1] : vector<16x32xf32> to vector<16xf32>
    %134 = vector.shape_cast %133 : vector<16xf32> to vector<16x1xf32>
    %cst_45 = arith.constant 3.200000e+01 : f32
    %135 = vector.broadcast %cst_45 : f32 to vector<16x1xf32>
    %136 = arith.divf %134, %135 : vector<16x1xf32>
    %137 = vector.broadcast %129 : vector<16x1xf32> to vector<16x32xf32>
    %138 = arith.subf %123, %137 : vector<16x32xf32>
    %cst_46 = arith.constant 9.99999996E-13 : f32
    %139 = vector.broadcast %cst_46 : f32 to vector<16x1xf32>
    %140 = arith.addf %136, %139 : vector<16x1xf32>
    %141 = math.rsqrt %140 : vector<16x1xf32>
    %142 = vector.broadcast %141 : vector<16x1xf32> to vector<16x32xf32>
    %143 = arith.mulf %138, %142 : vector<16x32xf32>
    %144 = vector.broadcast %124 : vector<1x32xf32> to vector<16x32xf32>
    %145 = arith.mulf %143, %144 : vector<16x32xf32>
    %146 = vector.broadcast %125 : vector<1x32xf32> to vector<16x32xf32>
    %147 = arith.addf %145, %146 : vector<16x32xf32>
    %cst_47 = arith.constant dense<0.000000e+00> : vector<16x64xf32>
    %148 = tpu.matmul %147, %7, %cst_47 {dimension_numbers = #tpu.dot_dimension_numbers<[1], [0], [0], [1], [0, 0, 1, 1], [], []>} : vector<16x32xf32>, vector<32x64xf32>, vector<16x64xf32> -> vector<16x64xf32>
    %149 = vector.extract_strided_slice %0 {offsets = [7, 0], sizes = [1, 64], strides = [1, 1]} : vector<13x128xf32> to vector<1x64xf32>
    %150 = vector.broadcast %149 : vector<1x64xf32> to vector<16x64xf32>
    %151 = arith.addf %148, %150 : vector<16x64xf32>
    %cst_48 = arith.constant 5.000000e-01 : f32
    %152 = vector.broadcast %cst_48 : f32 to vector<16x64xf32>
    %153 = arith.mulf %152, %151 : vector<16x64xf32>
    %cst_49 = arith.constant 4.471500e-02 : f32
    %154 = vector.broadcast %cst_49 : f32 to vector<16x64xf32>
    %155 = arith.mulf %154, %151 : vector<16x64xf32>
    %156 = arith.mulf %155, %151 : vector<16x64xf32>
    %157 = arith.mulf %156, %151 : vector<16x64xf32>
    %158 = arith.addf %151, %157 : vector<16x64xf32>
    %cst_50 = arith.constant 0.797884583 : f32
    %159 = vector.broadcast %cst_50 : f32 to vector<16x64xf32>
    %160 = arith.mulf %159, %158 : vector<16x64xf32>
    %161 = math.tanh %160 : vector<16x64xf32>
    %cst_51 = arith.constant 1.000000e+00 : f32
    %162 = vector.broadcast %cst_51 : f32 to vector<16x64xf32>
    %163 = arith.addf %162, %161 : vector<16x64xf32>
    %164 = arith.mulf %153, %163 : vector<16x64xf32>
    %cst_52 = arith.constant dense<0.000000e+00> : vector<16x32xf32>
    %165 = tpu.matmul %164, %8, %cst_52 {dimension_numbers = #tpu.dot_dimension_numbers<[1], [0], [0], [1], [0, 0, 1, 1], [], []>} : vector<16x64xf32>, vector<64x32xf32>, vector<16x32xf32> -> vector<16x32xf32>
    %166 = vector.extract_strided_slice %0 {offsets = [8, 0], sizes = [1, 32], strides = [1, 1]} : vector<13x128xf32> to vector<1x32xf32>
    %167 = vector.broadcast %166 : vector<1x32xf32> to vector<16x32xf32>
    %168 = arith.addf %165, %167 : vector<16x32xf32>
    %169 = arith.addf %168, %147 : vector<16x32xf32>
    %170 = vector.extract_strided_slice %0 {offsets = [9, 0], sizes = [1, 32], strides = [1, 1]} : vector<13x128xf32> to vector<1x32xf32>
    %171 = vector.extract_strided_slice %0 {offsets = [10, 0], sizes = [1, 32], strides = [1, 1]} : vector<13x128xf32> to vector<1x32xf32>
    %cst_53 = arith.constant dense<0.000000e+00> : vector<16xf32>
    %172 = vector.multi_reduction <add>, %169, %cst_53 [1] : vector<16x32xf32> to vector<16xf32>
    %173 = vector.shape_cast %172 : vector<16xf32> to vector<16x1xf32>
    %cst_54 = arith.constant 3.200000e+01 : f32
    %174 = vector.broadcast %cst_54 : f32 to vector<16x1xf32>
    %175 = arith.divf %173, %174 : vector<16x1xf32>
    %176 = vector.broadcast %175 : vector<16x1xf32> to vector<16x32xf32>
    %177 = arith.subf %169, %176 : vector<16x32xf32>
    %178 = arith.mulf %177, %177 : vector<16x32xf32>
    %cst_55 = arith.constant dense<0.000000e+00> : vector<16xf32>
    %179 = vector.multi_reduction <add>, %178, %cst_55 [1] : vector<16x32xf32> to vector<16xf32>
    %180 = vector.shape_cast %179 : vector<16xf32> to vector<16x1xf32>
    %cst_56 = arith.constant 3.200000e+01 : f32
    %181 = vector.broadcast %cst_56 : f32 to vector<16x1xf32>
    %182 = arith.divf %180, %181 : vector<16x1xf32>
    %183 = vector.broadcast %175 : vector<16x1xf32> to vector<16x32xf32>
    %184 = arith.subf %169, %183 : vector<16x32xf32>
    %cst_57 = arith.constant 9.99999996E-13 : f32
    %185 = vector.broadcast %cst_57 : f32 to vector<16x1xf32>
    %186 = arith.addf %182, %185 : vector<16x1xf32>
    %187 = math.rsqrt %186 : vector<16x1xf32>
    %188 = vector.broadcast %187 : vector<16x1xf32> to vector<16x32xf32>
    %189 = arith.mulf %184, %188 : vector<16x32xf32>
    %190 = vector.broadcast %170 : vector<1x32xf32> to vector<16x32xf32>
    %191 = arith.mulf %189, %190 : vector<16x32xf32>
    %192 = vector.broadcast %171 : vector<1x32xf32> to vector<16x32xf32>
    %193 = arith.addf %191, %192 : vector<16x32xf32>
    %cst_58 = arith.constant dense<0.000000e+00> : vector<16x96xf32>
    %194 = tpu.matmul %193, %5, %cst_58 {dimension_numbers = #tpu.dot_dimension_numbers<[1], [0], [0], [1], [0, 0, 1, 1], [], []>} : vector<16x32xf32>, vector<32x96xf32>, vector<16x96xf32> -> vector<16x96xf32>
    %195 = vector.extract_strided_slice %0 {offsets = [3, 0], sizes = [1, 96], strides = [1, 1]} : vector<13x128xf32> to vector<1x96xf32>
    %196 = vector.broadcast %195 : vector<1x96xf32> to vector<16x96xf32>
    %197 = arith.addf %194, %196 : vector<16x96xf32>
    %cst_59 = arith.constant 0.000000e+00 : f32
    %198 = vector.broadcast %cst_59 : f32 to vector<16x32xf32>
    %199 = vector.extract_strided_slice %197 {offsets = [0, 0], sizes = [16, 8], strides = [1, 1]} : vector<16x96xf32> to vector<16x8xf32>
    %200 = vector.extract_strided_slice %197 {offsets = [0, 32], sizes = [16, 8], strides = [1, 1]} : vector<16x96xf32> to vector<16x8xf32>
    %201 = vector.extract_strided_slice %197 {offsets = [0, 64], sizes = [16, 8], strides = [1, 1]} : vector<16x96xf32> to vector<16x8xf32>
    %cst_60 = arith.constant dense<0.000000e+00> : vector<16x16xf32>
    %202 = tpu.matmul %199, %200, %cst_60 {dimension_numbers = #tpu.dot_dimension_numbers<[1], [1], [0], [0], [0, 0, 1, 0], [], []>} : vector<16x8xf32>, vector<16x8xf32>, vector<16x16xf32> -> vector<16x16xf32>
    %203 = arith.addf %202, %9 : vector<16x16xf32>
    %cst_61 = arith.constant dense<0xFF800000> : vector<16xf32>
    %204 = vector.multi_reduction <maximumf>, %203, %cst_61 [1] : vector<16x16xf32> to vector<16xf32>
    %205 = vector.shape_cast %204 : vector<16xf32> to vector<16x1xf32>
    %206 = vector.broadcast %205 : vector<16x1xf32> to vector<16x16xf32>
    %207 = arith.subf %203, %206 : vector<16x16xf32>
    %208 = math.exp %207 : vector<16x16xf32>
    %cst_62 = arith.constant dense<0.000000e+00> : vector<16xf32>
    %209 = vector.multi_reduction <add>, %208, %cst_62 [1] : vector<16x16xf32> to vector<16xf32>
    %210 = vector.shape_cast %209 : vector<16xf32> to vector<16x1xf32>
    %211 = tpu.reciprocal %210 {approx = true} : vector<16x1xf32> -> vector<16x1xf32>
    %212 = vector.broadcast %211 : vector<16x1xf32> to vector<16x16xf32>
    %213 = arith.mulf %208, %212 : vector<16x16xf32>
    %cst_63 = arith.constant dense<0.000000e+00> : vector<16x8xf32>
    %214 = tpu.matmul %213, %201, %cst_63 {dimension_numbers = #tpu.dot_dimension_numbers<[1], [0], [0], [1], [0, 0, 1, 1], [], []>} : vector<16x16xf32>, vector<16x8xf32>, vector<16x8xf32> -> vector<16x8xf32>
    %215 = vector.extract_strided_slice %6 {offsets = [0, 0], sizes = [8, 32], strides = [1, 1]} : vector<32x32xf32> to vector<8x32xf32>
    %cst_64 = arith.constant dense<0.000000e+00> : vector<16x32xf32>
    %216 = tpu.matmul %214, %215, %cst_64 {dimension_numbers = #tpu.dot_dimension_numbers<[1], [0], [0], [1], [0, 0, 1, 1], [], []>} : vector<16x8xf32>, vector<8x32xf32>, vector<16x32xf32> -> vector<16x32xf32>
    %217 = arith.addf %198, %216 : vector<16x32xf32>
    %218 = vector.extract_strided_slice %197 {offsets = [0, 8], sizes = [16, 8], strides = [1, 1]} : vector<16x96xf32> to vector<16x8xf32>
    %219 = vector.extract_strided_slice %197 {offsets = [0, 40], sizes = [16, 8], strides = [1, 1]} : vector<16x96xf32> to vector<16x8xf32>
    %220 = vector.extract_strided_slice %197 {offsets = [0, 72], sizes = [16, 8], strides = [1, 1]} : vector<16x96xf32> to vector<16x8xf32>
    %cst_65 = arith.constant dense<0.000000e+00> : vector<16x16xf32>
    %221 = tpu.matmul %218, %219, %cst_65 {dimension_numbers = #tpu.dot_dimension_numbers<[1], [1], [0], [0], [0, 0, 1, 0], [], []>} : vector<16x8xf32>, vector<16x8xf32>, vector<16x16xf32> -> vector<16x16xf32>
    %222 = arith.addf %221, %9 : vector<16x16xf32>
    %cst_66 = arith.constant dense<0xFF800000> : vector<16xf32>
    %223 = vector.multi_reduction <maximumf>, %222, %cst_66 [1] : vector<16x16xf32> to vector<16xf32>
    %224 = vector.shape_cast %223 : vector<16xf32> to vector<16x1xf32>
    %225 = vector.broadcast %224 : vector<16x1xf32> to vector<16x16xf32>
    %226 = arith.subf %222, %225 : vector<16x16xf32>
    %227 = math.exp %226 : vector<16x16xf32>
    %cst_67 = arith.constant dense<0.000000e+00> : vector<16xf32>
    %228 = vector.multi_reduction <add>, %227, %cst_67 [1] : vector<16x16xf32> to vector<16xf32>
    %229 = vector.shape_cast %228 : vector<16xf32> to vector<16x1xf32>
    %230 = tpu.reciprocal %229 {approx = true} : vector<16x1xf32> -> vector<16x1xf32>
    %231 = vector.broadcast %230 : vector<16x1xf32> to vector<16x16xf32>
    %232 = arith.mulf %227, %231 : vector<16x16xf32>
    %cst_68 = arith.constant dense<0.000000e+00> : vector<16x8xf32>
    %233 = tpu.matmul %232, %220, %cst_68 {dimension_numbers = #tpu.dot_dimension_numbers<[1], [0], [0], [1], [0, 0, 1, 1], [], []>} : vector<16x16xf32>, vector<16x8xf32>, vector<16x8xf32> -> vector<16x8xf32>
    %234 = vector.extract_strided_slice %6 {offsets = [8, 0], sizes = [8, 32], strides = [1, 1]} : vector<32x32xf32> to vector<8x32xf32>
    %cst_69 = arith.constant dense<0.000000e+00> : vector<16x32xf32>
    %235 = tpu.matmul %233, %234, %cst_69 {dimension_numbers = #tpu.dot_dimension_numbers<[1], [0], [0], [1], [0, 0, 1, 1], [], []>} : vector<16x8xf32>, vector<8x32xf32>, vector<16x32xf32> -> vector<16x32xf32>
    %236 = arith.addf %217, %235 : vector<16x32xf32>
    %237 = vector.extract_strided_slice %197 {offsets = [0, 16], sizes = [16, 8], strides = [1, 1]} : vector<16x96xf32> to vector<16x8xf32>
    %238 = vector.extract_strided_slice %197 {offsets = [0, 48], sizes = [16, 8], strides = [1, 1]} : vector<16x96xf32> to vector<16x8xf32>
    %239 = vector.extract_strided_slice %197 {offsets = [0, 80], sizes = [16, 8], strides = [1, 1]} : vector<16x96xf32> to vector<16x8xf32>
    %cst_70 = arith.constant dense<0.000000e+00> : vector<16x16xf32>
    %240 = tpu.matmul %237, %238, %cst_70 {dimension_numbers = #tpu.dot_dimension_numbers<[1], [1], [0], [0], [0, 0, 1, 0], [], []>} : vector<16x8xf32>, vector<16x8xf32>, vector<16x16xf32> -> vector<16x16xf32>
    %241 = arith.addf %240, %9 : vector<16x16xf32>
    %cst_71 = arith.constant dense<0xFF800000> : vector<16xf32>
    %242 = vector.multi_reduction <maximumf>, %241, %cst_71 [1] : vector<16x16xf32> to vector<16xf32>
    %243 = vector.shape_cast %242 : vector<16xf32> to vector<16x1xf32>
    %244 = vector.broadcast %243 : vector<16x1xf32> to vector<16x16xf32>
    %245 = arith.subf %241, %244 : vector<16x16xf32>
    %246 = math.exp %245 : vector<16x16xf32>
    %cst_72 = arith.constant dense<0.000000e+00> : vector<16xf32>
    %247 = vector.multi_reduction <add>, %246, %cst_72 [1] : vector<16x16xf32> to vector<16xf32>
    %248 = vector.shape_cast %247 : vector<16xf32> to vector<16x1xf32>
    %249 = tpu.reciprocal %248 {approx = true} : vector<16x1xf32> -> vector<16x1xf32>
    %250 = vector.broadcast %249 : vector<16x1xf32> to vector<16x16xf32>
    %251 = arith.mulf %246, %250 : vector<16x16xf32>
    %cst_73 = arith.constant dense<0.000000e+00> : vector<16x8xf32>
    %252 = tpu.matmul %251, %239, %cst_73 {dimension_numbers = #tpu.dot_dimension_numbers<[1], [0], [0], [1], [0, 0, 1, 1], [], []>} : vector<16x16xf32>, vector<16x8xf32>, vector<16x8xf32> -> vector<16x8xf32>
    %253 = vector.extract_strided_slice %6 {offsets = [16, 0], sizes = [8, 32], strides = [1, 1]} : vector<32x32xf32> to vector<8x32xf32>
    %cst_74 = arith.constant dense<0.000000e+00> : vector<16x32xf32>
    %254 = tpu.matmul %252, %253, %cst_74 {dimension_numbers = #tpu.dot_dimension_numbers<[1], [0], [0], [1], [0, 0, 1, 1], [], []>} : vector<16x8xf32>, vector<8x32xf32>, vector<16x32xf32> -> vector<16x32xf32>
    %255 = arith.addf %236, %254 : vector<16x32xf32>
    %256 = vector.extract_strided_slice %197 {offsets = [0, 24], sizes = [16, 8], strides = [1, 1]} : vector<16x96xf32> to vector<16x8xf32>
    %257 = vector.extract_strided_slice %197 {offsets = [0, 56], sizes = [16, 8], strides = [1, 1]} : vector<16x96xf32> to vector<16x8xf32>
    %258 = vector.extract_strided_slice %197 {offsets = [0, 88], sizes = [16, 8], strides = [1, 1]} : vector<16x96xf32> to vector<16x8xf32>
    %cst_75 = arith.constant dense<0.000000e+00> : vector<16x16xf32>
    %259 = tpu.matmul %256, %257, %cst_75 {dimension_numbers = #tpu.dot_dimension_numbers<[1], [1], [0], [0], [0, 0, 1, 0], [], []>} : vector<16x8xf32>, vector<16x8xf32>, vector<16x16xf32> -> vector<16x16xf32>
    %260 = arith.addf %259, %9 : vector<16x16xf32>
    %cst_76 = arith.constant dense<0xFF800000> : vector<16xf32>
    %261 = vector.multi_reduction <maximumf>, %260, %cst_76 [1] : vector<16x16xf32> to vector<16xf32>
    %262 = vector.shape_cast %261 : vector<16xf32> to vector<16x1xf32>
    %263 = vector.broadcast %262 : vector<16x1xf32> to vector<16x16xf32>
    %264 = arith.subf %260, %263 : vector<16x16xf32>
    %265 = math.exp %264 : vector<16x16xf32>
    %cst_77 = arith.constant dense<0.000000e+00> : vector<16xf32>
    %266 = vector.multi_reduction <add>, %265, %cst_77 [1] : vector<16x16xf32> to vector<16xf32>
    %267 = vector.shape_cast %266 : vector<16xf32> to vector<16x1xf32>
    %268 = tpu.reciprocal %267 {approx = true} : vector<16x1xf32> -> vector<16x1xf32>
    %269 = vector.broadcast %268 : vector<16x1xf32> to vector<16x16xf32>
    %270 = arith.mulf %265, %269 : vector<16x16xf32>
    %cst_78 = arith.constant dense<0.000000e+00> : vector<16x8xf32>
    %271 = tpu.matmul %270, %258, %cst_78 {dimension_numbers = #tpu.dot_dimension_numbers<[1], [0], [0], [1], [0, 0, 1, 1], [], []>} : vector<16x16xf32>, vector<16x8xf32>, vector<16x8xf32> -> vector<16x8xf32>
    %272 = vector.extract_strided_slice %6 {offsets = [24, 0], sizes = [8, 32], strides = [1, 1]} : vector<32x32xf32> to vector<8x32xf32>
    %cst_79 = arith.constant dense<0.000000e+00> : vector<16x32xf32>
    %273 = tpu.matmul %271, %272, %cst_79 {dimension_numbers = #tpu.dot_dimension_numbers<[1], [0], [0], [1], [0, 0, 1, 1], [], []>} : vector<16x8xf32>, vector<8x32xf32>, vector<16x32xf32> -> vector<16x32xf32>
    %274 = arith.addf %255, %273 : vector<16x32xf32>
    %275 = vector.extract_strided_slice %0 {offsets = [4, 0], sizes = [1, 32], strides = [1, 1]} : vector<13x128xf32> to vector<1x32xf32>
    %276 = vector.broadcast %275 : vector<1x32xf32> to vector<16x32xf32>
    %277 = arith.addf %274, %276 : vector<16x32xf32>
    %278 = arith.addf %277, %193 : vector<16x32xf32>
    %279 = vector.extract_strided_slice %0 {offsets = [5, 0], sizes = [1, 32], strides = [1, 1]} : vector<13x128xf32> to vector<1x32xf32>
    %280 = vector.extract_strided_slice %0 {offsets = [6, 0], sizes = [1, 32], strides = [1, 1]} : vector<13x128xf32> to vector<1x32xf32>
    %cst_80 = arith.constant dense<0.000000e+00> : vector<16xf32>
    %281 = vector.multi_reduction <add>, %278, %cst_80 [1] : vector<16x32xf32> to vector<16xf32>
    %282 = vector.shape_cast %281 : vector<16xf32> to vector<16x1xf32>
    %cst_81 = arith.constant 3.200000e+01 : f32
    %283 = vector.broadcast %cst_81 : f32 to vector<16x1xf32>
    %284 = arith.divf %282, %283 : vector<16x1xf32>
    %285 = vector.broadcast %284 : vector<16x1xf32> to vector<16x32xf32>
    %286 = arith.subf %278, %285 : vector<16x32xf32>
    %287 = arith.mulf %286, %286 : vector<16x32xf32>
    %cst_82 = arith.constant dense<0.000000e+00> : vector<16xf32>
    %288 = vector.multi_reduction <add>, %287, %cst_82 [1] : vector<16x32xf32> to vector<16xf32>
    %289 = vector.shape_cast %288 : vector<16xf32> to vector<16x1xf32>
    %cst_83 = arith.constant 3.200000e+01 : f32
    %290 = vector.broadcast %cst_83 : f32 to vector<16x1xf32>
    %291 = arith.divf %289, %290 : vector<16x1xf32>
    %292 = vector.broadcast %284 : vector<16x1xf32> to vector<16x32xf32>
    %293 = arith.subf %278, %292 : vector<16x32xf32>
    %cst_84 = arith.constant 9.99999996E-13 : f32
    %294 = vector.broadcast %cst_84 : f32 to vector<16x1xf32>
    %295 = arith.addf %291, %294 : vector<16x1xf32>
    %296 = math.rsqrt %295 : vector<16x1xf32>
    %297 = vector.broadcast %296 : vector<16x1xf32> to vector<16x32xf32>
    %298 = arith.mulf %293, %297 : vector<16x32xf32>
    %299 = vector.broadcast %279 : vector<1x32xf32> to vector<16x32xf32>
    %300 = arith.mulf %298, %299 : vector<16x32xf32>
    %301 = vector.broadcast %280 : vector<1x32xf32> to vector<16x32xf32>
    %302 = arith.addf %300, %301 : vector<16x32xf32>
    %cst_85 = arith.constant dense<0.000000e+00> : vector<16x64xf32>
    %303 = tpu.matmul %302, %7, %cst_85 {dimension_numbers = #tpu.dot_dimension_numbers<[1], [0], [0], [1], [0, 0, 1, 1], [], []>} : vector<16x32xf32>, vector<32x64xf32>, vector<16x64xf32> -> vector<16x64xf32>
    %304 = vector.extract_strided_slice %0 {offsets = [7, 0], sizes = [1, 64], strides = [1, 1]} : vector<13x128xf32> to vector<1x64xf32>
    %305 = vector.broadcast %304 : vector<1x64xf32> to vector<16x64xf32>
    %306 = arith.addf %303, %305 : vector<16x64xf32>
    %cst_86 = arith.constant 5.000000e-01 : f32
    %307 = vector.broadcast %cst_86 : f32 to vector<16x64xf32>
    %308 = arith.mulf %307, %306 : vector<16x64xf32>
    %cst_87 = arith.constant 4.471500e-02 : f32
    %309 = vector.broadcast %cst_87 : f32 to vector<16x64xf32>
    %310 = arith.mulf %309, %306 : vector<16x64xf32>
    %311 = arith.mulf %310, %306 : vector<16x64xf32>
    %312 = arith.mulf %311, %306 : vector<16x64xf32>
    %313 = arith.addf %306, %312 : vector<16x64xf32>
    %cst_88 = arith.constant 0.797884583 : f32
    %314 = vector.broadcast %cst_88 : f32 to vector<16x64xf32>
    %315 = arith.mulf %314, %313 : vector<16x64xf32>
    %316 = math.tanh %315 : vector<16x64xf32>
    %cst_89 = arith.constant 1.000000e+00 : f32
    %317 = vector.broadcast %cst_89 : f32 to vector<16x64xf32>
    %318 = arith.addf %317, %316 : vector<16x64xf32>
    %319 = arith.mulf %308, %318 : vector<16x64xf32>
    %cst_90 = arith.constant dense<0.000000e+00> : vector<16x32xf32>
    %320 = tpu.matmul %319, %8, %cst_90 {dimension_numbers = #tpu.dot_dimension_numbers<[1], [0], [0], [1], [0, 0, 1, 1], [], []>} : vector<16x64xf32>, vector<64x32xf32>, vector<16x32xf32> -> vector<16x32xf32>
    %321 = vector.extract_strided_slice %0 {offsets = [8, 0], sizes = [1, 32], strides = [1, 1]} : vector<13x128xf32> to vector<1x32xf32>
    %322 = vector.broadcast %321 : vector<1x32xf32> to vector<16x32xf32>
    %323 = arith.addf %320, %322 : vector<16x32xf32>
    %324 = arith.addf %323, %302 : vector<16x32xf32>
    %325 = vector.extract_strided_slice %0 {offsets = [9, 0], sizes = [1, 32], strides = [1, 1]} : vector<13x128xf32> to vector<1x32xf32>
    %326 = vector.extract_strided_slice %0 {offsets = [10, 0], sizes = [1, 32], strides = [1, 1]} : vector<13x128xf32> to vector<1x32xf32>
    %cst_91 = arith.constant dense<0.000000e+00> : vector<16xf32>
    %327 = vector.multi_reduction <add>, %324, %cst_91 [1] : vector<16x32xf32> to vector<16xf32>
    %328 = vector.shape_cast %327 : vector<16xf32> to vector<16x1xf32>
    %cst_92 = arith.constant 3.200000e+01 : f32
    %329 = vector.broadcast %cst_92 : f32 to vector<16x1xf32>
    %330 = arith.divf %328, %329 : vector<16x1xf32>
    %331 = vector.broadcast %330 : vector<16x1xf32> to vector<16x32xf32>
    %332 = arith.subf %324, %331 : vector<16x32xf32>
    %333 = arith.mulf %332, %332 : vector<16x32xf32>
    %cst_93 = arith.constant dense<0.000000e+00> : vector<16xf32>
    %334 = vector.multi_reduction <add>, %333, %cst_93 [1] : vector<16x32xf32> to vector<16xf32>
    %335 = vector.shape_cast %334 : vector<16xf32> to vector<16x1xf32>
    %cst_94 = arith.constant 3.200000e+01 : f32
    %336 = vector.broadcast %cst_94 : f32 to vector<16x1xf32>
    %337 = arith.divf %335, %336 : vector<16x1xf32>
    %338 = vector.broadcast %330 : vector<16x1xf32> to vector<16x32xf32>
    %339 = arith.subf %324, %338 : vector<16x32xf32>
    %cst_95 = arith.constant 9.99999996E-13 : f32
    %340 = vector.broadcast %cst_95 : f32 to vector<16x1xf32>
    %341 = arith.addf %337, %340 : vector<16x1xf32>
    %342 = math.rsqrt %341 : vector<16x1xf32>
    %343 = vector.broadcast %342 : vector<16x1xf32> to vector<16x32xf32>
    %344 = arith.mulf %339, %343 : vector<16x32xf32>
    %345 = vector.broadcast %325 : vector<1x32xf32> to vector<16x32xf32>
    %346 = arith.mulf %344, %345 : vector<16x32xf32>
    %347 = vector.broadcast %326 : vector<1x32xf32> to vector<16x32xf32>
    %348 = arith.addf %346, %347 : vector<16x32xf32>
    %349 = tpu.iota {dimensions = array<i32: 0>} : vector<2x16xi32>
    %350 = tpu.iota {dimensions = array<i32: 1>} : vector<2x16xi32>
    %c8_i32 = arith.constant 8 : i32
    %351 = vector.broadcast %c8_i32 : i32 to vector<2x16xi32>
    %352 = arith.muli %349, %351 : vector<2x16xi32>
    %353 = arith.cmpi eq, %350, %352 : vector<2x16xi32>
    %354 = arith.extui %353 : vector<2x16xi1> to vector<2x16xi32>
    %355 = arith.sitofp %354 : vector<2x16xi32> to vector<2x16xf32>
    %cst_96 = arith.constant dense<0.000000e+00> : vector<2x32xf32>
    %356 = tpu.matmul %355, %348, %cst_96 {dimension_numbers = #tpu.dot_dimension_numbers<[1], [0], [0], [1], [0, 0, 1, 1], [], []>} : vector<2x16xf32>, vector<16x32xf32>, vector<2x32xf32> -> vector<2x32xf32>
    %cst_97 = arith.constant dense<0.000000e+00> : vector<2x32xf32>
    %357 = tpu.matmul %356, %3, %cst_97 {dimension_numbers = #tpu.dot_dimension_numbers<[1], [0], [0], [1], [0, 0, 1, 1], [], []>} : vector<2x32xf32>, vector<32x32xf32>, vector<2x32xf32> -> vector<2x32xf32>
    %358 = vector.extract_strided_slice %0 {offsets = [11, 0], sizes = [1, 32], strides = [1, 1]} : vector<13x128xf32> to vector<1x32xf32>
    %359 = vector.broadcast %358 : vector<1x32xf32> to vector<2x32xf32>
    %360 = arith.addf %357, %359 : vector<2x32xf32>
    %361 = math.tanh %360 : vector<2x32xf32>
    %cst_98 = arith.constant dense<0.000000e+00> : vector<2x128xf32>
    %362 = tpu.matmul %361, %4, %cst_98 {dimension_numbers = #tpu.dot_dimension_numbers<[1], [0], [0], [1], [0, 0, 1, 1], [], []>} : vector<2x32xf32>, vector<32x128xf32>, vector<2x128xf32> -> vector<2x128xf32>
    %363 = vector.extract_strided_slice %0 {offsets = [12, 0], sizes = [1, 128], strides = [1, 1]} : vector<13x128xf32> to vector<1x128xf32>
    %364 = vector.broadcast %363 : vector<1x128xf32> to vector<2x128xf32>
    %365 = arith.addf %362, %364 : vector<2x128xf32>
    %c0_99 = arith.constant 0 : index
    %c0_100 = arith.constant 0 : index
    %c0_101 = arith.constant 0 : index
    %366 = vector.load %arg9[%c0_99, %c0_100, %c0_101] : memref<1x2x128xf32, #tpu.memory_space<vmem>>, vector<1x2x128xf32>
    %367 = vector.shape_cast %366 : vector<1x2x128xf32> to vector<2x128xf32>
    %368 = vector.shape_cast %365 : vector<2x128xf32> to vector<1x2x128xf32>
    tpu.vector_store %arg9[%c0_99, %c0_100, %c0_101], %368 {strides = array<i32>} : memref<1x2x128xf32, #tpu.memory_space<vmem>>, vector<1x2x128xf32>,
    return
  }
  func.func @transform_0(%arg0: i32) -> (i32, i32) {
    %c0_i32 = arith.constant 0 : i32
    %c0_i32_0 = arith.constant 0 : i32
    return %arg0, %c0_i32 : i32, i32
  }
  func.func @transform_1(%arg0: i32) -> (i32, i32) {
    %c0_i32 = arith.constant 0 : i32
    %c0_i32_0 = arith.constant 0 : i32
    %c0_i32_1 = arith.constant 0 : i32
    return %c0_i32, %c0_i32_0 : i32, i32
  }
  func.func @transform_2(%arg0: i32) -> (i32, i32) {
    %c0_i32 = arith.constant 0 : i32
    %c0_i32_0 = arith.constant 0 : i32
    %c0_i32_1 = arith.constant 0 : i32
    return %c0_i32, %c0_i32_0 : i32, i32
  }
  func.func @transform_3(%arg0: i32) -> (i32, i32) {
    %c0_i32 = arith.constant 0 : i32
    %c0_i32_0 = arith.constant 0 : i32
    %c0_i32_1 = arith.constant 0 : i32
    return %c0_i32, %c0_i32_0 : i32, i32
  }
  func.func @transform_4(%arg0: i32) -> (i32, i32) {
    %c0_i32 = arith.constant 0 : i32
    %c0_i32_0 = arith.constant 0 : i32
    %c0_i32_1 = arith.constant 0 : i32
    return %c0_i32, %c0_i32_0 : i32, i32
  }
  func.func @transform_5(%arg0: i32) -> (i32, i32) {
    %c0_i32 = arith.constant 0 : i32
    %c0_i32_0 = arith.constant 0 : i32
    %c0_i32_1 = arith.constant 0 : i32
    return %c0_i32, %c0_i32_0 : i32, i32
  }
  func.func @transform_6(%arg0: i32) -> (i32, i32) {
    %c0_i32 = arith.constant 0 : i32
    %c0_i32_0 = arith.constant 0 : i32
    %c0_i32_1 = arith.constant 0 : i32
    return %c0_i32, %c0_i32_0 : i32, i32
  }
  func.func @transform_7(%arg0: i32) -> (i32, i32) {
    %c0_i32 = arith.constant 0 : i32
    %c0_i32_0 = arith.constant 0 : i32
    %c0_i32_1 = arith.constant 0 : i32
    return %c0_i32, %c0_i32_0 : i32, i32
  }
  func.func @transform_8(%arg0: i32) -> (i32, i32, i32) {
    %c0_i32 = arith.constant 0 : i32
    %c0_i32_0 = arith.constant 0 : i32
    %c0_i32_1 = arith.constant 0 : i32
    return %arg0, %c0_i32, %c0_i32_0 : i32, i32, i32
  }
}

</mosaic_0001>

<llo_original>
// kernel: ascc_albert_forward.1
$region0: #{ascc_albert_forward.1}
  #allocation0 [shape = 'u32[]', space=smem, size = 0x4, offset = 0x4, fixed_abs, tag = 'smem constant byte address 0x4 - core index']
  #allocation1 [shape = 'u32[144,128]{1,0:T(1,128)}', space=vmem, size = 0x12000, scoped, tag = 'internal scratch']
  %s0 = inlined_call_operand.vmem [shape: f32[32,16], index: 0, kind: input, shape index: {}]
  %s1 = inlined_call_operand.vmem [shape: f32[16,16], index: 1, kind: input, shape index: {}]
  %s2 = inlined_call_operand.vmem [shape: f32[32,96], index: 2, kind: input, shape index: {}]
  %s3 = inlined_call_operand.vmem [shape: f32[32,32], index: 3, kind: input, shape index: {}]
  %s4 = inlined_call_operand.vmem [shape: f32[32,64], index: 4, kind: input, shape index: {}]
  %s5 = inlined_call_operand.vmem [shape: f32[64,32], index: 5, kind: input, shape index: {}]
  %s6 = inlined_call_operand.vmem [shape: f32[80,128], index: 6, kind: input, shape index: {}]
  %s7 = inlined_call_operand.vmem [shape: f32[13,128], index: 7, kind: input, shape index: {}]
  %s8 = inlined_call_operand.vmem [shape: f32[2,2,128], index: 8, kind: output, shape index: {}]
  %s9 = sld [smem:[#allocation0]]
  $region65: #{ascc_albert_forward.1} parent=0
    _
  %s11 = ssub.s32 1, %s9
  %s12 = scalar_select 0, %s11, %s9
  loop: start=0, step=1, limit=4
  $region2: #{ascc_albert_forward.1} parent=0 // loop_pre_header
    _
  $region3: #{ascc_albert_forward.1} parent=0 // loop_header
    %s14 = sphi 0, %s18
    %p15 = scmp.ge.s32.totalorder %s14, 4
    %s24 = sphi 0, %s26
    %s27 = sphi 0, %s24
    %s28 = sphi 0, %s27
    %s44 = sphi 0, %s28
    %s48 = sphi 0, %s48
    %s50 = sphi 0, %s48
    %s51 = sphi 0, %s50
    %s65 = sphi 0, %s51
    %s69 = sphi 0, %s69
    %s71 = sphi 0, %s69
    %s72 = sphi 0, %s71
    %s86 = sphi 0, %s72
    %s90 = sphi 0, %s90
    %s92 = sphi 0, %s90
    %s93 = sphi 0, %s92
    %s107 = sphi 0, %s93
    %s111 = sphi 0, %s111
    %s113 = sphi 0, %s111
    %s114 = sphi 0, %s113
    %s128 = sphi 0, %s114
    %s132 = sphi 0, %s132
    %s134 = sphi 0, %s132
    %s135 = sphi 0, %s134
    %s149 = sphi 0, %s135
    %s153 = sphi 0, %s153
    %s155 = sphi 0, %s153
    %s156 = sphi 0, %s155
    %s170 = sphi 0, %s156
    %s174 = sphi 0, %s174
    %s176 = sphi 0, %s174
    %s177 = sphi 0, %s176
    %s191 = sphi 0, %s177
    %s197 = sphi 0, %s199
    %s200 = sphi 0, %s197
    %s201 = sphi 0, %s200
    %s217 = sphi 0, %s201
  $region4: #{ascc_albert_forward.1} parent=0 // loop_header_branch
    %17 = sbr.rel (%p15) target = $region8
  $region5: #{ascc_albert_forward.1} parent=0 // loop_body
    %s19 = ssub.s32 %s14, 1
    %s20 = ssub.s32 %s14, 2
    %s21 = sadd.s32 %s14, 1
    %s22 = ssub.s32 %s14, %s21
    %p23 = scmp.eq.s32.totalorder %s22, 0
    %s25 = sadd.s32 %s24, 1
    %s26 = scalar_select %p23, %s24, %s25
    %p29 = pneg %p23
    %p30 = scmp.eq.s32.totalorder %s14, 1
    %p31 = por %p29, %p30
    %p32 = scmp.ne.s32.totalorder %s24, %s27
    %p33 = scmp.eq.s32.totalorder %s14, 0
    %p34 = por %p32, %p33
    %p35 = scmp.ne.s32.totalorder %s24, %s27
    %p36 = scmp.eq.s32.totalorder %s19, 1
    %p37 = por %p35, %p36
    %p38 = scmp.ne.s32.totalorder %s27, %s28
    %p39 = scmp.eq.s32.totalorder %s19, 0
    %p40 = por %p38, %p39
    %p41 = scmp.ne.s32.totalorder %s27, %s28
    %p42 = scmp.eq.s32.totalorder %s20, 1
    %p43 = por %p41, %p42
    %p45 = scmp.ne.s32.totalorder %s28, %s44
    %p46 = scmp.eq.s32.totalorder %s20, 0
    %p47 = por %p45, %p46
    %s49 = sadd.s32 %s48, 1
    %p52 = scmp.eq.s32.totalorder %s14, 1
    %p53 = scmp.ne.s32.totalorder %s48, %s50
    %p54 = scmp.eq.s32.totalorder %s14, 0
    %p55 = por %p53, %p54
    %p56 = scmp.ne.s32.totalorder %s48, %s50
    %p57 = scmp.eq.s32.totalorder %s19, 1
    %p58 = por %p56, %p57
    %p59 = scmp.ne.s32.totalorder %s50, %s51
    %p60 = scmp.eq.s32.totalorder %s19, 0
    %p61 = por %p59, %p60
    %p62 = scmp.ne.s32.totalorder %s50, %s51
    %p63 = scmp.eq.s32.totalorder %s20, 1
    %p64 = por %p62, %p63
    %p66 = scmp.ne.s32.totalorder %s51, %s65
    %p67 = scmp.eq.s32.totalorder %s20, 0
    %p68 = por %p66, %p67
    %s70 = sadd.s32 %s69, 1
    %p73 = scmp.eq.s32.totalorder %s14, 1
    %p74 = scmp.ne.s32.totalorder %s69, %s71
    %p75 = scmp.eq.s32.totalorder %s14, 0
    %p76 = por %p74, %p75
    %p77 = scmp.ne.s32.totalorder %s69, %s71
    %p78 = scmp.eq.s32.totalorder %s19, 1
    %p79 = por %p77, %p78
    %p80 = scmp.ne.s32.totalorder %s71, %s72
    %p81 = scmp.eq.s32.totalorder %s19, 0
    %p82 = por %p80, %p81
    %p83 = scmp.ne.s32.totalorder %s71, %s72
    %p84 = scmp.eq.s32.totalorder %s20, 1
    %p85 = por %p83, %p84
    %p87 = scmp.ne.s32.totalorder %s72, %s86
    %p88 = scmp.eq.s32.totalorder %s20, 0
    %p89 = por %p87, %p88
    %s91 = sadd.s32 %s90, 1
    %p94 = scmp.eq.s32.totalorder %s14, 1
    %p95 = scmp.ne.s32.totalorder %s90, %s92
    %p96 = scmp.eq.s32.totalorder %s14, 0
    %p97 = por %p95, %p96
    %p98 = scmp.ne.s32.totalorder %s90, %s92
    %p99 = scmp.eq.s32.totalorder %s19, 1
    %p100 = por %p98, %p99
    %p101 = scmp.ne.s32.totalorder %s92, %s93
    %p102 = scmp.eq.s32.totalorder %s19, 0
    %p103 = por %p101, %p102
    %p104 = scmp.ne.s32.totalorder %s92, %s93
    %p105 = scmp.eq.s32.totalorder %s20, 1
    %p106 = por %p104, %p105
    %p108 = scmp.ne.s32.totalorder %s93, %s107
    %p109 = scmp.eq.s32.totalorder %s20, 0
    %p110 = por %p108, %p109
    %s112 = sadd.s32 %s111, 1
    %p115 = scmp.eq.s32.totalorder %s14, 1
    %p116 = scmp.ne.s32.totalorder %s111, %s113
    %p117 = scmp.eq.s32.totalorder %s14, 0
    %p118 = por %p116, %p117
    %p119 = scmp.ne.s32.totalorder %s111, %s113
    %p120 = scmp.eq.s32.totalorder %s19, 1
    %p121 = por %p119, %p120
    %p122 = scmp.ne.s32.totalorder %s113, %s114
    %p123 = scmp.eq.s32.totalorder %s19, 0
    %p124 = por %p122, %p123
    %p125 = scmp.ne.s32.totalorder %s113, %s114
    %p126 = scmp.eq.s32.totalorder %s20, 1
    %p127 = por %p125, %p126
    %p129 = scmp.ne.s32.totalorder %s114, %s128
    %p130 = scmp.eq.s32.totalorder %s20, 0
    %p131 = por %p129, %p130
    %s133 = sadd.s32 %s132, 1
    %p136 = scmp.eq.s32.totalorder %s14, 1
    %p137 = scmp.ne.s32.totalorder %s132, %s134
    %p138 = scmp.eq.s32.totalorder %s14, 0
    %p139 = por %p137, %p138
    %p140 = scmp.ne.s32.totalorder %s132, %s134
    %p141 = scmp.eq.s32.totalorder %s19, 1
    %p142 = por %p140, %p141
    %p143 = scmp.ne.s32.totalorder %s134, %s135
    %p144 = scmp.eq.s32.totalorder %s19, 0
    %p145 = por %p143, %p144
    %p146 = scmp.ne.s32.totalorder %s134, %s135
    %p147 = scmp.eq.s32.totalorder %s20, 1
    %p148 = por %p146, %p147
    %p150 = scmp.ne.s32.totalorder %s135, %s149
    %p151 = scmp.eq.s32.totalorder %s20, 0
    %p152 = por %p150, %p151
    %s154 = sadd.s32 %s153, 1
    %p157 = scmp.eq.s32.totalorder %s14, 1
    %p158 = scmp.ne.s32.totalorder %s153, %s155
    %p159 = scmp.eq.s32.totalorder %s14, 0
    %p160 = por %p158, %p159
    %p161 = scmp.ne.s32.totalorder %s153, %s155
    %p162 = scmp.eq.s32.totalorder %s19, 1
    %p163 = por %p161, %p162
    %p164 = scmp.ne.s32.totalorder %s155, %s156
    %p165 = scmp.eq.s32.totalorder %s19, 0
    %p166 = por %p164, %p165
    %p167 = scmp.ne.s32.totalorder %s155, %s156
    %p168 = scmp.eq.s32.totalorder %s20, 1
    %p169 = por %p167, %p168
    %p171 = scmp.ne.s32.totalorder %s156, %s170
    %p172 = scmp.eq.s32.totalorder %s20, 0
    %p173 = por %p171, %p172
    %s175 = sadd.s32 %s174, 1
    %p178 = scmp.eq.s32.totalorder %s14, 1
    %p179 = scmp.ne.s32.totalorder %s174, %s176
    %p180 = scmp.eq.s32.totalorder %s14, 0
    %p181 = por %p179, %p180
    %p182 = scmp.ne.s32.totalorder %s174, %s176
    %p183 = scmp.eq.s32.totalorder %s19, 1
    %p184 = por %p182, %p183
    %p185 = scmp.ne.s32.totalorder %s176, %s177
    %p186 = scmp.eq.s32.totalorder %s19, 0
    %p187 = por %p185, %p186
    %p188 = scmp.ne.s32.totalorder %s176, %s177
    %p189 = scmp.eq.s32.totalorder %s20, 1
    %p190 = por %p188, %p189
    %p192 = scmp.ne.s32.totalorder %s177, %s191
    %p193 = scmp.eq.s32.totalorder %s20, 0
    %p194 = por %p192, %p193
    %s195 = ssub.s32 %s14, %s21
    %p196 = scmp.eq.s32.totalorder %s195, 0
    %s198 = sadd.s32 %s197, 1
    %s199 = scalar_select %p196, %s197, %s198
    %p202 = pneg %p196
    %p203 = scmp.eq.s32.totalorder %s14, 1
    %p204 = por %p202, %p203
    %p205 = scmp.ne.s32.totalorder %s197, %s200
    %p206 = scmp.eq.s32.totalorder %s14, 0
    %p207 = por %p205, %p206
    %p208 = scmp.ne.s32.totalorder %s197, %s200
    %p209 = scmp.eq.s32.totalorder %s19, 1
    %p210 = por %p208, %p209
    %p211 = scmp.ne.s32.totalorder %s200, %s201
    %p212 = scmp.eq.s32.totalorder %s19, 0
    %p213 = por %p211, %p212
    %p214 = scmp.ne.s32.totalorder %s200, %s201
    %p215 = scmp.eq.s32.totalorder %s20, 1
    %p216 = por %p214, %p215
    %p218 = scmp.ne.s32.totalorder %s201, %s217
    %p219 = scmp.eq.s32.totalorder %s20, 0
    %p220 = por %p218, %p219
    %p221 = scmp.le.s32.totalorder 1, %s14
    %p222 = scmp.lt.s32.totalorder %s14, 3
    %p223 = pnand %p221, %p222
    %p224 = pneg %p223
    // Predicated region
    $region9: #{ascc_albert_forward.1} parent=5 // pred_check
      _
    $region10: #{ascc_albert_forward.1} parent=5 // pred_check_branch
      %226 = sbr.rel (%p223) target = $region12
    $region11: #{ascc_albert_forward.1} parent=5 // pred_region
      %s227 = ssub.s32 %s14, 1
      // Predicated region
      $region13: #{ascc_albert_forward.1} parent=11 // pred_check
        %p228 = pneg %p61
      $region14: #{ascc_albert_forward.1} parent=11 // pred_check_branch
        %230 = sbr.rel (%p228) target = $region16
      $region15: #{ascc_albert_forward.1} parent=11 // pred_region
        _
      $region16: #{ascc_albert_forward.1} parent=11 // pred_fallthru
        _
      // Predicated region
      $region17: #{ascc_albert_forward.1} parent=11 // pred_check
        %p231 = pneg %p82
      $region18: #{ascc_albert_forward.1} parent=11 // pred_check_branch
        %233 = sbr.rel (%p231) target = $region20
      $region19: #{ascc_albert_forward.1} parent=11 // pred_region
        _
      $region20: #{ascc_albert_forward.1} parent=11 // pred_fallthru
        _
      // Predicated region
      $region21: #{ascc_albert_forward.1} parent=11 // pred_check
        %p234 = pneg %p103
      $region22: #{ascc_albert_forward.1} parent=11 // pred_check_branch
        %236 = sbr.rel (%p234) target = $region24
      $region23: #{ascc_albert_forward.1} parent=11 // pred_region
        _
      $region24: #{ascc_albert_forward.1} parent=11 // pred_fallthru
        _
      // Predicated region
      $region25: #{ascc_albert_forward.1} parent=11 // pred_check
        %p237 = pneg %p124
      $region26: #{ascc_albert_forward.1} parent=11 // pred_check_branch
        %239 = sbr.rel (%p237) target = $region28
      $region27: #{ascc_albert_forward.1} parent=11 // pred_region
        _
      $region28: #{ascc_albert_forward.1} parent=11 // pred_fallthru
        _
      // Predicated region
      $region29: #{ascc_albert_forward.1} parent=11 // pred_check
        %p240 = pneg %p145
      $region30: #{ascc_albert_forward.1} parent=11 // pred_check_branch
        %242 = sbr.rel (%p240) target = $region32
      $region31: #{ascc_albert_forward.1} parent=11 // pred_region
        _
      $region32: #{ascc_albert_forward.1} parent=11 // pred_fallthru
        _
      // Predicated region
      $region33: #{ascc_albert_forward.1} parent=11 // pred_check
        %p243 = pneg %p166
      $region34: #{ascc_albert_forward.1} parent=11 // pred_check_branch
        %245 = sbr.rel (%p243) target = $region36
      $region35: #{ascc_albert_forward.1} parent=11 // pred_region
        _
      $region36: #{ascc_albert_forward.1} parent=11 // pred_fallthru
        _
      // Predicated region
      $region37: #{ascc_albert_forward.1} parent=11 // pred_check
        %p246 = pneg %p187
      $region38: #{ascc_albert_forward.1} parent=11 // pred_check_branch
        %248 = sbr.rel (%p246) target = $region40
      $region39: #{ascc_albert_forward.1} parent=11 // pred_region
        _
      $region40: #{ascc_albert_forward.1} parent=11 // pred_fallthru
        _
    $region12: #{ascc_albert_forward.1} parent=5 // pred_fallthru
      _
    %p249 = scmp.lt.s32.totalorder %s14, 2
    // Predicated region
    $region41: #{ascc_albert_forward.1} parent=5 // pred_check
      %p250 = pneg %p249
    $region42: #{ascc_albert_forward.1} parent=5 // pred_check_branch
      %252 = sbr.rel (%p250) target = $region44
    $region43: #{ascc_albert_forward.1} parent=5 // pred_region
      // Predicated region
      $region45: #{ascc_albert_forward.1} parent=43 // pred_check
        %p253 = pneg %p34
      $region46: #{ascc_albert_forward.1} parent=43 // pred_check_branch
        %255 = sbr.rel (%p253) target = $region48
      $region47: #{ascc_albert_forward.1} parent=43 // pred_region
        %s256 = smul.u32 2, %s14
        %p257 = scmp.lt.s32.totalorder %s256, 3
        %s258 = scalar_select %p257, %s256, 3
        %s259 = smul.addr %s258, 8
        %s260 = scalar_lea.vmem %s0, %s259
        %s261 = smul.u32 2, %s14
      $region48: #{ascc_albert_forward.1} parent=43 // pred_fallthru
        _
    $region44: #{ascc_albert_forward.1} parent=5 // pred_fallthru
      _
    %p262 = scmp.le.s32.totalorder 1, %s14
    %p263 = scmp.lt.s32.totalorder %s14, 3
    %p264 = pnand %p262, %p263
    %p265 = pneg %p264
    // Predicated region
    $region49: #{ascc_albert_forward.1} parent=5 // pred_check
      _
    $region50: #{ascc_albert_forward.1} parent=5 // pred_check_branch
      %267 = sbr.rel (%p264) target = $region52
    $region51: #{ascc_albert_forward.1} parent=5 // pred_region
      %s268 = ssub.s32 %s14, 1
      %s269 = smul.u32 2, %s19
      %p270 = scmp.lt.s32.totalorder %s269, 3
      %s271 = scalar_select %p270, %s269, 3
      %s272 = smul.addr %s271, 8
      %s273 = scalar_lea.vmem %s0, %s272
      %p274 = pneg %p40
      %p275 = pneg %p37
      %p276 = pneg %p61
      %p277 = pneg %p58
      %p278 = pneg %p82
      %p279 = pneg %p79
      %p280 = pneg %p103
      %p281 = pneg %p100
      %p282 = pneg %p124
      %p283 = pneg %p121
      %p284 = pneg %p145
      %p285 = pneg %p142
      %p286 = pneg %p166
      %p287 = pneg %p163
      %p288 = pneg %p187
      %p289 = pneg %p184
      %p290 = pneg %p213
      %p291 = pneg %p210
      %p292 = scmp.lt.s32.totalorder %s19, 1
      %s293 = scalar_select %p292, %s19, 1
      %s294 = smul.addr %s293, 2
      %s295 = scalar_lea.vmem %s8, %s294
      %s296 = smul.u32 2, %s19
      %p297 = scmp.lt.s32.totalorder %s296, 3
      %s298 = scalar_select %p297, %s296, 3
      %s299 = smul.addr %s298, 8
      %s300 = scalar_lea.vmem %s0, %s299
      %s301 = smul.u32 2, %s19
      %p302 = scmp.lt.s32.totalorder %s19, 1
      %s303 = scalar_select %p302, %s19, 1
      %s304 = smul.addr %s303, 2
      %s305 = scalar_lea.vmem %s8, %s304
      %v306 = vld [vmem:[%s7] sm:$0xff]
      %v307 = vld [vmem:[%s7 + $0x8] sm:$0x1f]
      %v308 = vld [vmem:[%s6] sm:$0xff]
      %v309 = vld [vmem:[%s6 + $0x8] sm:$0xff]
      %v310 = vld [vmem:[%s6 + $0x10] sm:$0xff]
      %v311 = vld [vmem:[%s6 + $0x18] sm:$0xff]
      %v312 = vld [vmem:[%s6 + $0x20] sm:$0xff]
      %v313 = vld [vmem:[%s6 + $0x28] sm:$0xff]
      %v314 = vld [vmem:[%s6 + $0x30] sm:$0xff]
      %v315 = vld [vmem:[%s6 + $0x38] sm:$0xff]
      %v316 = vld [vmem:[%s6 + $0x40] sm:$0xff]
      %v317 = vld [vmem:[%s6 + $0x48] sm:$0xff]
      %v318 = vld [vmem:[%s2] sm:$0xff]
      %v319 = vld [vmem:[%s2 + $0x8] sm:$0xff]
      %v320 = vld [vmem:[%s2 + $0x10] sm:$0xff]
      %v321 = vld [vmem:[%s2 + $0x18] sm:$0xff]
      %v322 = vld [vmem:[%s3] sm:$0xff]
      %v323 = vld [vmem:[%s3 + $0x8] sm:$0xff]
      %v324 = vld [vmem:[%s3 + $0x10] sm:$0xff]
      %v325 = vld [vmem:[%s3 + $0x18] sm:$0xff]
      %v326 = vld [vmem:[%s4] sm:$0xff]
      %v327 = vld [vmem:[%s4 + $0x8] sm:$0xff]
      %v328 = vld [vmem:[%s4 + $0x10] sm:$0xff]
      %v329 = vld [vmem:[%s4 + $0x18] sm:$0xff]
      %v330 = vld [vmem:[%s5] sm:$0xff]
      %v331 = vld [vmem:[%s5 + $0x8] sm:$0xff]
      %v332 = vld [vmem:[%s5 + $0x10] sm:$0xff]
      %v333 = vld [vmem:[%s5 + $0x18] sm:$0xff]
      %v334 = vld [vmem:[%s5 + $0x20] sm:$0xff]
      %v335 = vld [vmem:[%s5 + $0x28] sm:$0xff]
      %v336 = vld [vmem:[%s5 + $0x30] sm:$0xff]
      %v337 = vld [vmem:[%s5 + $0x38] sm:$0xff]
      %v338 = vld [vmem:[%s1] sm:$0xff]
      %v339 = vld [vmem:[%s1 + $0x8] sm:$0xff]
      %v340 = vld [vmem:[%s300] sm:$0xff]
      %v341 = vld [vmem:[%s300 + $0x8] sm:$0xff]
      %vm342 = vcmask 130048
      %v343 = vsel %vm342, %v340, 0.0
      %344 = vadd.xlane.f32.xlu0 %v343
      %v345 = vpop.xlane.xlu0 %344
      %v346 = vsel %vm342, %v341, 0.0
      %347 = vadd.xlane.f32.xlu0 %v346
      %v348 = vpop.xlane.xlu0 %347
      %v349 = vrcp.pop 16.0
      %v350 = vmul.f32 %v345, %v349
      %v351 = vmul.f32 %v348, %v349
      %v352 = vsub.f32 %v340, %v350
      %v353 = vsub.f32 %v341, %v351
      %v354 = vmul.f32 %v352, %v352
      %v355 = vmul.f32 %v353, %v353
      %v356 = vsel %vm342, %v354, 0.0
      %357 = vadd.xlane.f32.xlu0 %v356
      %v358 = vpop.xlane.xlu0 %357
      %v359 = vsel %vm342, %v355, 0.0
      %360 = vadd.xlane.f32.xlu0 %v359
      %v361 = vpop.xlane.xlu0 %360
      %v362 = vmul.f32 %v358, %v349
      %v363 = vmul.f32 %v361, %v349
      %v364 = vadd.f32 %v362, 1e-12
      %v365 = vadd.f32 %v363, 1e-12
      %v366 = vrsqrt.pop %v364
      %v367 = vrsqrt.pop %v365
      %v368 = vmul.f32 %v352, %v366
      %v369 = vmul.f32 %v353, %v367
      %v370 = vlaneseq
      %v371 = vshrl.u32 %v370, 7
      %v372 = vsub.s32 0, %v371
      %v373 = vrot.slane %v306, %v372
      %v374 = vmul.f32 %v368, %v373
      %v375 = vmul.f32 %v369, %v373
      %v376 = vlaneseq
      %v377 = vshrl.u32 %v376, 7
      %v378 = vsub.s32 1, %v377
      %v379 = vrot.slane %v306, %v378
      %v380 = vadd.f32 %v374, %v379
      %v381 = vadd.f32 %v375, %v379
      %v382 = vlaneseq
      %v383 = vshrl.u32 %v382, 7
      %v384 = vsub.s32 2, %v383
      %v385 = vrot.slane %v306, %v384
      %v387 = vsel %vm342, %v380, 0
      %v390 = vsel %vm342, %v381, 0
      %392 = vmatprep.subr.mxu0 0.0
      %393 = vmatpush1.msra.mxu0 %v308
      %394 = vmatprep.subr.mxu0 0.0
      %395 = vmatpush1.msra.mxu0 %v309
      %396 = vmatprep.subr.mxu0 0.0
      %397 = vmatpush1.msra.mxu0 0.0
      %398 = vmatprep.subr.mxu0 0.0
      %399 = vmatpush1.msra.mxu0 0.0
      %400 = vmatprep.subr.mxu0 0.0
      %401 = vmatpush1.msra.mxu0 0.0
      %402 = vmatprep.subr.mxu0 0.0
      %403 = vmatpush1.msra.mxu0 0.0
      %404 = vmatprep.subr.mxu0 0.0
      %405 = vmatpush1.msra.mxu0 0.0
      %406 = vmatprep.subr.mxu0 0.0
      %407 = vmatpush1.msra.mxu0 0.0
      %408 = vmatprep.subr.mxu0 0.0
      %409 = vmatpush1.msra.mxu0 0.0
      %410 = vmatprep.subr.mxu0 0.0
      %411 = vmatpush1.msra.mxu0 0.0
      %412 = vmatprep.subr.mxu0 0.0
      %413 = vmatpush1.msra.mxu0 0.0
      %414 = vmatprep.subr.mxu0 0.0
      %415 = vmatpush1.msra.mxu0 0.0
      %416 = vmatprep.subr.mxu0 0.0
      %417 = vmatpush1.msra.mxu0 0.0
      %418 = vmatprep.subr.mxu0 0.0
      %419 = vmatpush1.msra.mxu0 0.0
      %420 = vmatprep.subr.mxu0 0.0
      %421 = vmatpush1.msra.mxu0 0.0
      %422 = vmatprep.subr.mxu0 0.0
      %423 = vmatpush1.msra.mxu0 0.0
      %424 = vmatprep.subr.mxu0 0.0
      %425 = vmatpush1.msra.mxu0 0.0
      %426 = vmatprep.subr.mxu0 0.0
      %427 = vmatpush1.msra.mxu0 0.0
      %428 = vmatprep.subr.mxu0 0.0
      %429 = vmatpush1.msra.mxu0 0.0
      %430 = vmatprep.subr.mxu0 0.0
      %431 = vmatpush1.msra.mxu0 0.0
      %432 = vmatprep.subr.mxu0 0.0
      %433 = vmatpush1.msra.mxu0 0.0
      %434 = vmatprep.subr.mxu0 0.0
      %435 = vmatpush1.msra.mxu0 0.0
      %436 = vmatprep.subr.mxu0 0.0
      %437 = vmatpush1.msra.mxu0 0.0
      %438 = vmatprep.subr.mxu0 0.0
      %439 = vmatpush1.msra.mxu0 0.0
      %440 = vmatprep.subr.mxu0 0.0
      %441 = vmatpush1.msra.mxu0 0.0
      %442 = vmatprep.subr.mxu0 0.0
      %443 = vmatpush1.msra.mxu0 0.0
      %444 = vmatprep.subr.mxu0 0.0
      %445 = vmatpush1.msra.mxu0 0.0
      %446 = vmatprep.subr.mxu0 0.0
      %447 = vmatpush1.msra.mxu0 0.0
      %448 = vmatprep.subr.mxu0 0.0
      %449 = vmatpush1.msra.mxu0 0.0
      %450 = vmatprep.subr.mxu0 0.0
      %451 = vmatpush1.msra.mxu0 0.0
      %452 = vmatprep.subr.mxu0 0.0
      %453 = vmatpush1.msra.mxu0 0.0
      %454 = vmatprep.subr.mxu0 0.0
      %455 = vmatpush1.msra.mxu0 0.0
      %456 = vmatprep.mubr.f32.mxu0 0.0
      %457 = vmatmul.mubr.f32.gmra.mrb[0].mxu0 %v387
      %v458 = vpop.f32.mrb[0].mxu0
      %v459 = vadd.f32 %v385, %v458
      %v460 = vpop.f32.mrb[0].mxu0
      %461 = vmatprep.mubr.f32.mxu0 0.0
      %462 = vmatmul.mubr.f32.gmra.mrb[0].mxu0 %v390
      %v463 = vpop.f32.mrb[0].mxu0
      %v464 = vadd.f32 %v385, %v463
      %v465 = vpop.f32.mrb[0].mxu0
      %466 = vdwg.mxu0
      %v467 = vlaneseq
      %v468 = vshrl.u32 %v467, 7
      %v469 = vsub.s32 3, %v468
      %v470 = vrot.slane %v306, %v469
      %vm471 = vcmask 261120
      %v473 = vsel %vm471, %v459, 0
      %v476 = vsel %vm471, %v464, 0
      %478 = vmatprep.subr.mxu0 0.0
      %479 = vmatpush1.msra.mxu0 %v318
      %480 = vmatprep.subr.mxu0 0.0
      %481 = vmatpush1.msra.mxu0 %v319
      %482 = vmatprep.subr.mxu0 0.0
      %483 = vmatpush1.msra.mxu0 %v320
      %484 = vmatprep.subr.mxu0 0.0
      %485 = vmatpush1.msra.mxu0 %v321
      %486 = vmatprep.subr.mxu0 0.0
      %487 = vmatpush1.msra.mxu0 0.0
      %488 = vmatprep.subr.mxu0 0.0
      %489 = vmatpush1.msra.mxu0 0.0
      %490 = vmatprep.subr.mxu0 0.0
      %491 = vmatpush1.msra.mxu0 0.0
      %492 = vmatprep.subr.mxu0 0.0
      %493 = vmatpush1.msra.mxu0 0.0
      %494 = vmatprep.subr.mxu0 0.0
      %495 = vmatpush1.msra.mxu0 0.0
      %496 = vmatprep.subr.mxu0 0.0
      %497 = vmatpush1.msra.mxu0 0.0
      %498 = vmatprep.subr.mxu0 0.0
      %499 = vmatpush1.msra.mxu0 0.0
      %500 = vmatprep.subr.mxu0 0.0
      %501 = vmatpush1.msra.mxu0 0.0
      %502 = vmatprep.subr.mxu0 0.0
      %503 = vmatpush1.msra.mxu0 0.0
      %504 = vmatprep.subr.mxu0 0.0
      %505 = vmatpush1.msra.mxu0 0.0
      %506 = vmatprep.subr.mxu0 0.0
      %507 = vmatpush1.msra.mxu0 0.0
      %508 = vmatprep.subr.mxu0 0.0
      %509 = vmatpush1.msra.mxu0 0.0
      %510 = vmatprep.subr.mxu0 0.0
      %511 = vmatpush1.msra.mxu0 0.0
      %512 = vmatprep.subr.mxu0 0.0
      %513 = vmatpush1.msra.mxu0 0.0
      %514 = vmatprep.subr.mxu0 0.0
      %515 = vmatpush1.msra.mxu0 0.0
      %516 = vmatprep.subr.mxu0 0.0
      %517 = vmatpush1.msra.mxu0 0.0
      %518 = vmatprep.subr.mxu0 0.0
      %519 = vmatpush1.msra.mxu0 0.0
      %520 = vmatprep.subr.mxu0 0.0
      %521 = vmatpush1.msra.mxu0 0.0
      %522 = vmatprep.subr.mxu0 0.0
      %523 = vmatpush1.msra.mxu0 0.0
      %524 = vmatprep.subr.mxu0 0.0
      %525 = vmatpush1.msra.mxu0 0.0
      %526 = vmatprep.subr.mxu0 0.0
      %527 = vmatpush1.msra.mxu0 0.0
      %528 = vmatprep.subr.mxu0 0.0
      %529 = vmatpush1.msra.mxu0 0.0
      %530 = vmatprep.subr.mxu0 0.0
      %531 = vmatpush1.msra.mxu0 0.0
      %532 = vmatprep.subr.mxu0 0.0
      %533 = vmatpush1.msra.mxu0 0.0
      %534 = vmatprep.subr.mxu0 0.0
      %535 = vmatpush1.msra.mxu0 0.0
      %536 = vmatprep.subr.mxu0 0.0
      %537 = vmatpush1.msra.mxu0 0.0
      %538 = vmatprep.subr.mxu0 0.0
      %539 = vmatpush1.msra.mxu0 0.0
      %540 = vmatprep.subr.mxu0 0.0
      %541 = vmatpush1.msra.mxu0 0.0
      %542 = vmatprep.mubr.f32.mxu0 0.0
      %543 = vmatmul.mubr.f32.gmra.mrb[0].mxu0 %v473
      %v544 = vpop.f32.mrb[0].mxu0
      %v545 = vadd.f32 %v470, %v544
      %v546 = vpop.f32.mrb[0].mxu0
      %547 = vmatprep.mubr.f32.mxu0 0.0
      %548 = vmatmul.mubr.f32.gmra.mrb[0].mxu0 %v476
      %v549 = vpop.f32.mrb[0].mxu0
      %v550 = vadd.f32 %v470, %v549
      %v551 = vpop.f32.mrb[0].mxu0
      %552 = vdwg.mxu0
      %555 = vrot.lane.b32.xlu0 %v545, 96
      %v556 = vpop.permute.xlu0 %555
      %557 = vrot.lane.b32.xlu0 %v550, 96
      %v558 = vpop.permute.xlu0 %557
      %vm559 = vcmask 64512
      %v560 = vsel %vm559, %v545, 0
      %v562 = vsel %vm559, %v550, 0
      %v564 = vsel %vm559, %v556, 0
      %v566 = vsel %vm559, %v558, 0
      %568 = vmatprep.subr.mxu0 0.0
      %569 = vmatpush1.xpose.msra.mxu0 %v564
      %570 = vmatprep.subr.mxu0 0.0
      %571 = vmatpush1.xpose.msra.mxu0 %v566
      %572 = vmatprep.subr.mxu0 0.0
      %573 = vmatpush1.xpose.msra.mxu0 0.0
      %574 = vmatprep.subr.mxu0 0.0
      %575 = vmatpush1.xpose.msra.mxu0 0.0
      %576 = vmatprep.subr.mxu0 0.0
      %577 = vmatpush1.xpose.msra.mxu0 0.0
      %578 = vmatprep.subr.mxu0 0.0
      %579 = vmatpush1.xpose.msra.mxu0 0.0
      %580 = vmatprep.subr.mxu0 0.0
      %581 = vmatpush1.xpose.msra.mxu0 0.0
      %582 = vmatprep.subr.mxu0 0.0
      %583 = vmatpush1.xpose.msra.mxu0 0.0
      %584 = vmatprep.subr.mxu0 0.0
      %585 = vmatpush1.xpose.msra.mxu0 0.0
      %586 = vmatprep.subr.mxu0 0.0
      %587 = vmatpush1.xpose.msra.mxu0 0.0
      %588 = vmatprep.subr.mxu0 0.0
      %589 = vmatpush1.xpose.msra.mxu0 0.0
      %590 = vmatprep.subr.mxu0 0.0
      %591 = vmatpush1.xpose.msra.mxu0 0.0
      %592 = vmatprep.subr.mxu0 0.0
      %593 = vmatpush1.xpose.msra.mxu0 0.0
      %594 = vmatprep.subr.mxu0 0.0
      %595 = vmatpush1.xpose.msra.mxu0 0.0
      %596 = vmatprep.subr.mxu0 0.0
      %597 = vmatpush1.xpose.msra.mxu0 0.0
      %598 = vmatprep.subr.mxu0 0.0
      %599 = vmatpush1.xpose.msra.mxu0 0.0
      %600 = vmatprep.subr.mxu0 0.0
      %601 = vmatpush1.xpose.msra.mxu0 0.0
      %602 = vmatprep.subr.mxu0 0.0
      %603 = vmatpush1.xpose.msra.mxu0 0.0
      %604 = vmatprep.subr.mxu0 0.0
      %605 = vmatpush1.xpose.msra.mxu0 0.0
      %606 = vmatprep.subr.mxu0 0.0
      %607 = vmatpush1.xpose.msra.mxu0 0.0
      %608 = vmatprep.subr.mxu0 0.0
      %609 = vmatpush1.xpose.msra.mxu0 0.0
      %610 = vmatprep.subr.mxu0 0.0
      %611 = vmatpush1.xpose.msra.mxu0 0.0
      %612 = vmatprep.subr.mxu0 0.0
      %613 = vmatpush1.xpose.msra.mxu0 0.0
      %614 = vmatprep.subr.mxu0 0.0
      %615 = vmatpush1.xpose.msra.mxu0 0.0
      %616 = vmatprep.subr.mxu0 0.0
      %617 = vmatpush1.xpose.msra.mxu0 0.0
      %618 = vmatprep.subr.mxu0 0.0
      %619 = vmatpush1.xpose.msra.mxu0 0.0
      %620 = vmatprep.subr.mxu0 0.0
      %621 = vmatpush1.xpose.msra.mxu0 0.0
      %622 = vmatprep.subr.mxu0 0.0
      %623 = vmatpush1.xpose.msra.mxu0 0.0
      %624 = vmatprep.subr.mxu0 0.0
      %625 = vmatpush1.xpose.msra.mxu0 0.0
      %626 = vmatprep.subr.mxu0 0.0
      %627 = vmatpush1.xpose.msra.mxu0 0.0
      %628 = vmatprep.subr.mxu0 0.0
      %629 = vmatpush1.xpose.msra.mxu0 0.0
      %630 = vmatprep.subr.mxu0 0.0
      %631 = vmatpush1.xpose.msra.mxu0 0.0
      %632 = vmatprep.mubr.f32.mxu0 0.0
      %633 = vmatmul.mubr.f32.gmra.mrb[0].mxu0 %v560
      %v634 = vpop.f32.mrb[0].mxu0
      %v635 = vadd.f32 %v338, %v634
      %v636 = vpop.f32.mrb[0].mxu0
      %637 = vmatprep.mubr.f32.mxu0 0.0
      %638 = vmatmul.mubr.f32.gmra.mrb[0].mxu0 %v562
      %v639 = vpop.f32.mrb[0].mxu0
      %v640 = vadd.f32 %v339, %v639
      %v641 = vpop.f32.mrb[0].mxu0
      %642 = vdwg.mxu0
      %v643 = vsel %vm342, %v635, -inf
      %644 = vmax.xlane.f32.xlu0 %v643
      %v645 = vpop.xlane.xlu0 %644
      %v646 = vsel %vm342, %v640, -inf
      %647 = vmax.xlane.f32.xlu0 %v646
      %v648 = vpop.xlane.xlu0 %647
      %v649 = vsub.f32 %v635, %v645
      %v650 = vsub.f32 %v640, %v648
      %v651 = vmul.f32 %v649, 1.442695
      %v652 = vpow.pop %v651
      %v653 = vmul.f32 %v650, 1.442695
      %v654 = vpow.pop %v653
      %v655 = vsel %vm342, %v652, 0.0
      %656 = vadd.xlane.f32.xlu0 %v655
      %v657 = vpop.xlane.xlu0 %656
      %v658 = vsel %vm342, %v654, 0.0
      %659 = vadd.xlane.f32.xlu0 %v658
      %v660 = vpop.xlane.xlu0 %659
      %v661 = vrcp.pop %v657
      %v662 = vrcp.pop %v660
      %v663 = vmul.f32 %v652, %v661
      %v664 = vmul.f32 %v654, %v662
      %665 = vrot.lane.b32.xlu0 %v545, 64
      %v666 = vpop.permute.xlu0 %665
      %667 = vrot.lane.b32.xlu0 %v550, 64
      %v668 = vpop.permute.xlu0 %667
      %v672 = vsel %vm342, %v663, 0
      %v675 = vsel %vm342, %v664, 0
      %677 = vmatprep.subr.mxu0 0.0
      %678 = vmatpush1.msra.mxu0 %v666
      %679 = vmatprep.subr.mxu0 0.0
      %680 = vmatpush1.msra.mxu0 %v668
      %681 = vmatprep.subr.mxu0 0.0
      %682 = vmatpush1.msra.mxu0 0.0
      %683 = vmatprep.subr.mxu0 0.0
      %684 = vmatpush1.msra.mxu0 0.0
      %685 = vmatprep.subr.mxu0 0.0
      %686 = vmatpush1.msra.mxu0 0.0
      %687 = vmatprep.subr.mxu0 0.0
      %688 = vmatpush1.msra.mxu0 0.0
      %689 = vmatprep.subr.mxu0 0.0
      %690 = vmatpush1.msra.mxu0 0.0
      %691 = vmatprep.subr.mxu0 0.0
      %692 = vmatpush1.msra.mxu0 0.0
      %693 = vmatprep.subr.mxu0 0.0
      %694 = vmatpush1.msra.mxu0 0.0
      %695 = vmatprep.subr.mxu0 0.0
      %696 = vmatpush1.msra.mxu0 0.0
      %697 = vmatprep.subr.mxu0 0.0
      %698 = vmatpush1.msra.mxu0 0.0
      %699 = vmatprep.subr.mxu0 0.0
      %700 = vmatpush1.msra.mxu0 0.0
      %701 = vmatprep.subr.mxu0 0.0
      %702 = vmatpush1.msra.mxu0 0.0
      %703 = vmatprep.subr.mxu0 0.0
      %704 = vmatpush1.msra.mxu0 0.0
      %705 = vmatprep.subr.mxu0 0.0
      %706 = vmatpush1.msra.mxu0 0.0
      %707 = vmatprep.subr.mxu0 0.0
      %708 = vmatpush1.msra.mxu0 0.0
      %709 = vmatprep.subr.mxu0 0.0
      %710 = vmatpush1.msra.mxu0 0.0
      %711 = vmatprep.subr.mxu0 0.0
      %712 = vmatpush1.msra.mxu0 0.0
      %713 = vmatprep.subr.mxu0 0.0
      %714 = vmatpush1.msra.mxu0 0.0
      %715 = vmatprep.subr.mxu0 0.0
      %716 = vmatpush1.msra.mxu0 0.0
      %717 = vmatprep.subr.mxu0 0.0
      %718 = vmatpush1.msra.mxu0 0.0
      %719 = vmatprep.subr.mxu0 0.0
      %720 = vmatpush1.msra.mxu0 0.0
      %721 = vmatprep.subr.mxu0 0.0
      %722 = vmatpush1.msra.mxu0 0.0
      %723 = vmatprep.subr.mxu0 0.0
      %724 = vmatpush1.msra.mxu0 0.0
      %725 = vmatprep.subr.mxu0 0.0
      %726 = vmatpush1.msra.mxu0 0.0
      %727 = vmatprep.subr.mxu0 0.0
      %728 = vmatpush1.msra.mxu0 0.0
      %729 = vmatprep.subr.mxu0 0.0
      %730 = vmatpush1.msra.mxu0 0.0
      %731 = vmatprep.subr.mxu0 0.0
      %732 = vmatpush1.msra.mxu0 0.0
      %733 = vmatprep.subr.mxu0 0.0
      %734 = vmatpush1.msra.mxu0 0.0
      %735 = vmatprep.subr.mxu0 0.0
      %736 = vmatpush1.msra.mxu0 0.0
      %737 = vmatprep.subr.mxu0 0.0
      %738 = vmatpush1.msra.mxu0 0.0
      %739 = vmatprep.subr.mxu0 0.0
      %740 = vmatpush1.msra.mxu0 0.0
      %741 = vmatprep.mubr.f32.mxu0 0.0
      %742 = vmatmul.mubr.f32.gmra.mrb[0].mxu0 %v672
      %v743 = vpop.f32.mrb[0].mxu0
      %v744 = vadd.f32 0.0, %v743
      %v745 = vpop.f32.mrb[0].mxu0
      %746 = vmatprep.mubr.f32.mxu0 0.0
      %747 = vmatmul.mubr.f32.gmra.mrb[0].mxu0 %v675
      %v748 = vpop.f32.mrb[0].mxu0
      %v749 = vadd.f32 0.0, %v748
      %v750 = vpop.f32.mrb[0].mxu0
      %751 = vdwg.mxu0
      %752 = vrot.lane.b32.xlu0 %v545, 120
      %v753 = vpop.permute.xlu0 %752
      %754 = vrot.lane.b32.xlu0 %v550, 120
      %v755 = vpop.permute.xlu0 %754
      %756 = vrot.lane.b32.xlu0 %v545, 88
      %v757 = vpop.permute.xlu0 %756
      %758 = vrot.lane.b32.xlu0 %v550, 88
      %v759 = vpop.permute.xlu0 %758
      %v760 = vsel %vm559, %v753, 0
      %v762 = vsel %vm559, %v755, 0
      %v764 = vsel %vm559, %v757, 0
      %v766 = vsel %vm559, %v759, 0
      %768 = vmatprep.subr.mxu0 0.0
      %769 = vmatpush1.xpose.msra.mxu0 %v764
      %770 = vmatprep.subr.mxu0 0.0
      %771 = vmatpush1.xpose.msra.mxu0 %v766
      %772 = vmatprep.subr.mxu0 0.0
      %773 = vmatpush1.xpose.msra.mxu0 0.0
      %774 = vmatprep.subr.mxu0 0.0
      %775 = vmatpush1.xpose.msra.mxu0 0.0
      %776 = vmatprep.subr.mxu0 0.0
      %777 = vmatpush1.xpose.msra.mxu0 0.0
      %778 = vmatprep.subr.mxu0 0.0
      %779 = vmatpush1.xpose.msra.mxu0 0.0
      %780 = vmatprep.subr.mxu0 0.0
      %781 = vmatpush1.xpose.msra.mxu0 0.0
      %782 = vmatprep.subr.mxu0 0.0
      %783 = vmatpush1.xpose.msra.mxu0 0.0
      %784 = vmatprep.subr.mxu0 0.0
      %785 = vmatpush1.xpose.msra.mxu0 0.0
      %786 = vmatprep.subr.mxu0 0.0
      %787 = vmatpush1.xpose.msra.mxu0 0.0
      %788 = vmatprep.subr.mxu0 0.0
      %789 = vmatpush1.xpose.msra.mxu0 0.0
      %790 = vmatprep.subr.mxu0 0.0
      %791 = vmatpush1.xpose.msra.mxu0 0.0
      %792 = vmatprep.subr.mxu0 0.0
      %793 = vmatpush1.xpose.msra.mxu0 0.0
      %794 = vmatprep.subr.mxu0 0.0
      %795 = vmatpush1.xpose.msra.mxu0 0.0
      %796 = vmatprep.subr.mxu0 0.0
      %797 = vmatpush1.xpose.msra.mxu0 0.0
      %798 = vmatprep.subr.mxu0 0.0
      %799 = vmatpush1.xpose.msra.mxu0 0.0
      %800 = vmatprep.subr.mxu0 0.0
      %801 = vmatpush1.xpose.msra.mxu0 0.0
      %802 = vmatprep.subr.mxu0 0.0
      %803 = vmatpush1.xpose.msra.mxu0 0.0
      %804 = vmatprep.subr.mxu0 0.0
      %805 = vmatpush1.xpose.msra.mxu0 0.0
      %806 = vmatprep.subr.mxu0 0.0
      %807 = vmatpush1.xpose.msra.mxu0 0.0
      %808 = vmatprep.subr.mxu0 0.0
      %809 = vmatpush1.xpose.msra.mxu0 0.0
      %810 = vmatprep.subr.mxu0 0.0
      %811 = vmatpush1.xpose.msra.mxu0 0.0
      %812 = vmatprep.subr.mxu0 0.0
      %813 = vmatpush1.xpose.msra.mxu0 0.0
      %814 = vmatprep.subr.mxu0 0.0
      %815 = vmatpush1.xpose.msra.mxu0 0.0
      %816 = vmatprep.subr.mxu0 0.0
      %817 = vmatpush1.xpose.msra.mxu0 0.0
      %818 = vmatprep.subr.mxu0 0.0
      %819 = vmatpush1.xpose.msra.mxu0 0.0
      %820 = vmatprep.subr.mxu0 0.0
      %821 = vmatpush1.xpose.msra.mxu0 0.0
      %822 = vmatprep.subr.mxu0 0.0
      %823 = vmatpush1.xpose.msra.mxu0 0.0
      %824 = vmatprep.subr.mxu0 0.0
      %825 = vmatpush1.xpose.msra.mxu0 0.0
      %826 = vmatprep.subr.mxu0 0.0
      %827 = vmatpush1.xpose.msra.mxu0 0.0
      %828 = vmatprep.subr.mxu0 0.0
      %829 = vmatpush1.xpose.msra.mxu0 0.0
      %830 = vmatprep.subr.mxu0 0.0
      %831 = vmatpush1.xpose.msra.mxu0 0.0
      %832 = vmatprep.mubr.f32.mxu0 0.0
      %833 = vmatmul.mubr.f32.gmra.mrb[0].mxu0 %v760
      %v834 = vpop.f32.mrb[0].mxu0
      %v835 = vadd.f32 %v338, %v834
      %v836 = vpop.f32.mrb[0].mxu0
      %837 = vmatprep.mubr.f32.mxu0 0.0
      %838 = vmatmul.mubr.f32.gmra.mrb[0].mxu0 %v762
      %v839 = vpop.f32.mrb[0].mxu0
      %v840 = vadd.f32 %v339, %v839
      %v841 = vpop.f32.mrb[0].mxu0
      %842 = vdwg.mxu0
      %v843 = vsel %vm342, %v835, -inf
      %844 = vmax.xlane.f32.xlu0 %v843
      %v845 = vpop.xlane.xlu0 %844
      %v846 = vsel %vm342, %v840, -inf
      %847 = vmax.xlane.f32.xlu0 %v846
      %v848 = vpop.xlane.xlu0 %847
      %v849 = vsub.f32 %v835, %v845
      %v850 = vsub.f32 %v840, %v848
      %v851 = vmul.f32 %v849, 1.442695
      %v852 = vpow.pop %v851
      %v853 = vmul.f32 %v850, 1.442695
      %v854 = vpow.pop %v853
      %v855 = vsel %vm342, %v852, 0.0
      %856 = vadd.xlane.f32.xlu0 %v855
      %v857 = vpop.xlane.xlu0 %856
      %v858 = vsel %vm342, %v854, 0.0
      %859 = vadd.xlane.f32.xlu0 %v858
      %v860 = vpop.xlane.xlu0 %859
      %v861 = vrcp.pop %v857
      %v862 = vrcp.pop %v860
      %v863 = vmul.f32 %v852, %v861
      %v864 = vmul.f32 %v854, %v862
      %865 = vrot.lane.b32.xlu0 %v545, 56
      %v866 = vpop.permute.xlu0 %865
      %867 = vrot.lane.b32.xlu0 %v550, 56
      %v868 = vpop.permute.xlu0 %867
      %v872 = vsel %vm342, %v863, 0
      %v875 = vsel %vm342, %v864, 0
      %877 = vmatprep.subr.mxu0 0.0
      %878 = vmatpush1.msra.mxu0 %v866
      %879 = vmatprep.subr.mxu0 0.0
      %880 = vmatpush1.msra.mxu0 %v868
      %881 = vmatprep.subr.mxu0 0.0
      %882 = vmatpush1.msra.mxu0 0.0
      %883 = vmatprep.subr.mxu0 0.0
      %884 = vmatpush1.msra.mxu0 0.0
      %885 = vmatprep.subr.mxu0 0.0
      %886 = vmatpush1.msra.mxu0 0.0
      %887 = vmatprep.subr.mxu0 0.0
      %888 = vmatpush1.msra.mxu0 0.0
      %889 = vmatprep.subr.mxu0 0.0
      %890 = vmatpush1.msra.mxu0 0.0
      %891 = vmatprep.subr.mxu0 0.0
      %892 = vmatpush1.msra.mxu0 0.0
      %893 = vmatprep.subr.mxu0 0.0
      %894 = vmatpush1.msra.mxu0 0.0
      %895 = vmatprep.subr.mxu0 0.0
      %896 = vmatpush1.msra.mxu0 0.0
      %897 = vmatprep.subr.mxu0 0.0
      %898 = vmatpush1.msra.mxu0 0.0
      %899 = vmatprep.subr.mxu0 0.0
      %900 = vmatpush1.msra.mxu0 0.0
      %901 = vmatprep.subr.mxu0 0.0
      %902 = vmatpush1.msra.mxu0 0.0
      %903 = vmatprep.subr.mxu0 0.0
      %904 = vmatpush1.msra.mxu0 0.0
      %905 = vmatprep.subr.mxu0 0.0
      %906 = vmatpush1.msra.mxu0 0.0
      %907 = vmatprep.subr.mxu0 0.0
      %908 = vmatpush1.msra.mxu0 0.0
      %909 = vmatprep.subr.mxu0 0.0
      %910 = vmatpush1.msra.mxu0 0.0
      %911 = vmatprep.subr.mxu0 0.0
      %912 = vmatpush1.msra.mxu0 0.0
      %913 = vmatprep.subr.mxu0 0.0
      %914 = vmatpush1.msra.mxu0 0.0
      %915 = vmatprep.subr.mxu0 0.0
      %916 = vmatpush1.msra.mxu0 0.0
      %917 = vmatprep.subr.mxu0 0.0
      %918 = vmatpush1.msra.mxu0 0.0
      %919 = vmatprep.subr.mxu0 0.0
      %920 = vmatpush1.msra.mxu0 0.0
      %921 = vmatprep.subr.mxu0 0.0
      %922 = vmatpush1.msra.mxu0 0.0
      %923 = vmatprep.subr.mxu0 0.0
      %924 = vmatpush1.msra.mxu0 0.0
      %925 = vmatprep.subr.mxu0 0.0
      %926 = vmatpush1.msra.mxu0 0.0
      %927 = vmatprep.subr.mxu0 0.0
      %928 = vmatpush1.msra.mxu0 0.0
      %929 = vmatprep.subr.mxu0 0.0
      %930 = vmatpush1.msra.mxu0 0.0
      %931 = vmatprep.subr.mxu0 0.0
      %932 = vmatpush1.msra.mxu0 0.0
      %933 = vmatprep.subr.mxu0 0.0
      %934 = vmatpush1.msra.mxu0 0.0
      %935 = vmatprep.subr.mxu0 0.0
      %936 = vmatpush1.msra.mxu0 0.0
      %937 = vmatprep.subr.mxu0 0.0
      %938 = vmatpush1.msra.mxu0 0.0
      %939 = vmatprep.subr.mxu0 0.0
      %940 = vmatpush1.msra.mxu0 0.0
      %941 = vmatprep.mubr.f32.mxu0 0.0
      %942 = vmatmul.mubr.f32.gmra.mrb[0].mxu0 %v872
      %v943 = vpop.f32.mrb[0].mxu0
      %v944 = vadd.f32 0.0, %v943
      %v945 = vpop.f32.mrb[0].mxu0
      %946 = vmatprep.mubr.f32.mxu0 0.0
      %947 = vmatmul.mubr.f32.gmra.mrb[0].mxu0 %v875
      %v948 = vpop.f32.mrb[0].mxu0
      %v949 = vadd.f32 0.0, %v948
      %v950 = vpop.f32.mrb[0].mxu0
      %951 = vdwg.mxu0
      %v953 = vsel %vm559, %v944, 0
      %v956 = vsel %vm559, %v949, 0
      %958 = vmatprep.subr.mxu0 0.0
      %959 = vmatpush1.msra.mxu0 %v323
      %960 = vmatprep.subr.mxu0 0.0
      %961 = vmatpush1.msra.mxu0 0.0
      %962 = vmatprep.subr.mxu0 0.0
      %963 = vmatpush1.msra.mxu0 0.0
      %964 = vmatprep.subr.mxu0 0.0
      %965 = vmatpush1.msra.mxu0 0.0
      %966 = vmatprep.subr.mxu0 0.0
      %967 = vmatpush1.msra.mxu0 0.0
      %968 = vmatprep.subr.mxu0 0.0
      %969 = vmatpush1.msra.mxu0 0.0
      %970 = vmatprep.subr.mxu0 0.0
      %971 = vmatpush1.msra.mxu0 0.0
      %972 = vmatprep.subr.mxu0 0.0
      %973 = vmatpush1.msra.mxu0 0.0
      %974 = vmatprep.subr.mxu0 0.0
      %975 = vmatpush1.msra.mxu0 0.0
      %976 = vmatprep.subr.mxu0 0.0
      %977 = vmatpush1.msra.mxu0 0.0
      %978 = vmatprep.subr.mxu0 0.0
      %979 = vmatpush1.msra.mxu0 0.0
      %980 = vmatprep.subr.mxu0 0.0
      %981 = vmatpush1.msra.mxu0 0.0
      %982 = vmatprep.subr.mxu0 0.0
      %983 = vmatpush1.msra.mxu0 0.0
      %984 = vmatprep.subr.mxu0 0.0
      %985 = vmatpush1.msra.mxu0 0.0
      %986 = vmatprep.subr.mxu0 0.0
      %987 = vmatpush1.msra.mxu0 0.0
      %988 = vmatprep.subr.mxu0 0.0
      %989 = vmatpush1.msra.mxu0 0.0
      %990 = vmatprep.subr.mxu0 0.0
      %991 = vmatpush1.msra.mxu0 0.0
      %992 = vmatprep.subr.mxu0 0.0
      %993 = vmatpush1.msra.mxu0 0.0
      %994 = vmatprep.subr.mxu0 0.0
      %995 = vmatpush1.msra.mxu0 0.0
      %996 = vmatprep.subr.mxu0 0.0
      %997 = vmatpush1.msra.mxu0 0.0
      %998 = vmatprep.subr.mxu0 0.0
      %999 = vmatpush1.msra.mxu0 0.0
      %1000 = vmatprep.subr.mxu0 0.0
      %1001 = vmatpush1.msra.mxu0 0.0
      %1002 = vmatprep.subr.mxu0 0.0
      %1003 = vmatpush1.msra.mxu0 0.0
      %1004 = vmatprep.subr.mxu0 0.0
      %1005 = vmatpush1.msra.mxu0 0.0
      %1006 = vmatprep.subr.mxu0 0.0
      %1007 = vmatpush1.msra.mxu0 0.0
      %1008 = vmatprep.subr.mxu0 0.0
      %1009 = vmatpush1.msra.mxu0 0.0
      %1010 = vmatprep.subr.mxu0 0.0
      %1011 = vmatpush1.msra.mxu0 0.0
      %1012 = vmatprep.subr.mxu0 0.0
      %1013 = vmatpush1.msra.mxu0 0.0
      %1014 = vmatprep.subr.mxu0 0.0
      %1015 = vmatpush1.msra.mxu0 0.0
      %1016 = vmatprep.subr.mxu0 0.0
      %1017 = vmatpush1.msra.mxu0 0.0
      %1018 = vmatprep.subr.mxu0 0.0
      %1019 = vmatpush1.msra.mxu0 0.0
      %1020 = vmatprep.subr.mxu0 0.0
      %1021 = vmatpush1.msra.mxu0 0.0
      %1022 = vmatprep.mubr.f32.mxu0 0.0
      %1023 = vmatmul.mubr.f32.gmra.mrb[0].mxu0 %v953
      %v1024 = vpop.f32.mrb[0].mxu0
      %v1025 = vadd.f32 0.0, %v1024
      %v1026 = vpop.f32.mrb[0].mxu0
      %1027 = vmatprep.mubr.f32.mxu0 0.0
      %1028 = vmatmul.mubr.f32.gmra.mrb[0].mxu0 %v956
      %v1029 = vpop.f32.mrb[0].mxu0
      %v1030 = vadd.f32 0.0, %v1029
      %v1031 = vpop.f32.mrb[0].mxu0
      %1032 = vdwg.mxu0
      %v1034 = vsel %vm559, %v744, 0
      %v1037 = vsel %vm559, %v749, 0
      %1039 = vmatprep.subr.mxu0 0.0
      %1040 = vmatpush1.msra.mxu0 %v322
      %1041 = vmatprep.subr.mxu0 0.0
      %1042 = vmatpush1.msra.mxu0 0.0
      %1043 = vmatprep.subr.mxu0 0.0
      %1044 = vmatpush1.msra.mxu0 0.0
      %1045 = vmatprep.subr.mxu0 0.0
      %1046 = vmatpush1.msra.mxu0 0.0
      %1047 = vmatprep.subr.mxu0 0.0
      %1048 = vmatpush1.msra.mxu0 0.0
      %1049 = vmatprep.subr.mxu0 0.0
      %1050 = vmatpush1.msra.mxu0 0.0
      %1051 = vmatprep.subr.mxu0 0.0
      %1052 = vmatpush1.msra.mxu0 0.0
      %1053 = vmatprep.subr.mxu0 0.0
      %1054 = vmatpush1.msra.mxu0 0.0
      %1055 = vmatprep.subr.mxu0 0.0
      %1056 = vmatpush1.msra.mxu0 0.0
      %1057 = vmatprep.subr.mxu0 0.0
      %1058 = vmatpush1.msra.mxu0 0.0
      %1059 = vmatprep.subr.mxu0 0.0
      %1060 = vmatpush1.msra.mxu0 0.0
      %1061 = vmatprep.subr.mxu0 0.0
      %1062 = vmatpush1.msra.mxu0 0.0
      %1063 = vmatprep.subr.mxu0 0.0
      %1064 = vmatpush1.msra.mxu0 0.0
      %1065 = vmatprep.subr.mxu0 0.0
      %1066 = vmatpush1.msra.mxu0 0.0
      %1067 = vmatprep.subr.mxu0 0.0
      %1068 = vmatpush1.msra.mxu0 0.0
      %1069 = vmatprep.subr.mxu0 0.0
      %1070 = vmatpush1.msra.mxu0 0.0
      %1071 = vmatprep.subr.mxu0 0.0
      %1072 = vmatpush1.msra.mxu0 0.0
      %1073 = vmatprep.subr.mxu0 0.0
      %1074 = vmatpush1.msra.mxu0 0.0
      %1075 = vmatprep.subr.mxu0 0.0
      %1076 = vmatpush1.msra.mxu0 0.0
      %1077 = vmatprep.subr.mxu0 0.0
      %1078 = vmatpush1.msra.mxu0 0.0
      %1079 = vmatprep.subr.mxu0 0.0
      %1080 = vmatpush1.msra.mxu0 0.0
      %1081 = vmatprep.subr.mxu0 0.0
      %1082 = vmatpush1.msra.mxu0 0.0
      %1083 = vmatprep.subr.mxu0 0.0
      %1084 = vmatpush1.msra.mxu0 0.0
      %1085 = vmatprep.subr.mxu0 0.0
      %1086 = vmatpush1.msra.mxu0 0.0
      %1087 = vmatprep.subr.mxu0 0.0
      %1088 = vmatpush1.msra.mxu0 0.0
      %1089 = vmatprep.subr.mxu0 0.0
      %1090 = vmatpush1.msra.mxu0 0.0
      %1091 = vmatprep.subr.mxu0 0.0
      %1092 = vmatpush1.msra.mxu0 0.0
      %1093 = vmatprep.subr.mxu0 0.0
      %1094 = vmatpush1.msra.mxu0 0.0
      %1095 = vmatprep.subr.mxu0 0.0
      %1096 = vmatpush1.msra.mxu0 0.0
      %1097 = vmatprep.subr.mxu0 0.0
      %1098 = vmatpush1.msra.mxu0 0.0
      %1099 = vmatprep.subr.mxu0 0.0
      %1100 = vmatpush1.msra.mxu0 0.0
      %1101 = vmatprep.subr.mxu0 0.0
      %1102 = vmatpush1.msra.mxu0 0.0
      %1103 = vmatprep.mubr.f32.mxu0 0.0
      %1104 = vmatmul.mubr.f32.gmra.mrb[0].mxu0 %v1034
      %v1105 = vpop.f32.mrb[0].mxu0
      %v1106 = vadd.f32 %v1025, %v1105
      %v1107 = vpop.f32.mrb[0].mxu0
      %1108 = vmatprep.mubr.f32.mxu0 0.0
      %1109 = vmatmul.mubr.f32.gmra.mrb[0].mxu0 %v1037
      %v1110 = vpop.f32.mrb[0].mxu0
      %v1111 = vadd.f32 %v1030, %v1110
      %v1112 = vpop.f32.mrb[0].mxu0
      %1113 = vdwg.mxu0
      %1114 = vrot.lane.b32.xlu0 %v545, 112
      %v1115 = vpop.permute.xlu0 %1114
      %1116 = vrot.lane.b32.xlu0 %v550, 112
      %v1117 = vpop.permute.xlu0 %1116
      %1118 = vrot.lane.b32.xlu0 %v545, 80
      %v1119 = vpop.permute.xlu0 %1118
      %1120 = vrot.lane.b32.xlu0 %v550, 80
      %v1121 = vpop.permute.xlu0 %1120
      %v1122 = vsel %vm559, %v1115, 0
      %v1124 = vsel %vm559, %v1117, 0
      %v1126 = vsel %vm559, %v1119, 0
      %v1128 = vsel %vm559, %v1121, 0
      %1130 = vmatprep.subr.mxu0 0.0
      %1131 = vmatpush1.xpose.msra.mxu0 %v1126
      %1132 = vmatprep.subr.mxu0 0.0
      %1133 = vmatpush1.xpose.msra.mxu0 %v1128
      %1134 = vmatprep.subr.mxu0 0.0
      %1135 = vmatpush1.xpose.msra.mxu0 0.0
      %1136 = vmatprep.subr.mxu0 0.0
      %1137 = vmatpush1.xpose.msra.mxu0 0.0
      %1138 = vmatprep.subr.mxu0 0.0
      %1139 = vmatpush1.xpose.msra.mxu0 0.0
      %1140 = vmatprep.subr.mxu0 0.0
      %1141 = vmatpush1.xpose.msra.mxu0 0.0
      %1142 = vmatprep.subr.mxu0 0.0
      %1143 = vmatpush1.xpose.msra.mxu0 0.0
      %1144 = vmatprep.subr.mxu0 0.0
      %1145 = vmatpush1.xpose.msra.mxu0 0.0
      %1146 = vmatprep.subr.mxu0 0.0
      %1147 = vmatpush1.xpose.msra.mxu0 0.0
      %1148 = vmatprep.subr.mxu0 0.0
      %1149 = vmatpush1.xpose.msra.mxu0 0.0
      %1150 = vmatprep.subr.mxu0 0.0
      %1151 = vmatpush1.xpose.msra.mxu0 0.0
      %1152 = vmatprep.subr.mxu0 0.0
      %1153 = vmatpush1.xpose.msra.mxu0 0.0
      %1154 = vmatprep.subr.mxu0 0.0
      %1155 = vmatpush1.xpose.msra.mxu0 0.0
      %1156 = vmatprep.subr.mxu0 0.0
      %1157 = vmatpush1.xpose.msra.mxu0 0.0
      %1158 = vmatprep.subr.mxu0 0.0
      %1159 = vmatpush1.xpose.msra.mxu0 0.0
      %1160 = vmatprep.subr.mxu0 0.0
      %1161 = vmatpush1.xpose.msra.mxu0 0.0
      %1162 = vmatprep.subr.mxu0 0.0
      %1163 = vmatpush1.xpose.msra.mxu0 0.0
      %1164 = vmatprep.subr.mxu0 0.0
      %1165 = vmatpush1.xpose.msra.mxu0 0.0
      %1166 = vmatprep.subr.mxu0 0.0
      %1167 = vmatpush1.xpose.msra.mxu0 0.0
      %1168 = vmatprep.subr.mxu0 0.0
      %1169 = vmatpush1.xpose.msra.mxu0 0.0
      %1170 = vmatprep.subr.mxu0 0.0
      %1171 = vmatpush1.xpose.msra.mxu0 0.0
      %1172 = vmatprep.subr.mxu0 0.0
      %1173 = vmatpush1.xpose.msra.mxu0 0.0
      %1174 = vmatprep.subr.mxu0 0.0
      %1175 = vmatpush1.xpose.msra.mxu0 0.0
      %1176 = vmatprep.subr.mxu0 0.0
      %1177 = vmatpush1.xpose.msra.mxu0 0.0
      %1178 = vmatprep.subr.mxu0 0.0
      %1179 = vmatpush1.xpose.msra.mxu0 0.0
      %1180 = vmatprep.subr.mxu0 0.0
      %1181 = vmatpush1.xpose.msra.mxu0 0.0
      %1182 = vmatprep.subr.mxu0 0.0
      %1183 = vmatpush1.xpose.msra.mxu0 0.0
      %1184 = vmatprep.subr.mxu0 0.0
      %1185 = vmatpush1.xpose.msra.mxu0 0.0
      %1186 = vmatprep.subr.mxu0 0.0
      %1187 = vmatpush1.xpose.msra.mxu0 0.0
      %1188 = vmatprep.subr.mxu0 0.0
      %1189 = vmatpush1.xpose.msra.mxu0 0.0
      %1190 = vmatprep.subr.mxu0 0.0
      %1191 = vmatpush1.xpose.msra.mxu0 0.0
      %1192 = vmatprep.subr.mxu0 0.0
      %1193 = vmatpush1.xpose.msra.mxu0 0.0
      %1194 = vmatprep.mubr.f32.mxu0 0.0
      %1195 = vmatmul.mubr.f32.gmra.mrb[0].mxu0 %v1122
      %v1196 = vpop.f32.mrb[0].mxu0
      %v1197 = vadd.f32 %v338, %v1196
      %v1198 = vpop.f32.mrb[0].mxu0
      %1199 = vmatprep.mubr.f32.mxu0 0.0
      %1200 = vmatmul.mubr.f32.gmra.mrb[0].mxu0 %v1124
      %v1201 = vpop.f32.mrb[0].mxu0
      %v1202 = vadd.f32 %v339, %v1201
      %v1203 = vpop.f32.mrb[0].mxu0
      %1204 = vdwg.mxu0
      %v1205 = vsel %vm342, %v1197, -inf
      %1206 = vmax.xlane.f32.xlu0 %v1205
      %v1207 = vpop.xlane.xlu0 %1206
      %v1208 = vsel %vm342, %v1202, -inf
      %1209 = vmax.xlane.f32.xlu0 %v1208
      %v1210 = vpop.xlane.xlu0 %1209
      %v1211 = vsub.f32 %v1197, %v1207
      %v1212 = vsub.f32 %v1202, %v1210
      %v1213 = vmul.f32 %v1211, 1.442695
      %v1214 = vpow.pop %v1213
      %v1215 = vmul.f32 %v1212, 1.442695
      %v1216 = vpow.pop %v1215
      %v1217 = vsel %vm342, %v1214, 0.0
      %1218 = vadd.xlane.f32.xlu0 %v1217
      %v1219 = vpop.xlane.xlu0 %1218
      %v1220 = vsel %vm342, %v1216, 0.0
      %1221 = vadd.xlane.f32.xlu0 %v1220
      %v1222 = vpop.xlane.xlu0 %1221
      %v1223 = vrcp.pop %v1219
      %v1224 = vrcp.pop %v1222
      %v1225 = vmul.f32 %v1214, %v1223
      %v1226 = vmul.f32 %v1216, %v1224
      %1227 = vrot.lane.b32.xlu0 %v545, 48
      %v1228 = vpop.permute.xlu0 %1227
      %1229 = vrot.lane.b32.xlu0 %v550, 48
      %v1230 = vpop.permute.xlu0 %1229
      %v1234 = vsel %vm342, %v1225, 0
      %v1237 = vsel %vm342, %v1226, 0
      %1239 = vmatprep.subr.mxu0 0.0
      %1240 = vmatpush1.msra.mxu0 %v1228
      %1241 = vmatprep.subr.mxu0 0.0
      %1242 = vmatpush1.msra.mxu0 %v1230
      %1243 = vmatprep.subr.mxu0 0.0
      %1244 = vmatpush1.msra.mxu0 0.0
      %1245 = vmatprep.subr.mxu0 0.0
      %1246 = vmatpush1.msra.mxu0 0.0
      %1247 = vmatprep.subr.mxu0 0.0
      %1248 = vmatpush1.msra.mxu0 0.0
      %1249 = vmatprep.subr.mxu0 0.0
      %1250 = vmatpush1.msra.mxu0 0.0
      %1251 = vmatprep.subr.mxu0 0.0
      %1252 = vmatpush1.msra.mxu0 0.0
      %1253 = vmatprep.subr.mxu0 0.0
      %1254 = vmatpush1.msra.mxu0 0.0
      %1255 = vmatprep.subr.mxu0 0.0
      %1256 = vmatpush1.msra.mxu0 0.0
      %1257 = vmatprep.subr.mxu0 0.0
      %1258 = vmatpush1.msra.mxu0 0.0
      %1259 = vmatprep.subr.mxu0 0.0
      %1260 = vmatpush1.msra.mxu0 0.0
      %1261 = vmatprep.subr.mxu0 0.0
      %1262 = vmatpush1.msra.mxu0 0.0
      %1263 = vmatprep.subr.mxu0 0.0
      %1264 = vmatpush1.msra.mxu0 0.0
      %1265 = vmatprep.subr.mxu0 0.0
      %1266 = vmatpush1.msra.mxu0 0.0
      %1267 = vmatprep.subr.mxu0 0.0
      %1268 = vmatpush1.msra.mxu0 0.0
      %1269 = vmatprep.subr.mxu0 0.0
      %1270 = vmatpush1.msra.mxu0 0.0
      %1271 = vmatprep.subr.mxu0 0.0
      %1272 = vmatpush1.msra.mxu0 0.0
      %1273 = vmatprep.subr.mxu0 0.0
      %1274 = vmatpush1.msra.mxu0 0.0
      %1275 = vmatprep.subr.mxu0 0.0
      %1276 = vmatpush1.msra.mxu0 0.0
      %1277 = vmatprep.subr.mxu0 0.0
      %1278 = vmatpush1.msra.mxu0 0.0
      %1279 = vmatprep.subr.mxu0 0.0
      %1280 = vmatpush1.msra.mxu0 0.0
      %1281 = vmatprep.subr.mxu0 0.0
      %1282 = vmatpush1.msra.mxu0 0.0
      %1283 = vmatprep.subr.mxu0 0.0
      %1284 = vmatpush1.msra.mxu0 0.0
      %1285 = vmatprep.subr.mxu0 0.0
      %1286 = vmatpush1.msra.mxu0 0.0
      %1287 = vmatprep.subr.mxu0 0.0
      %1288 = vmatpush1.msra.mxu0 0.0
      %1289 = vmatprep.subr.mxu0 0.0
      %1290 = vmatpush1.msra.mxu0 0.0
      %1291 = vmatprep.subr.mxu0 0.0
      %1292 = vmatpush1.msra.mxu0 0.0
      %1293 = vmatprep.subr.mxu0 0.0
      %1294 = vmatpush1.msra.mxu0 0.0
      %1295 = vmatprep.subr.mxu0 0.0
      %1296 = vmatpush1.msra.mxu0 0.0
      %1297 = vmatprep.subr.mxu0 0.0
      %1298 = vmatpush1.msra.mxu0 0.0
      %1299 = vmatprep.subr.mxu0 0.0
      %1300 = vmatpush1.msra.mxu0 0.0
      %1301 = vmatprep.subr.mxu0 0.0
      %1302 = vmatpush1.msra.mxu0 0.0
      %1303 = vmatprep.mubr.f32.mxu0 0.0
      %1304 = vmatmul.mubr.f32.gmra.mrb[0].mxu0 %v1234
      %v1305 = vpop.f32.mrb[0].mxu0
      %v1306 = vadd.f32 0.0, %v1305
      %v1307 = vpop.f32.mrb[0].mxu0
      %1308 = vmatprep.mubr.f32.mxu0 0.0
      %1309 = vmatmul.mubr.f32.gmra.mrb[0].mxu0 %v1237
      %v1310 = vpop.f32.mrb[0].mxu0
      %v1311 = vadd.f32 0.0, %v1310
      %v1312 = vpop.f32.mrb[0].mxu0
      %1313 = vdwg.mxu0
      %v1315 = vsel %vm559, %v1306, 0
      %v1318 = vsel %vm559, %v1311, 0
      %1320 = vmatprep.subr.mxu0 0.0
      %1321 = vmatpush1.msra.mxu0 %v324
      %1322 = vmatprep.subr.mxu0 0.0
      %1323 = vmatpush1.msra.mxu0 0.0
      %1324 = vmatprep.subr.mxu0 0.0
      %1325 = vmatpush1.msra.mxu0 0.0
      %1326 = vmatprep.subr.mxu0 0.0
      %1327 = vmatpush1.msra.mxu0 0.0
      %1328 = vmatprep.subr.mxu0 0.0
      %1329 = vmatpush1.msra.mxu0 0.0
      %1330 = vmatprep.subr.mxu0 0.0
      %1331 = vmatpush1.msra.mxu0 0.0
      %1332 = vmatprep.subr.mxu0 0.0
      %1333 = vmatpush1.msra.mxu0 0.0
      %1334 = vmatprep.subr.mxu0 0.0
      %1335 = vmatpush1.msra.mxu0 0.0
      %1336 = vmatprep.subr.mxu0 0.0
      %1337 = vmatpush1.msra.mxu0 0.0
      %1338 = vmatprep.subr.mxu0 0.0
      %1339 = vmatpush1.msra.mxu0 0.0
      %1340 = vmatprep.subr.mxu0 0.0
      %1341 = vmatpush1.msra.mxu0 0.0
      %1342 = vmatprep.subr.mxu0 0.0
      %1343 = vmatpush1.msra.mxu0 0.0
      %1344 = vmatprep.subr.mxu0 0.0
      %1345 = vmatpush1.msra.mxu0 0.0
      %1346 = vmatprep.subr.mxu0 0.0
      %1347 = vmatpush1.msra.mxu0 0.0
      %1348 = vmatprep.subr.mxu0 0.0
      %1349 = vmatpush1.msra.mxu0 0.0
      %1350 = vmatprep.subr.mxu0 0.0
      %1351 = vmatpush1.msra.mxu0 0.0
      %1352 = vmatprep.subr.mxu0 0.0
      %1353 = vmatpush1.msra.mxu0 0.0
      %1354 = vmatprep.subr.mxu0 0.0
      %1355 = vmatpush1.msra.mxu0 0.0
      %1356 = vmatprep.subr.mxu0 0.0
      %1357 = vmatpush1.msra.mxu0 0.0
      %1358 = vmatprep.subr.mxu0 0.0
      %1359 = vmatpush1.msra.mxu0 0.0
      %1360 = vmatprep.subr.mxu0 0.0
      %1361 = vmatpush1.msra.mxu0 0.0
      %1362 = vmatprep.subr.mxu0 0.0
      %1363 = vmatpush1.msra.mxu0 0.0
      %1364 = vmatprep.subr.mxu0 0.0
      %1365 = vmatpush1.msra.mxu0 0.0
      %1366 = vmatprep.subr.mxu0 0.0
      %1367 = vmatpush1.msra.mxu0 0.0
      %1368 = vmatprep.subr.mxu0 0.0
      %1369 = vmatpush1.msra.mxu0 0.0
      %1370 = vmatprep.subr.mxu0 0.0
      %1371 = vmatpush1.msra.mxu0 0.0
      %1372 = vmatprep.subr.mxu0 0.0
      %1373 = vmatpush1.msra.mxu0 0.0
      %1374 = vmatprep.subr.mxu0 0.0
      %1375 = vmatpush1.msra.mxu0 0.0
      %1376 = vmatprep.subr.mxu0 0.0
      %1377 = vmatpush1.msra.mxu0 0.0
      %1378 = vmatprep.subr.mxu0 0.0
      %1379 = vmatpush1.msra.mxu0 0.0
      %1380 = vmatprep.subr.mxu0 0.0
      %1381 = vmatpush1.msra.mxu0 0.0
      %1382 = vmatprep.subr.mxu0 0.0
      %1383 = vmatpush1.msra.mxu0 0.0
      %1384 = vmatprep.mubr.f32.mxu0 0.0
      %1385 = vmatmul.mubr.f32.gmra.mrb[0].mxu0 %v1315
      %v1386 = vpop.f32.mrb[0].mxu0
      %v1387 = vadd.f32 0.0, %v1386
      %v1388 = vpop.f32.mrb[0].mxu0
      %1389 = vmatprep.mubr.f32.mxu0 0.0
      %1390 = vmatmul.mubr.f32.gmra.mrb[0].mxu0 %v1318
      %v1391 = vpop.f32.mrb[0].mxu0
      %v1392 = vadd.f32 0.0, %v1391
      %v1393 = vpop.f32.mrb[0].mxu0
      %1394 = vdwg.mxu0
      %v1395 = vadd.f32 %v1106, %v1387
      %v1396 = vadd.f32 %v1111, %v1392
      %1397 = vrot.lane.b32.xlu0 %v545, 104
      %v1398 = vpop.permute.xlu0 %1397
      %1399 = vrot.lane.b32.xlu0 %v550, 104
      %v1400 = vpop.permute.xlu0 %1399
      %1401 = vrot.lane.b32.xlu0 %v545, 72
      %v1402 = vpop.permute.xlu0 %1401
      %1403 = vrot.lane.b32.xlu0 %v550, 72
      %v1404 = vpop.permute.xlu0 %1403
      %v1405 = vsel %vm559, %v1398, 0
      %v1407 = vsel %vm559, %v1400, 0
      %v1409 = vsel %vm559, %v1402, 0
      %v1411 = vsel %vm559, %v1404, 0
      %1413 = vmatprep.subr.mxu0 0.0
      %1414 = vmatpush1.xpose.msra.mxu0 %v1409
      %1415 = vmatprep.subr.mxu0 0.0
      %1416 = vmatpush1.xpose.msra.mxu0 %v1411
      %1417 = vmatprep.subr.mxu0 0.0
      %1418 = vmatpush1.xpose.msra.mxu0 0.0
      %1419 = vmatprep.subr.mxu0 0.0
      %1420 = vmatpush1.xpose.msra.mxu0 0.0
      %1421 = vmatprep.subr.mxu0 0.0
      %1422 = vmatpush1.xpose.msra.mxu0 0.0
      %1423 = vmatprep.subr.mxu0 0.0
      %1424 = vmatpush1.xpose.msra.mxu0 0.0
      %1425 = vmatprep.subr.mxu0 0.0
      %1426 = vmatpush1.xpose.msra.mxu0 0.0
      %1427 = vmatprep.subr.mxu0 0.0
      %1428 = vmatpush1.xpose.msra.mxu0 0.0
      %1429 = vmatprep.subr.mxu0 0.0
      %1430 = vmatpush1.xpose.msra.mxu0 0.0
      %1431 = vmatprep.subr.mxu0 0.0
      %1432 = vmatpush1.xpose.msra.mxu0 0.0
      %1433 = vmatprep.subr.mxu0 0.0
      %1434 = vmatpush1.xpose.msra.mxu0 0.0
      %1435 = vmatprep.subr.mxu0 0.0
      %1436 = vmatpush1.xpose.msra.mxu0 0.0
      %1437 = vmatprep.subr.mxu0 0.0
      %1438 = vmatpush1.xpose.msra.mxu0 0.0
      %1439 = vmatprep.subr.mxu0 0.0
      %1440 = vmatpush1.xpose.msra.mxu0 0.0
      %1441 = vmatprep.subr.mxu0 0.0
      %1442 = vmatpush1.xpose.msra.mxu0 0.0
      %1443 = vmatprep.subr.mxu0 0.0
      %1444 = vmatpush1.xpose.msra.mxu0 0.0
      %1445 = vmatprep.subr.mxu0 0.0
      %1446 = vmatpush1.xpose.msra.mxu0 0.0
      %1447 = vmatprep.subr.mxu0 0.0
      %1448 = vmatpush1.xpose.msra.mxu0 0.0
      %1449 = vmatprep.subr.mxu0 0.0
      %1450 = vmatpush1.xpose.msra.mxu0 0.0
      %1451 = vmatprep.subr.mxu0 0.0
      %1452 = vmatpush1.xpose.msra.mxu0 0.0
      %1453 = vmatprep.subr.mxu0 0.0
      %1454 = vmatpush1.xpose.msra.mxu0 0.0
      %1455 = vmatprep.subr.mxu0 0.0
      %1456 = vmatpush1.xpose.msra.mxu0 0.0
      %1457 = vmatprep.subr.mxu0 0.0
      %1458 = vmatpush1.xpose.msra.mxu0 0.0
      %1459 = vmatprep.subr.mxu0 0.0
      %1460 = vmatpush1.xpose.msra.mxu0 0.0
      %1461 = vmatprep.subr.mxu0 0.0
      %1462 = vmatpush1.xpose.msra.mxu0 0.0
      %1463 = vmatprep.subr.mxu0 0.0
      %1464 = vmatpush1.xpose.msra.mxu0 0.0
      %1465 = vmatprep.subr.mxu0 0.0
      %1466 = vmatpush1.xpose.msra.mxu0 0.0
      %1467 = vmatprep.subr.mxu0 0.0
      %1468 = vmatpush1.xpose.msra.mxu0 0.0
      %1469 = vmatprep.subr.mxu0 0.0
      %1470 = vmatpush1.xpose.msra.mxu0 0.0
      %1471 = vmatprep.subr.mxu0 0.0
      %1472 = vmatpush1.xpose.msra.mxu0 0.0
      %1473 = vmatprep.subr.mxu0 0.0
      %1474 = vmatpush1.xpose.msra.mxu0 0.0
      %1475 = vmatprep.subr.mxu0 0.0
      %1476 = vmatpush1.xpose.msra.mxu0 0.0
      %1477 = vmatprep.mubr.f32.mxu0 0.0
      %1478 = vmatmul.mubr.f32.gmra.mrb[0].mxu0 %v1405
      %v1479 = vpop.f32.mrb[0].mxu0
      %v1480 = vadd.f32 %v338, %v1479
      %v1481 = vpop.f32.mrb[0].mxu0
      %1482 = vmatprep.mubr.f32.mxu0 0.0
      %1483 = vmatmul.mubr.f32.gmra.mrb[0].mxu0 %v1407
      %v1484 = vpop.f32.mrb[0].mxu0
      %v1485 = vadd.f32 %v339, %v1484
      %v1486 = vpop.f32.mrb[0].mxu0
      %1487 = vdwg.mxu0
      %v1488 = vsel %vm342, %v1480, -inf
      %1489 = vmax.xlane.f32.xlu0 %v1488
      %v1490 = vpop.xlane.xlu0 %1489
      %v1491 = vsel %vm342, %v1485, -inf
      %1492 = vmax.xlane.f32.xlu0 %v1491
      %v1493 = vpop.xlane.xlu0 %1492
      %v1494 = vsub.f32 %v1480, %v1490
      %v1495 = vsub.f32 %v1485, %v1493
      %v1496 = vmul.f32 %v1494, 1.442695
      %v1497 = vpow.pop %v1496
      %v1498 = vmul.f32 %v1495, 1.442695
      %v1499 = vpow.pop %v1498
      %v1500 = vsel %vm342, %v1497, 0.0
      %1501 = vadd.xlane.f32.xlu0 %v1500
      %v1502 = vpop.xlane.xlu0 %1501
      %v1503 = vsel %vm342, %v1499, 0.0
      %1504 = vadd.xlane.f32.xlu0 %v1503
      %v1505 = vpop.xlane.xlu0 %1504
      %v1506 = vrcp.pop %v1502
      %v1507 = vrcp.pop %v1505
      %v1508 = vmul.f32 %v1497, %v1506
      %v1509 = vmul.f32 %v1499, %v1507
      %1510 = vrot.lane.b32.xlu0 %v545, 40
      %v1511 = vpop.permute.xlu0 %1510
      %1512 = vrot.lane.b32.xlu0 %v550, 40
      %v1513 = vpop.permute.xlu0 %1512
      %v1517 = vsel %vm342, %v1508, 0
      %v1520 = vsel %vm342, %v1509, 0
      %1522 = vmatprep.subr.mxu0 0.0
      %1523 = vmatpush1.msra.mxu0 %v1511
      %1524 = vmatprep.subr.mxu0 0.0
      %1525 = vmatpush1.msra.mxu0 %v1513
      %1526 = vmatprep.subr.mxu0 0.0
      %1527 = vmatpush1.msra.mxu0 0.0
      %1528 = vmatprep.subr.mxu0 0.0
      %1529 = vmatpush1.msra.mxu0 0.0
      %1530 = vmatprep.subr.mxu0 0.0
      %1531 = vmatpush1.msra.mxu0 0.0
      %1532 = vmatprep.subr.mxu0 0.0
      %1533 = vmatpush1.msra.mxu0 0.0
      %1534 = vmatprep.subr.mxu0 0.0
      %1535 = vmatpush1.msra.mxu0 0.0
      %1536 = vmatprep.subr.mxu0 0.0
      %1537 = vmatpush1.msra.mxu0 0.0
      %1538 = vmatprep.subr.mxu0 0.0
      %1539 = vmatpush1.msra.mxu0 0.0
      %1540 = vmatprep.subr.mxu0 0.0
      %1541 = vmatpush1.msra.mxu0 0.0
      %1542 = vmatprep.subr.mxu0 0.0
      %1543 = vmatpush1.msra.mxu0 0.0
      %1544 = vmatprep.subr.mxu0 0.0
      %1545 = vmatpush1.msra.mxu0 0.0
      %1546 = vmatprep.subr.mxu0 0.0
      %1547 = vmatpush1.msra.mxu0 0.0
      %1548 = vmatprep.subr.mxu0 0.0
      %1549 = vmatpush1.msra.mxu0 0.0
      %1550 = vmatprep.subr.mxu0 0.0
      %1551 = vmatpush1.msra.mxu0 0.0
      %1552 = vmatprep.subr.mxu0 0.0
      %1553 = vmatpush1.msra.mxu0 0.0
      %1554 = vmatprep.subr.mxu0 0.0
      %1555 = vmatpush1.msra.mxu0 0.0
      %1556 = vmatprep.subr.mxu0 0.0
      %1557 = vmatpush1.msra.mxu0 0.0
      %1558 = vmatprep.subr.mxu0 0.0
      %1559 = vmatpush1.msra.mxu0 0.0
      %1560 = vmatprep.subr.mxu0 0.0
      %1561 = vmatpush1.msra.mxu0 0.0
      %1562 = vmatprep.subr.mxu0 0.0
      %1563 = vmatpush1.msra.mxu0 0.0
      %1564 = vmatprep.subr.mxu0 0.0
      %1565 = vmatpush1.msra.mxu0 0.0
      %1566 = vmatprep.subr.mxu0 0.0
      %1567 = vmatpush1.msra.mxu0 0.0
      %1568 = vmatprep.subr.mxu0 0.0
      %1569 = vmatpush1.msra.mxu0 0.0
      %1570 = vmatprep.subr.mxu0 0.0
      %1571 = vmatpush1.msra.mxu0 0.0
      %1572 = vmatprep.subr.mxu0 0.0
      %1573 = vmatpush1.msra.mxu0 0.0
      %1574 = vmatprep.subr.mxu0 0.0
      %1575 = vmatpush1.msra.mxu0 0.0
      %1576 = vmatprep.subr.mxu0 0.0
      %1577 = vmatpush1.msra.mxu0 0.0
      %1578 = vmatprep.subr.mxu0 0.0
      %1579 = vmatpush1.msra.mxu0 0.0
      %1580 = vmatprep.subr.mxu0 0.0
      %1581 = vmatpush1.msra.mxu0 0.0
      %1582 = vmatprep.subr.mxu0 0.0
      %1583 = vmatpush1.msra.mxu0 0.0
      %1584 = vmatprep.subr.mxu0 0.0
      %1585 = vmatpush1.msra.mxu0 0.0
      %1586 = vmatprep.mubr.f32.mxu0 0.0
      %1587 = vmatmul.mubr.f32.gmra.mrb[0].mxu0 %v1517
      %v1588 = vpop.f32.mrb[0].mxu0
      %v1589 = vadd.f32 0.0, %v1588
      %v1590 = vpop.f32.mrb[0].mxu0
      %1591 = vmatprep.mubr.f32.mxu0 0.0
      %1592 = vmatmul.mubr.f32.gmra.mrb[0].mxu0 %v1520
      %v1593 = vpop.f32.mrb[0].mxu0
      %v1594 = vadd.f32 0.0, %v1593
      %v1595 = vpop.f32.mrb[0].mxu0
      %1596 = vdwg.mxu0
      %v1598 = vsel %vm559, %v1589, 0
      %v1601 = vsel %vm559, %v1594, 0
      %1603 = vmatprep.subr.mxu0 0.0
      %1604 = vmatpush1.msra.mxu0 %v325
      %1605 = vmatprep.subr.mxu0 0.0
      %1606 = vmatpush1.msra.mxu0 0.0
      %1607 = vmatprep.subr.mxu0 0.0
      %1608 = vmatpush1.msra.mxu0 0.0
      %1609 = vmatprep.subr.mxu0 0.0
      %1610 = vmatpush1.msra.mxu0 0.0
      %1611 = vmatprep.subr.mxu0 0.0
      %1612 = vmatpush1.msra.mxu0 0.0
      %1613 = vmatprep.subr.mxu0 0.0
      %1614 = vmatpush1.msra.mxu0 0.0
      %1615 = vmatprep.subr.mxu0 0.0
      %1616 = vmatpush1.msra.mxu0 0.0
      %1617 = vmatprep.subr.mxu0 0.0
      %1618 = vmatpush1.msra.mxu0 0.0
      %1619 = vmatprep.subr.mxu0 0.0
      %1620 = vmatpush1.msra.mxu0 0.0
      %1621 = vmatprep.subr.mxu0 0.0
      %1622 = vmatpush1.msra.mxu0 0.0
      %1623 = vmatprep.subr.mxu0 0.0
      %1624 = vmatpush1.msra.mxu0 0.0
      %1625 = vmatprep.subr.mxu0 0.0
      %1626 = vmatpush1.msra.mxu0 0.0
      %1627 = vmatprep.subr.mxu0 0.0
      %1628 = vmatpush1.msra.mxu0 0.0
      %1629 = vmatprep.subr.mxu0 0.0
      %1630 = vmatpush1.msra.mxu0 0.0
      %1631 = vmatprep.subr.mxu0 0.0
      %1632 = vmatpush1.msra.mxu0 0.0
      %1633 = vmatprep.subr.mxu0 0.0
      %1634 = vmatpush1.msra.mxu0 0.0
      %1635 = vmatprep.subr.mxu0 0.0
      %1636 = vmatpush1.msra.mxu0 0.0
      %1637 = vmatprep.subr.mxu0 0.0
      %1638 = vmatpush1.msra.mxu0 0.0
      %1639 = vmatprep.subr.mxu0 0.0
      %1640 = vmatpush1.msra.mxu0 0.0
      %1641 = vmatprep.subr.mxu0 0.0
      %1642 = vmatpush1.msra.mxu0 0.0
      %1643 = vmatprep.subr.mxu0 0.0
      %1644 = vmatpush1.msra.mxu0 0.0
      %1645 = vmatprep.subr.mxu0 0.0
      %1646 = vmatpush1.msra.mxu0 0.0
      %1647 = vmatprep.subr.mxu0 0.0
      %1648 = vmatpush1.msra.mxu0 0.0
      %1649 = vmatprep.subr.mxu0 0.0
      %1650 = vmatpush1.msra.mxu0 0.0
      %1651 = vmatprep.subr.mxu0 0.0
      %1652 = vmatpush1.msra.mxu0 0.0
      %1653 = vmatprep.subr.mxu0 0.0
      %1654 = vmatpush1.msra.mxu0 0.0
      %1655 = vmatprep.subr.mxu0 0.0
      %1656 = vmatpush1.msra.mxu0 0.0
      %1657 = vmatprep.subr.mxu0 0.0
      %1658 = vmatpush1.msra.mxu0 0.0
      %1659 = vmatprep.subr.mxu0 0.0
      %1660 = vmatpush1.msra.mxu0 0.0
      %1661 = vmatprep.subr.mxu0 0.0
      %1662 = vmatpush1.msra.mxu0 0.0
      %1663 = vmatprep.subr.mxu0 0.0
      %1664 = vmatpush1.msra.mxu0 0.0
      %1665 = vmatprep.subr.mxu0 0.0
      %1666 = vmatpush1.msra.mxu0 0.0
      %1667 = vmatprep.mubr.f32.mxu0 0.0
      %1668 = vmatmul.mubr.f32.gmra.mrb[0].mxu0 %v1598
      %v1669 = vpop.f32.mrb[0].mxu0
      %v1670 = vadd.f32 0.0, %v1669
      %v1671 = vpop.f32.mrb[0].mxu0
      %1672 = vmatprep.mubr.f32.mxu0 0.0
      %1673 = vmatmul.mubr.f32.gmra.mrb[0].mxu0 %v1601
      %v1674 = vpop.f32.mrb[0].mxu0
      %v1675 = vadd.f32 0.0, %v1674
      %v1676 = vpop.f32.mrb[0].mxu0
      %1677 = vdwg.mxu0
      %v1678 = vadd.f32 %v1395, %v1670
      %v1679 = vadd.f32 %v1396, %v1675
      %v1680 = vlaneseq
      %v1681 = vshrl.u32 %v1680, 7
      %v1682 = vsub.s32 4, %v1681
      %v1683 = vrot.slane %v306, %v1682
      %v1684 = vadd.f32 %v1678, %v1683
      %v1685 = vadd.f32 %v1679, %v1683
      %v1686 = vadd.f32 %v1684, %v459
      %v1687 = vadd.f32 %v1685, %v464
      %v1688 = vsel %vm471, %v1686, 0.0
      %1689 = vadd.xlane.f32.xlu0 %v1688
      %v1690 = vpop.xlane.xlu0 %1689
      %v1691 = vsel %vm471, %v1687, 0.0
      %1692 = vadd.xlane.f32.xlu0 %v1691
      %v1693 = vpop.xlane.xlu0 %1692
      %v1694 = vrcp.pop 32.0
      %v1695 = vmul.f32 %v1690, %v1694
      %v1696 = vmul.f32 %v1693, %v1694
      %v1697 = vsub.f32 %v1686, %v1695
      %v1698 = vsub.f32 %v1687, %v1696
      %v1699 = vmul.f32 %v1697, %v1697
      %v1700 = vmul.f32 %v1698, %v1698
      %v1701 = vsel %vm471, %v1699, 0.0
      %1702 = vadd.xlane.f32.xlu0 %v1701
      %v1703 = vpop.xlane.xlu0 %1702
      %v1704 = vsel %vm471, %v1700, 0.0
      %1705 = vadd.xlane.f32.xlu0 %v1704
      %v1706 = vpop.xlane.xlu0 %1705
      %v1707 = vmul.f32 %v1703, %v1694
      %v1708 = vmul.f32 %v1706, %v1694
      %v1709 = vadd.f32 %v1707, 1e-12
      %v1710 = vadd.f32 %v1708, 1e-12
      %v1711 = vrsqrt.pop %v1709
      %v1712 = vrsqrt.pop %v1710
      %v1713 = vmul.f32 %v1697, %v1711
      %v1714 = vmul.f32 %v1698, %v1712
      %v1715 = vlaneseq
      %v1716 = vshrl.u32 %v1715, 7
      %v1717 = vsub.s32 5, %v1716
      %v1718 = vrot.slane %v306, %v1717
      %v1719 = vmul.f32 %v1713, %v1718
      %v1720 = vmul.f32 %v1714, %v1718
      %v1721 = vlaneseq
      %v1722 = vshrl.u32 %v1721, 7
      %v1723 = vsub.s32 6, %v1722
      %v1724 = vrot.slane %v306, %v1723
      %v1725 = vadd.f32 %v1719, %v1724
      %v1726 = vadd.f32 %v1720, %v1724
      %v1727 = vlaneseq
      %v1728 = vshrl.u32 %v1727, 7
      %v1729 = vsub.s32 7, %v1728
      %v1730 = vrot.slane %v306, %v1729
      %v1732 = vsel %vm471, %v1725, 0
      %v1735 = vsel %vm471, %v1726, 0
      %1737 = vmatprep.subr.mxu0 0.0
      %1738 = vmatpush1.msra.mxu0 %v326
      %1739 = vmatprep.subr.mxu0 0.0
      %1740 = vmatpush1.msra.mxu0 %v327
      %1741 = vmatprep.subr.mxu0 0.0
      %1742 = vmatpush1.msra.mxu0 %v328
      %1743 = vmatprep.subr.mxu0 0.0
      %1744 = vmatpush1.msra.mxu0 %v329
      %1745 = vmatprep.subr.mxu0 0.0
      %1746 = vmatpush1.msra.mxu0 0.0
      %1747 = vmatprep.subr.mxu0 0.0
      %1748 = vmatpush1.msra.mxu0 0.0
      %1749 = vmatprep.subr.mxu0 0.0
      %1750 = vmatpush1.msra.mxu0 0.0
      %1751 = vmatprep.subr.mxu0 0.0
      %1752 = vmatpush1.msra.mxu0 0.0
      %1753 = vmatprep.subr.mxu0 0.0
      %1754 = vmatpush1.msra.mxu0 0.0
      %1755 = vmatprep.subr.mxu0 0.0
      %1756 = vmatpush1.msra.mxu0 0.0
      %1757 = vmatprep.subr.mxu0 0.0
      %1758 = vmatpush1.msra.mxu0 0.0
      %1759 = vmatprep.subr.mxu0 0.0
      %1760 = vmatpush1.msra.mxu0 0.0
      %1761 = vmatprep.subr.mxu0 0.0
      %1762 = vmatpush1.msra.mxu0 0.0
      %1763 = vmatprep.subr.mxu0 0.0
      %1764 = vmatpush1.msra.mxu0 0.0
      %1765 = vmatprep.subr.mxu0 0.0
      %1766 = vmatpush1.msra.mxu0 0.0
      %1767 = vmatprep.subr.mxu0 0.0
      %1768 = vmatpush1.msra.mxu0 0.0
      %1769 = vmatprep.subr.mxu0 0.0
      %1770 = vmatpush1.msra.mxu0 0.0
      %1771 = vmatprep.subr.mxu0 0.0
      %1772 = vmatpush1.msra.mxu0 0.0
      %1773 = vmatprep.subr.mxu0 0.0
      %1774 = vmatpush1.msra.mxu0 0.0
      %1775 = vmatprep.subr.mxu0 0.0
      %1776 = vmatpush1.msra.mxu0 0.0
      %1777 = vmatprep.subr.mxu0 0.0
      %1778 = vmatpush1.msra.mxu0 0.0
      %1779 = vmatprep.subr.mxu0 0.0
      %1780 = vmatpush1.msra.mxu0 0.0
      %1781 = vmatprep.subr.mxu0 0.0
      %1782 = vmatpush1.msra.mxu0 0.0
      %1783 = vmatprep.subr.mxu0 0.0
      %1784 = vmatpush1.msra.mxu0 0.0
      %1785 = vmatprep.subr.mxu0 0.0
      %1786 = vmatpush1.msra.mxu0 0.0
      %1787 = vmatprep.subr.mxu0 0.0
      %1788 = vmatpush1.msra.mxu0 0.0
      %1789 = vmatprep.subr.mxu0 0.0
      %1790 = vmatpush1.msra.mxu0 0.0
      %1791 = vmatprep.subr.mxu0 0.0
      %1792 = vmatpush1.msra.mxu0 0.0
      %1793 = vmatprep.subr.mxu0 0.0
      %1794 = vmatpush1.msra.mxu0 0.0
      %1795 = vmatprep.subr.mxu0 0.0
      %1796 = vmatpush1.msra.mxu0 0.0
      %1797 = vmatprep.subr.mxu0 0.0
      %1798 = vmatpush1.msra.mxu0 0.0
      %1799 = vmatprep.subr.mxu0 0.0
      %1800 = vmatpush1.msra.mxu0 0.0
      %1801 = vmatprep.mubr.f32.mxu0 0.0
      %1802 = vmatmul.mubr.f32.gmra.mrb[0].mxu0 %v1732
      %v1803 = vpop.f32.mrb[0].mxu0
      %v1804 = vadd.f32 %v1730, %v1803
      %v1805 = vpop.f32.mrb[0].mxu0
      %1806 = vmatprep.mubr.f32.mxu0 0.0
      %1807 = vmatmul.mubr.f32.gmra.mrb[0].mxu0 %v1735
      %v1808 = vpop.f32.mrb[0].mxu0
      %v1809 = vadd.f32 %v1730, %v1808
      %v1810 = vpop.f32.mrb[0].mxu0
      %1811 = vdwg.mxu0
      %v1812 = vmul.f32 %v1804, 0.5
      %v1813 = vmul.f32 %v1809, 0.5
      %v1814 = vmul.f32 %v1804, 0.044715
      %v1815 = vmul.f32 %v1809, 0.044715
      %v1816 = vmul.f32 %v1814, %v1804
      %v1817 = vmul.f32 %v1815, %v1809
      %v1818 = vmul.f32 %v1816, %v1804
      %v1819 = vmul.f32 %v1817, %v1809
      %v1820 = vadd.f32 %v1804, %v1818
      %v1821 = vadd.f32 %v1809, %v1819
      %v1822 = vmul.f32 %v1820, 0.7978846
      %v1823 = vmul.f32 %v1821, 0.7978846
      %v1824 = vtanh.pop %v1822
      %v1825 = vtanh.pop %v1823
      %v1826 = vadd.f32 %v1824, 1.0
      %v1827 = vadd.f32 %v1825, 1.0
      %v1828 = vmul.f32 %v1812, %v1826
      %v1829 = vmul.f32 %v1813, %v1827
      %v1830 = vlaneseq
      %v1831 = vshrl.u32 %v1830, 7
      %v1832 = vsub.s32 0, %v1831
      %v1833 = vrot.slane %v307, %v1832
      %vm1834 = vcmask 523264
      %v1836 = vsel %vm1834, %v1828, 0
      %v1839 = vsel %vm1834, %v1829, 0
      %1841 = vmatprep.subr.mxu0 0.0
      %1842 = vmatpush1.msra.mxu0 %v330
      %1843 = vmatprep.subr.mxu0 0.0
      %1844 = vmatpush1.msra.mxu0 %v331
      %1845 = vmatprep.subr.mxu0 0.0
      %1846 = vmatpush1.msra.mxu0 %v332
      %1847 = vmatprep.subr.mxu0 0.0
      %1848 = vmatpush1.msra.mxu0 %v333
      %1849 = vmatprep.subr.mxu0 0.0
      %1850 = vmatpush1.msra.mxu0 %v334
      %1851 = vmatprep.subr.mxu0 0.0
      %1852 = vmatpush1.msra.mxu0 %v335
      %1853 = vmatprep.subr.mxu0 0.0
      %1854 = vmatpush1.msra.mxu0 %v336
      %1855 = vmatprep.subr.mxu0 0.0
      %1856 = vmatpush1.msra.mxu0 %v337
      %1857 = vmatprep.subr.mxu0 0.0
      %1858 = vmatpush1.msra.mxu0 0.0
      %1859 = vmatprep.subr.mxu0 0.0
      %1860 = vmatpush1.msra.mxu0 0.0
      %1861 = vmatprep.subr.mxu0 0.0
      %1862 = vmatpush1.msra.mxu0 0.0
      %1863 = vmatprep.subr.mxu0 0.0
      %1864 = vmatpush1.msra.mxu0 0.0
      %1865 = vmatprep.subr.mxu0 0.0
      %1866 = vmatpush1.msra.mxu0 0.0
      %1867 = vmatprep.subr.mxu0 0.0
      %1868 = vmatpush1.msra.mxu0 0.0
      %1869 = vmatprep.subr.mxu0 0.0
      %1870 = vmatpush1.msra.mxu0 0.0
      %1871 = vmatprep.subr.mxu0 0.0
      %1872 = vmatpush1.msra.mxu0 0.0
      %1873 = vmatprep.subr.mxu0 0.0
      %1874 = vmatpush1.msra.mxu0 0.0
      %1875 = vmatprep.subr.mxu0 0.0
      %1876 = vmatpush1.msra.mxu0 0.0
      %1877 = vmatprep.subr.mxu0 0.0
      %1878 = vmatpush1.msra.mxu0 0.0
      %1879 = vmatprep.subr.mxu0 0.0
      %1880 = vmatpush1.msra.mxu0 0.0
      %1881 = vmatprep.subr.mxu0 0.0
      %1882 = vmatpush1.msra.mxu0 0.0
      %1883 = vmatprep.subr.mxu0 0.0
      %1884 = vmatpush1.msra.mxu0 0.0
      %1885 = vmatprep.subr.mxu0 0.0
      %1886 = vmatpush1.msra.mxu0 0.0
      %1887 = vmatprep.subr.mxu0 0.0
      %1888 = vmatpush1.msra.mxu0 0.0
      %1889 = vmatprep.subr.mxu0 0.0
      %1890 = vmatpush1.msra.mxu0 0.0
      %1891 = vmatprep.subr.mxu0 0.0
      %1892 = vmatpush1.msra.mxu0 0.0
      %1893 = vmatprep.subr.mxu0 0.0
      %1894 = vmatpush1.msra.mxu0 0.0
      %1895 = vmatprep.subr.mxu0 0.0
      %1896 = vmatpush1.msra.mxu0 0.0
      %1897 = vmatprep.subr.mxu0 0.0
      %1898 = vmatpush1.msra.mxu0 0.0
      %1899 = vmatprep.subr.mxu0 0.0
      %1900 = vmatpush1.msra.mxu0 0.0
      %1901 = vmatprep.subr.mxu0 0.0
      %1902 = vmatpush1.msra.mxu0 0.0
      %1903 = vmatprep.subr.mxu0 0.0
      %1904 = vmatpush1.msra.mxu0 0.0
      %1905 = vmatprep.mubr.f32.mxu0 0.0
      %1906 = vmatmul.mubr.f32.gmra.mrb[0].mxu0 %v1836
      %v1907 = vpop.f32.mrb[0].mxu0
      %v1908 = vadd.f32 %v1833, %v1907
      %v1909 = vpop.f32.mrb[0].mxu0
      %1910 = vmatprep.mubr.f32.mxu0 0.0
      %1911 = vmatmul.mubr.f32.gmra.mrb[0].mxu0 %v1839
      %v1912 = vpop.f32.mrb[0].mxu0
      %v1913 = vadd.f32 %v1833, %v1912
      %v1914 = vpop.f32.mrb[0].mxu0
      %1915 = vdwg.mxu0
      %v1916 = vadd.f32 %v1908, %v1725
      %v1917 = vadd.f32 %v1913, %v1726
      %v1918 = vsel %vm471, %v1916, 0.0
      %1919 = vadd.xlane.f32.xlu0 %v1918
      %v1920 = vpop.xlane.xlu0 %1919
      %v1921 = vsel %vm471, %v1917, 0.0
      %1922 = vadd.xlane.f32.xlu0 %v1921
      %v1923 = vpop.xlane.xlu0 %1922
      %v1924 = vmul.f32 %v1920, %v1694
      %v1925 = vmul.f32 %v1923, %v1694
      %v1926 = vsub.f32 %v1916, %v1924
      %v1927 = vsub.f32 %v1917, %v1925
      %v1928 = vmul.f32 %v1926, %v1926
      %v1929 = vmul.f32 %v1927, %v1927
      %v1930 = vsel %vm471, %v1928, 0.0
      %1931 = vadd.xlane.f32.xlu0 %v1930
      %v1932 = vpop.xlane.xlu0 %1931
      %v1933 = vsel %vm471, %v1929, 0.0
      %1934 = vadd.xlane.f32.xlu0 %v1933
      %v1935 = vpop.xlane.xlu0 %1934
      %v1936 = vmul.f32 %v1932, %v1694
      %v1937 = vmul.f32 %v1935, %v1694
      %v1938 = vadd.f32 %v1936, 1e-12
      %v1939 = vadd.f32 %v1937, 1e-12
      %v1940 = vrsqrt.pop %v1938
      %v1941 = vrsqrt.pop %v1939
      %v1942 = vmul.f32 %v1926, %v1940
      %v1943 = vmul.f32 %v1927, %v1941
      %v1944 = vlaneseq
      %v1945 = vshrl.u32 %v1944, 7
      %v1946 = vsub.s32 1, %v1945
      %v1947 = vrot.slane %v307, %v1946
      %v1948 = vmul.f32 %v1942, %v1947
      %v1949 = vmul.f32 %v1943, %v1947
      %v1950 = vlaneseq
      %v1951 = vshrl.u32 %v1950, 7
      %v1952 = vsub.s32 2, %v1951
      %v1953 = vrot.slane %v307, %v1952
      %v1954 = vadd.f32 %v1948, %v1953
      %v1955 = vadd.f32 %v1949, %v1953
      %v1957 = vsel %vm471, %v1954, 0
      %v1960 = vsel %vm471, %v1955, 0
      %1962 = vmatprep.subr.mxu0 0.0
      %1963 = vmatpush1.msra.mxu0 %v318
      %1964 = vmatprep.subr.mxu0 0.0
      %1965 = vmatpush1.msra.mxu0 %v319
      %1966 = vmatprep.subr.mxu0 0.0
      %1967 = vmatpush1.msra.mxu0 %v320
      %1968 = vmatprep.subr.mxu0 0.0
      %1969 = vmatpush1.msra.mxu0 %v321
      %1970 = vmatprep.subr.mxu0 0.0
      %1971 = vmatpush1.msra.mxu0 0.0
      %1972 = vmatprep.subr.mxu0 0.0
      %1973 = vmatpush1.msra.mxu0 0.0
      %1974 = vmatprep.subr.mxu0 0.0
      %1975 = vmatpush1.msra.mxu0 0.0
      %1976 = vmatprep.subr.mxu0 0.0
      %1977 = vmatpush1.msra.mxu0 0.0
      %1978 = vmatprep.subr.mxu0 0.0
      %1979 = vmatpush1.msra.mxu0 0.0
      %1980 = vmatprep.subr.mxu0 0.0
      %1981 = vmatpush1.msra.mxu0 0.0
      %1982 = vmatprep.subr.mxu0 0.0
      %1983 = vmatpush1.msra.mxu0 0.0
      %1984 = vmatprep.subr.mxu0 0.0
      %1985 = vmatpush1.msra.mxu0 0.0
      %1986 = vmatprep.subr.mxu0 0.0
      %1987 = vmatpush1.msra.mxu0 0.0
      %1988 = vmatprep.subr.mxu0 0.0
      %1989 = vmatpush1.msra.mxu0 0.0
      %1990 = vmatprep.subr.mxu0 0.0
      %1991 = vmatpush1.msra.mxu0 0.0
      %1992 = vmatprep.subr.mxu0 0.0
      %1993 = vmatpush1.msra.mxu0 0.0
      %1994 = vmatprep.subr.mxu0 0.0
      %1995 = vmatpush1.msra.mxu0 0.0
      %1996 = vmatprep.subr.mxu0 0.0
      %1997 = vmatpush1.msra.mxu0 0.0
      %1998 = vmatprep.subr.mxu0 0.0
      %1999 = vmatpush1.msra.mxu0 0.0
      %2000 = vmatprep.subr.mxu0 0.0
      %2001 = vmatpush1.msra.mxu0 0.0
      %2002 = vmatprep.subr.mxu0 0.0
      %2003 = vmatpush1.msra.mxu0 0.0
      %2004 = vmatprep.subr.mxu0 0.0
      %2005 = vmatpush1.msra.mxu0 0.0
      %2006 = vmatprep.subr.mxu0 0.0
      %2007 = vmatpush1.msra.mxu0 0.0
      %2008 = vmatprep.subr.mxu0 0.0
      %2009 = vmatpush1.msra.mxu0 0.0
      %2010 = vmatprep.subr.mxu0 0.0
      %2011 = vmatpush1.msra.mxu0 0.0
      %2012 = vmatprep.subr.mxu0 0.0
      %2013 = vmatpush1.msra.mxu0 0.0
      %2014 = vmatprep.subr.mxu0 0.0
      %2015 = vmatpush1.msra.mxu0 0.0
      %2016 = vmatprep.subr.mxu0 0.0
      %2017 = vmatpush1.msra.mxu0 0.0
      %2018 = vmatprep.subr.mxu0 0.0
      %2019 = vmatpush1.msra.mxu0 0.0
      %2020 = vmatprep.subr.mxu0 0.0
      %2021 = vmatpush1.msra.mxu0 0.0
      %2022 = vmatprep.subr.mxu0 0.0
      %2023 = vmatpush1.msra.mxu0 0.0
      %2024 = vmatprep.subr.mxu0 0.0
      %2025 = vmatpush1.msra.mxu0 0.0
      %2026 = vmatprep.mubr.f32.mxu0 0.0
      %2027 = vmatmul.mubr.f32.gmra.mrb[0].mxu0 %v1957
      %v2028 = vpop.f32.mrb[0].mxu0
      %v2029 = vadd.f32 %v470, %v2028
      %v2030 = vpop.f32.mrb[0].mxu0
      %2031 = vmatprep.mubr.f32.mxu0 0.0
      %2032 = vmatmul.mubr.f32.gmra.mrb[0].mxu0 %v1960
      %v2033 = vpop.f32.mrb[0].mxu0
      %v2034 = vadd.f32 %v470, %v2033
      %v2035 = vpop.f32.mrb[0].mxu0
      %2036 = vdwg.mxu0
      %2039 = vrot.lane.b32.xlu0 %v2029, 96
      %v2040 = vpop.permute.xlu0 %2039
      %2041 = vrot.lane.b32.xlu0 %v2034, 96
      %v2042 = vpop.permute.xlu0 %2041
      %v2043 = vsel %vm559, %v2029, 0
      %v2045 = vsel %vm559, %v2034, 0
      %v2047 = vsel %vm559, %v2040, 0
      %v2049 = vsel %vm559, %v2042, 0
      %2051 = vmatprep.subr.mxu0 0.0
      %2052 = vmatpush1.xpose.msra.mxu0 %v2047
      %2053 = vmatprep.subr.mxu0 0.0
      %2054 = vmatpush1.xpose.msra.mxu0 %v2049
      %2055 = vmatprep.subr.mxu0 0.0
      %2056 = vmatpush1.xpose.msra.mxu0 0.0
      %2057 = vmatprep.subr.mxu0 0.0
      %2058 = vmatpush1.xpose.msra.mxu0 0.0
      %2059 = vmatprep.subr.mxu0 0.0
      %2060 = vmatpush1.xpose.msra.mxu0 0.0
      %2061 = vmatprep.subr.mxu0 0.0
      %2062 = vmatpush1.xpose.msra.mxu0 0.0
      %2063 = vmatprep.subr.mxu0 0.0
      %2064 = vmatpush1.xpose.msra.mxu0 0.0
      %2065 = vmatprep.subr.mxu0 0.0
      %2066 = vmatpush1.xpose.msra.mxu0 0.0
      %2067 = vmatprep.subr.mxu0 0.0
      %2068 = vmatpush1.xpose.msra.mxu0 0.0
      %2069 = vmatprep.subr.mxu0 0.0
      %2070 = vmatpush1.xpose.msra.mxu0 0.0
      %2071 = vmatprep.subr.mxu0 0.0
      %2072 = vmatpush1.xpose.msra.mxu0 0.0
      %2073 = vmatprep.subr.mxu0 0.0
      %2074 = vmatpush1.xpose.msra.mxu0 0.0
      %2075 = vmatprep.subr.mxu0 0.0
      %2076 = vmatpush1.xpose.msra.mxu0 0.0
      %2077 = vmatprep.subr.mxu0 0.0
      %2078 = vmatpush1.xpose.msra.mxu0 0.0
      %2079 = vmatprep.subr.mxu0 0.0
      %2080 = vmatpush1.xpose.msra.mxu0 0.0
      %2081 = vmatprep.subr.mxu0 0.0
      %2082 = vmatpush1.xpose.msra.mxu0 0.0
      %2083 = vmatprep.subr.mxu0 0.0
      %2084 = vmatpush1.xpose.msra.mxu0 0.0
      %2085 = vmatprep.subr.mxu0 0.0
      %2086 = vmatpush1.xpose.msra.mxu0 0.0
      %2087 = vmatprep.subr.mxu0 0.0
      %2088 = vmatpush1.xpose.msra.mxu0 0.0
      %2089 = vmatprep.subr.mxu0 0.0
      %2090 = vmatpush1.xpose.msra.mxu0 0.0
      %2091 = vmatprep.subr.mxu0 0.0
      %2092 = vmatpush1.xpose.msra.mxu0 0.0
      %2093 = vmatprep.subr.mxu0 0.0
      %2094 = vmatpush1.xpose.msra.mxu0 0.0
      %2095 = vmatprep.subr.mxu0 0.0
      %2096 = vmatpush1.xpose.msra.mxu0 0.0
      %2097 = vmatprep.subr.mxu0 0.0
      %2098 = vmatpush1.xpose.msra.mxu0 0.0
      %2099 = vmatprep.subr.mxu0 0.0
      %2100 = vmatpush1.xpose.msra.mxu0 0.0
      %2101 = vmatprep.subr.mxu0 0.0
      %2102 = vmatpush1.xpose.msra.mxu0 0.0
      %2103 = vmatprep.subr.mxu0 0.0
      %2104 = vmatpush1.xpose.msra.mxu0 0.0
      %2105 = vmatprep.subr.mxu0 0.0
      %2106 = vmatpush1.xpose.msra.mxu0 0.0
      %2107 = vmatprep.subr.mxu0 0.0
      %2108 = vmatpush1.xpose.msra.mxu0 0.0
      %2109 = vmatprep.subr.mxu0 0.0
      %2110 = vmatpush1.xpose.msra.mxu0 0.0
      %2111 = vmatprep.subr.mxu0 0.0
      %2112 = vmatpush1.xpose.msra.mxu0 0.0
      %2113 = vmatprep.subr.mxu0 0.0
      %2114 = vmatpush1.xpose.msra.mxu0 0.0
      %2115 = vmatprep.mubr.f32.mxu0 0.0
      %2116 = vmatmul.mubr.f32.gmra.mrb[0].mxu0 %v2043
      %v2117 = vpop.f32.mrb[0].mxu0
      %v2118 = vadd.f32 %v338, %v2117
      %v2119 = vpop.f32.mrb[0].mxu0
      %2120 = vmatprep.mubr.f32.mxu0 0.0
      %2121 = vmatmul.mubr.f32.gmra.mrb[0].mxu0 %v2045
      %v2122 = vpop.f32.mrb[0].mxu0
      %v2123 = vadd.f32 %v339, %v2122
      %v2124 = vpop.f32.mrb[0].mxu0
      %2125 = vdwg.mxu0
      %v2126 = vsel %vm342, %v2118, -inf
      %2127 = vmax.xlane.f32.xlu0 %v2126
      %v2128 = vpop.xlane.xlu0 %2127
      %v2129 = vsel %vm342, %v2123, -inf
      %2130 = vmax.xlane.f32.xlu0 %v2129
      %v2131 = vpop.xlane.xlu0 %2130
      %v2132 = vsub.f32 %v2118, %v2128
      %v2133 = vsub.f32 %v2123, %v2131
      %v2134 = vmul.f32 %v2132, 1.442695
      %v2135 = vpow.pop %v2134
      %v2136 = vmul.f32 %v2133, 1.442695
      %v2137 = vpow.pop %v2136
      %v2138 = vsel %vm342, %v2135, 0.0
      %2139 = vadd.xlane.f32.xlu0 %v2138
      %v2140 = vpop.xlane.xlu0 %2139
      %v2141 = vsel %vm342, %v2137, 0.0
      %2142 = vadd.xlane.f32.xlu0 %v2141
      %v2143 = vpop.xlane.xlu0 %2142
      %v2144 = vrcp.pop %v2140
      %v2145 = vrcp.pop %v2143
      %v2146 = vmul.f32 %v2135, %v2144
      %v2147 = vmul.f32 %v2137, %v2145
      %2148 = vrot.lane.b32.xlu0 %v2029, 64
      %v2149 = vpop.permute.xlu0 %2148
      %2150 = vrot.lane.b32.xlu0 %v2034, 64
      %v2151 = vpop.permute.xlu0 %2150
      %v2155 = vsel %vm342, %v2146, 0
      %v2158 = vsel %vm342, %v2147, 0
      %2160 = vmatprep.subr.mxu0 0.0
      %2161 = vmatpush1.msra.mxu0 %v2149
      %2162 = vmatprep.subr.mxu0 0.0
      %2163 = vmatpush1.msra.mxu0 %v2151
      %2164 = vmatprep.subr.mxu0 0.0
      %2165 = vmatpush1.msra.mxu0 0.0
      %2166 = vmatprep.subr.mxu0 0.0
      %2167 = vmatpush1.msra.mxu0 0.0
      %2168 = vmatprep.subr.mxu0 0.0
      %2169 = vmatpush1.msra.mxu0 0.0
      %2170 = vmatprep.subr.mxu0 0.0
      %2171 = vmatpush1.msra.mxu0 0.0
      %2172 = vmatprep.subr.mxu0 0.0
      %2173 = vmatpush1.msra.mxu0 0.0
      %2174 = vmatprep.subr.mxu0 0.0
      %2175 = vmatpush1.msra.mxu0 0.0
      %2176 = vmatprep.subr.mxu0 0.0
      %2177 = vmatpush1.msra.mxu0 0.0
      %2178 = vmatprep.subr.mxu0 0.0
      %2179 = vmatpush1.msra.mxu0 0.0
      %2180 = vmatprep.subr.mxu0 0.0
      %2181 = vmatpush1.msra.mxu0 0.0
      %2182 = vmatprep.subr.mxu0 0.0
      %2183 = vmatpush1.msra.mxu0 0.0
      %2184 = vmatprep.subr.mxu0 0.0
      %2185 = vmatpush1.msra.mxu0 0.0
      %2186 = vmatprep.subr.mxu0 0.0
      %2187 = vmatpush1.msra.mxu0 0.0
      %2188 = vmatprep.subr.mxu0 0.0
      %2189 = vmatpush1.msra.mxu0 0.0
      %2190 = vmatprep.subr.mxu0 0.0
      %2191 = vmatpush1.msra.mxu0 0.0
      %2192 = vmatprep.subr.mxu0 0.0
      %2193 = vmatpush1.msra.mxu0 0.0
      %2194 = vmatprep.subr.mxu0 0.0
      %2195 = vmatpush1.msra.mxu0 0.0
      %2196 = vmatprep.subr.mxu0 0.0
      %2197 = vmatpush1.msra.mxu0 0.0
      %2198 = vmatprep.subr.mxu0 0.0
      %2199 = vmatpush1.msra.mxu0 0.0
      %2200 = vmatprep.subr.mxu0 0.0
      %2201 = vmatpush1.msra.mxu0 0.0
      %2202 = vmatprep.subr.mxu0 0.0
      %2203 = vmatpush1.msra.mxu0 0.0
      %2204 = vmatprep.subr.mxu0 0.0
      %2205 = vmatpush1.msra.mxu0 0.0
      %2206 = vmatprep.subr.mxu0 0.0
      %2207 = vmatpush1.msra.mxu0 0.0
      %2208 = vmatprep.subr.mxu0 0.0
      %2209 = vmatpush1.msra.mxu0 0.0
      %2210 = vmatprep.subr.mxu0 0.0
      %2211 = vmatpush1.msra.mxu0 0.0
      %2212 = vmatprep.subr.mxu0 0.0
      %2213 = vmatpush1.msra.mxu0 0.0
      %2214 = vmatprep.subr.mxu0 0.0
      %2215 = vmatpush1.msra.mxu0 0.0
      %2216 = vmatprep.subr.mxu0 0.0
      %2217 = vmatpush1.msra.mxu0 0.0
      %2218 = vmatprep.subr.mxu0 0.0
      %2219 = vmatpush1.msra.mxu0 0.0
      %2220 = vmatprep.subr.mxu0 0.0
      %2221 = vmatpush1.msra.mxu0 0.0
      %2222 = vmatprep.subr.mxu0 0.0
      %2223 = vmatpush1.msra.mxu0 0.0
      %2224 = vmatprep.mubr.f32.mxu0 0.0
      %2225 = vmatmul.mubr.f32.gmra.mrb[0].mxu0 %v2155
      %v2226 = vpop.f32.mrb[0].mxu0
      %v2227 = vadd.f32 0.0, %v2226
      %v2228 = vpop.f32.mrb[0].mxu0
      %2229 = vmatprep.mubr.f32.mxu0 0.0
      %2230 = vmatmul.mubr.f32.gmra.mrb[0].mxu0 %v2158
      %v2231 = vpop.f32.mrb[0].mxu0
      %v2232 = vadd.f32 0.0, %v2231
      %v2233 = vpop.f32.mrb[0].mxu0
      %2234 = vdwg.mxu0
      %2235 = vrot.lane.b32.xlu0 %v2029, 120
      %v2236 = vpop.permute.xlu0 %2235
      %2237 = vrot.lane.b32.xlu0 %v2034, 120
      %v2238 = vpop.permute.xlu0 %2237
      %2239 = vrot.lane.b32.xlu0 %v2029, 88
      %v2240 = vpop.permute.xlu0 %2239
      %2241 = vrot.lane.b32.xlu0 %v2034, 88
      %v2242 = vpop.permute.xlu0 %2241
      %v2243 = vsel %vm559, %v2236, 0
      %v2245 = vsel %vm559, %v2238, 0
      %v2247 = vsel %vm559, %v2240, 0
      %v2249 = vsel %vm559, %v2242, 0
      %2251 = vmatprep.subr.mxu0 0.0
      %2252 = vmatpush1.xpose.msra.mxu0 %v2247
      %2253 = vmatprep.subr.mxu0 0.0
      %2254 = vmatpush1.xpose.msra.mxu0 %v2249
      %2255 = vmatprep.subr.mxu0 0.0
      %2256 = vmatpush1.xpose.msra.mxu0 0.0
      %2257 = vmatprep.subr.mxu0 0.0
      %2258 = vmatpush1.xpose.msra.mxu0 0.0
      %2259 = vmatprep.subr.mxu0 0.0
      %2260 = vmatpush1.xpose.msra.mxu0 0.0
      %2261 = vmatprep.subr.mxu0 0.0
      %2262 = vmatpush1.xpose.msra.mxu0 0.0
      %2263 = vmatprep.subr.mxu0 0.0
      %2264 = vmatpush1.xpose.msra.mxu0 0.0
      %2265 = vmatprep.subr.mxu0 0.0
      %2266 = vmatpush1.xpose.msra.mxu0 0.0
      %2267 = vmatprep.subr.mxu0 0.0
      %2268 = vmatpush1.xpose.msra.mxu0 0.0
      %2269 = vmatprep.subr.mxu0 0.0
      %2270 = vmatpush1.xpose.msra.mxu0 0.0
      %2271 = vmatprep.subr.mxu0 0.0
      %2272 = vmatpush1.xpose.msra.mxu0 0.0
      %2273 = vmatprep.subr.mxu0 0.0
      %2274 = vmatpush1.xpose.msra.mxu0 0.0
      %2275 = vmatprep.subr.mxu0 0.0
      %2276 = vmatpush1.xpose.msra.mxu0 0.0
      %2277 = vmatprep.subr.mxu0 0.0
      %2278 = vmatpush1.xpose.msra.mxu0 0.0
      %2279 = vmatprep.subr.mxu0 0.0
      %2280 = vmatpush1.xpose.msra.mxu0 0.0
      %2281 = vmatprep.subr.mxu0 0.0
      %2282 = vmatpush1.xpose.msra.mxu0 0.0
      %2283 = vmatprep.subr.mxu0 0.0
      %2284 = vmatpush1.xpose.msra.mxu0 0.0
      %2285 = vmatprep.subr.mxu0 0.0
      %2286 = vmatpush1.xpose.msra.mxu0 0.0
      %2287 = vmatprep.subr.mxu0 0.0
      %2288 = vmatpush1.xpose.msra.mxu0 0.0
      %2289 = vmatprep.subr.mxu0 0.0
      %2290 = vmatpush1.xpose.msra.mxu0 0.0
      %2291 = vmatprep.subr.mxu0 0.0
      %2292 = vmatpush1.xpose.msra.mxu0 0.0
      %2293 = vmatprep.subr.mxu0 0.0
      %2294 = vmatpush1.xpose.msra.mxu0 0.0
      %2295 = vmatprep.subr.mxu0 0.0
      %2296 = vmatpush1.xpose.msra.mxu0 0.0
      %2297 = vmatprep.subr.mxu0 0.0
      %2298 = vmatpush1.xpose.msra.mxu0 0.0
      %2299 = vmatprep.subr.mxu0 0.0
      %2300 = vmatpush1.xpose.msra.mxu0 0.0
      %2301 = vmatprep.subr.mxu0 0.0
      %2302 = vmatpush1.xpose.msra.mxu0 0.0
      %2303 = vmatprep.subr.mxu0 0.0
      %2304 = vmatpush1.xpose.msra.mxu0 0.0
      %2305 = vmatprep.subr.mxu0 0.0
      %2306 = vmatpush1.xpose.msra.mxu0 0.0
      %2307 = vmatprep.subr.mxu0 0.0
      %2308 = vmatpush1.xpose.msra.mxu0 0.0
      %2309 = vmatprep.subr.mxu0 0.0
      %2310 = vmatpush1.xpose.msra.mxu0 0.0
      %2311 = vmatprep.subr.mxu0 0.0
      %2312 = vmatpush1.xpose.msra.mxu0 0.0
      %2313 = vmatprep.subr.mxu0 0.0
      %2314 = vmatpush1.xpose.msra.mxu0 0.0
      %2315 = vmatprep.mubr.f32.mxu0 0.0
      %2316 = vmatmul.mubr.f32.gmra.mrb[0].mxu0 %v2243
      %v2317 = vpop.f32.mrb[0].mxu0
      %v2318 = vadd.f32 %v338, %v2317
      %v2319 = vpop.f32.mrb[0].mxu0
      %2320 = vmatprep.mubr.f32.mxu0 0.0
      %2321 = vmatmul.mubr.f32.gmra.mrb[0].mxu0 %v2245
      %v2322 = vpop.f32.mrb[0].mxu0
      %v2323 = vadd.f32 %v339, %v2322
      %v2324 = vpop.f32.mrb[0].mxu0
      %2325 = vdwg.mxu0
      %v2326 = vsel %vm342, %v2318, -inf
      %2327 = vmax.xlane.f32.xlu0 %v2326
      %v2328 = vpop.xlane.xlu0 %2327
      %v2329 = vsel %vm342, %v2323, -inf
      %2330 = vmax.xlane.f32.xlu0 %v2329
      %v2331 = vpop.xlane.xlu0 %2330
      %v2332 = vsub.f32 %v2318, %v2328
      %v2333 = vsub.f32 %v2323, %v2331
      %v2334 = vmul.f32 %v2332, 1.442695
      %v2335 = vpow.pop %v2334
      %v2336 = vmul.f32 %v2333, 1.442695
      %v2337 = vpow.pop %v2336
      %v2338 = vsel %vm342, %v2335, 0.0
      %2339 = vadd.xlane.f32.xlu0 %v2338
      %v2340 = vpop.xlane.xlu0 %2339
      %v2341 = vsel %vm342, %v2337, 0.0
      %2342 = vadd.xlane.f32.xlu0 %v2341
      %v2343 = vpop.xlane.xlu0 %2342
      %v2344 = vrcp.pop %v2340
      %v2345 = vrcp.pop %v2343
      %v2346 = vmul.f32 %v2335, %v2344
      %v2347 = vmul.f32 %v2337, %v2345
      %2348 = vrot.lane.b32.xlu0 %v2029, 56
      %v2349 = vpop.permute.xlu0 %2348
      %2350 = vrot.lane.b32.xlu0 %v2034, 56
      %v2351 = vpop.permute.xlu0 %2350
      %v2355 = vsel %vm342, %v2346, 0
      %v2358 = vsel %vm342, %v2347, 0
      %2360 = vmatprep.subr.mxu0 0.0
      %2361 = vmatpush1.msra.mxu0 %v2349
      %2362 = vmatprep.subr.mxu0 0.0
      %2363 = vmatpush1.msra.mxu0 %v2351
      %2364 = vmatprep.subr.mxu0 0.0
      %2365 = vmatpush1.msra.mxu0 0.0
      %2366 = vmatprep.subr.mxu0 0.0
      %2367 = vmatpush1.msra.mxu0 0.0
      %2368 = vmatprep.subr.mxu0 0.0
      %2369 = vmatpush1.msra.mxu0 0.0
      %2370 = vmatprep.subr.mxu0 0.0
      %2371 = vmatpush1.msra.mxu0 0.0
      %2372 = vmatprep.subr.mxu0 0.0
      %2373 = vmatpush1.msra.mxu0 0.0
      %2374 = vmatprep.subr.mxu0 0.0
      %2375 = vmatpush1.msra.mxu0 0.0
      %2376 = vmatprep.subr.mxu0 0.0
      %2377 = vmatpush1.msra.mxu0 0.0
      %2378 = vmatprep.subr.mxu0 0.0
      %2379 = vmatpush1.msra.mxu0 0.0
      %2380 = vmatprep.subr.mxu0 0.0
      %2381 = vmatpush1.msra.mxu0 0.0
      %2382 = vmatprep.subr.mxu0 0.0
      %2383 = vmatpush1.msra.mxu0 0.0
      %2384 = vmatprep.subr.mxu0 0.0
      %2385 = vmatpush1.msra.mxu0 0.0
      %2386 = vmatprep.subr.mxu0 0.0
      %2387 = vmatpush1.msra.mxu0 0.0
      %2388 = vmatprep.subr.mxu0 0.0
      %2389 = vmatpush1.msra.mxu0 0.0
      %2390 = vmatprep.subr.mxu0 0.0
      %2391 = vmatpush1.msra.mxu0 0.0
      %2392 = vmatprep.subr.mxu0 0.0
      %2393 = vmatpush1.msra.mxu0 0.0
      %2394 = vmatprep.subr.mxu0 0.0
      %2395 = vmatpush1.msra.mxu0 0.0
      %2396 = vmatprep.subr.mxu0 0.0
      %2397 = vmatpush1.msra.mxu0 0.0
      %2398 = vmatprep.subr.mxu0 0.0
      %2399 = vmatpush1.msra.mxu0 0.0
      %2400 = vmatprep.subr.mxu0 0.0
      %2401 = vmatpush1.msra.mxu0 0.0
      %2402 = vmatprep.subr.mxu0 0.0
      %2403 = vmatpush1.msra.mxu0 0.0
      %2404 = vmatprep.subr.mxu0 0.0
      %2405 = vmatpush1.msra.mxu0 0.0
      %2406 = vmatprep.subr.mxu0 0.0
      %2407 = vmatpush1.msra.mxu0 0.0
      %2408 = vmatprep.subr.mxu0 0.0
      %2409 = vmatpush1.msra.mxu0 0.0
      %2410 = vmatprep.subr.mxu0 0.0
      %2411 = vmatpush1.msra.mxu0 0.0
      %2412 = vmatprep.subr.mxu0 0.0
      %2413 = vmatpush1.msra.mxu0 0.0
      %2414 = vmatprep.subr.mxu0 0.0
      %2415 = vmatpush1.msra.mxu0 0.0
      %2416 = vmatprep.subr.mxu0 0.0
      %2417 = vmatpush1.msra.mxu0 0.0
      %2418 = vmatprep.subr.mxu0 0.0
      %2419 = vmatpush1.msra.mxu0 0.0
      %2420 = vmatprep.subr.mxu0 0.0
      %2421 = vmatpush1.msra.mxu0 0.0
      %2422 = vmatprep.subr.mxu0 0.0
      %2423 = vmatpush1.msra.mxu0 0.0
      %2424 = vmatprep.mubr.f32.mxu0 0.0
      %2425 = vmatmul.mubr.f32.gmra.mrb[0].mxu0 %v2355
      %v2426 = vpop.f32.mrb[0].mxu0
      %v2427 = vadd.f32 0.0, %v2426
      %v2428 = vpop.f32.mrb[0].mxu0
      %2429 = vmatprep.mubr.f32.mxu0 0.0
      %2430 = vmatmul.mubr.f32.gmra.mrb[0].mxu0 %v2358
      %v2431 = vpop.f32.mrb[0].mxu0
      %v2432 = vadd.f32 0.0, %v2431
      %v2433 = vpop.f32.mrb[0].mxu0
      %2434 = vdwg.mxu0
      %v2436 = vsel %vm559, %v2427, 0
      %v2439 = vsel %vm559, %v2432, 0
      %2441 = vmatprep.subr.mxu0 0.0
      %2442 = vmatpush1.msra.mxu0 %v323
      %2443 = vmatprep.subr.mxu0 0.0
      %2444 = vmatpush1.msra.mxu0 0.0
      %2445 = vmatprep.subr.mxu0 0.0
      %2446 = vmatpush1.msra.mxu0 0.0
      %2447 = vmatprep.subr.mxu0 0.0
      %2448 = vmatpush1.msra.mxu0 0.0
      %2449 = vmatprep.subr.mxu0 0.0
      %2450 = vmatpush1.msra.mxu0 0.0
      %2451 = vmatprep.subr.mxu0 0.0
      %2452 = vmatpush1.msra.mxu0 0.0
      %2453 = vmatprep.subr.mxu0 0.0
      %2454 = vmatpush1.msra.mxu0 0.0
      %2455 = vmatprep.subr.mxu0 0.0
      %2456 = vmatpush1.msra.mxu0 0.0
      %2457 = vmatprep.subr.mxu0 0.0
      %2458 = vmatpush1.msra.mxu0 0.0
      %2459 = vmatprep.subr.mxu0 0.0
      %2460 = vmatpush1.msra.mxu0 0.0
      %2461 = vmatprep.subr.mxu0 0.0
      %2462 = vmatpush1.msra.mxu0 0.0
      %2463 = vmatprep.subr.mxu0 0.0
      %2464 = vmatpush1.msra.mxu0 0.0
      %2465 = vmatprep.subr.mxu0 0.0
      %2466 = vmatpush1.msra.mxu0 0.0
      %2467 = vmatprep.subr.mxu0 0.0
      %2468 = vmatpush1.msra.mxu0 0.0
      %2469 = vmatprep.subr.mxu0 0.0
      %2470 = vmatpush1.msra.mxu0 0.0
      %2471 = vmatprep.subr.mxu0 0.0
      %2472 = vmatpush1.msra.mxu0 0.0
      %2473 = vmatprep.subr.mxu0 0.0
      %2474 = vmatpush1.msra.mxu0 0.0
      %2475 = vmatprep.subr.mxu0 0.0
      %2476 = vmatpush1.msra.mxu0 0.0
      %2477 = vmatprep.subr.mxu0 0.0
      %2478 = vmatpush1.msra.mxu0 0.0
      %2479 = vmatprep.subr.mxu0 0.0
      %2480 = vmatpush1.msra.mxu0 0.0
      %2481 = vmatprep.subr.mxu0 0.0
      %2482 = vmatpush1.msra.mxu0 0.0
      %2483 = vmatprep.subr.mxu0 0.0
      %2484 = vmatpush1.msra.mxu0 0.0
      %2485 = vmatprep.subr.mxu0 0.0
      %2486 = vmatpush1.msra.mxu0 0.0
      %2487 = vmatprep.subr.mxu0 0.0
      %2488 = vmatpush1.msra.mxu0 0.0
      %2489 = vmatprep.subr.mxu0 0.0
      %2490 = vmatpush1.msra.mxu0 0.0
      %2491 = vmatprep.subr.mxu0 0.0
      %2492 = vmatpush1.msra.mxu0 0.0
      %2493 = vmatprep.subr.mxu0 0.0
      %2494 = vmatpush1.msra.mxu0 0.0
      %2495 = vmatprep.subr.mxu0 0.0
      %2496 = vmatpush1.msra.mxu0 0.0
      %2497 = vmatprep.subr.mxu0 0.0
      %2498 = vmatpush1.msra.mxu0 0.0
      %2499 = vmatprep.subr.mxu0 0.0
      %2500 = vmatpush1.msra.mxu0 0.0
      %2501 = vmatprep.subr.mxu0 0.0
      %2502 = vmatpush1.msra.mxu0 0.0
      %2503 = vmatprep.subr.mxu0 0.0
      %2504 = vmatpush1.msra.mxu0 0.0
      %2505 = vmatprep.mubr.f32.mxu0 0.0
      %2506 = vmatmul.mubr.f32.gmra.mrb[0].mxu0 %v2436
      %v2507 = vpop.f32.mrb[0].mxu0
      %v2508 = vadd.f32 0.0, %v2507
      %v2509 = vpop.f32.mrb[0].mxu0
      %2510 = vmatprep.mubr.f32.mxu0 0.0
      %2511 = vmatmul.mubr.f32.gmra.mrb[0].mxu0 %v2439
      %v2512 = vpop.f32.mrb[0].mxu0
      %v2513 = vadd.f32 0.0, %v2512
      %v2514 = vpop.f32.mrb[0].mxu0
      %2515 = vdwg.mxu0
      %v2517 = vsel %vm559, %v2227, 0
      %v2520 = vsel %vm559, %v2232, 0
      %2522 = vmatprep.subr.mxu0 0.0
      %2523 = vmatpush1.msra.mxu0 %v322
      %2524 = vmatprep.subr.mxu0 0.0
      %2525 = vmatpush1.msra.mxu0 0.0
      %2526 = vmatprep.subr.mxu0 0.0
      %2527 = vmatpush1.msra.mxu0 0.0
      %2528 = vmatprep.subr.mxu0 0.0
      %2529 = vmatpush1.msra.mxu0 0.0
      %2530 = vmatprep.subr.mxu0 0.0
      %2531 = vmatpush1.msra.mxu0 0.0
      %2532 = vmatprep.subr.mxu0 0.0
      %2533 = vmatpush1.msra.mxu0 0.0
      %2534 = vmatprep.subr.mxu0 0.0
      %2535 = vmatpush1.msra.mxu0 0.0
      %2536 = vmatprep.subr.mxu0 0.0
      %2537 = vmatpush1.msra.mxu0 0.0
      %2538 = vmatprep.subr.mxu0 0.0
      %2539 = vmatpush1.msra.mxu0 0.0
      %2540 = vmatprep.subr.mxu0 0.0
      %2541 = vmatpush1.msra.mxu0 0.0
      %2542 = vmatprep.subr.mxu0 0.0
      %2543 = vmatpush1.msra.mxu0 0.0
      %2544 = vmatprep.subr.mxu0 0.0
      %2545 = vmatpush1.msra.mxu0 0.0
      %2546 = vmatprep.subr.mxu0 0.0
      %2547 = vmatpush1.msra.mxu0 0.0
      %2548 = vmatprep.subr.mxu0 0.0
      %2549 = vmatpush1.msra.mxu0 0.0
      %2550 = vmatprep.subr.mxu0 0.0
      %2551 = vmatpush1.msra.mxu0 0.0
      %2552 = vmatprep.subr.mxu0 0.0
      %2553 = vmatpush1.msra.mxu0 0.0
      %2554 = vmatprep.subr.mxu0 0.0
      %2555 = vmatpush1.msra.mxu0 0.0
      %2556 = vmatprep.subr.mxu0 0.0
      %2557 = vmatpush1.msra.mxu0 0.0
      %2558 = vmatprep.subr.mxu0 0.0
      %2559 = vmatpush1.msra.mxu0 0.0
      %2560 = vmatprep.subr.mxu0 0.0
      %2561 = vmatpush1.msra.mxu0 0.0
      %2562 = vmatprep.subr.mxu0 0.0
      %2563 = vmatpush1.msra.mxu0 0.0
      %2564 = vmatprep.subr.mxu0 0.0
      %2565 = vmatpush1.msra.mxu0 0.0
      %2566 = vmatprep.subr.mxu0 0.0
      %2567 = vmatpush1.msra.mxu0 0.0
      %2568 = vmatprep.subr.mxu0 0.0
      %2569 = vmatpush1.msra.mxu0 0.0
      %2570 = vmatprep.subr.mxu0 0.0
      %2571 = vmatpush1.msra.mxu0 0.0
      %2572 = vmatprep.subr.mxu0 0.0
      %2573 = vmatpush1.msra.mxu0 0.0
      %2574 = vmatprep.subr.mxu0 0.0
      %2575 = vmatpush1.msra.mxu0 0.0
      %2576 = vmatprep.subr.mxu0 0.0
      %2577 = vmatpush1.msra.mxu0 0.0
      %2578 = vmatprep.subr.mxu0 0.0
      %2579 = vmatpush1.msra.mxu0 0.0
      %2580 = vmatprep.subr.mxu0 0.0
      %2581 = vmatpush1.msra.mxu0 0.0
      %2582 = vmatprep.subr.mxu0 0.0
      %2583 = vmatpush1.msra.mxu0 0.0
      %2584 = vmatprep.subr.mxu0 0.0
      %2585 = vmatpush1.msra.mxu0 0.0
      %2586 = vmatprep.mubr.f32.mxu0 0.0
      %2587 = vmatmul.mubr.f32.gmra.mrb[0].mxu0 %v2517
      %v2588 = vpop.f32.mrb[0].mxu0
      %v2589 = vadd.f32 %v2508, %v2588
      %v2590 = vpop.f32.mrb[0].mxu0
      %2591 = vmatprep.mubr.f32.mxu0 0.0
      %2592 = vmatmul.mubr.f32.gmra.mrb[0].mxu0 %v2520
      %v2593 = vpop.f32.mrb[0].mxu0
      %v2594 = vadd.f32 %v2513, %v2593
      %v2595 = vpop.f32.mrb[0].mxu0
      %2596 = vdwg.mxu0
      %2597 = vrot.lane.b32.xlu0 %v2029, 112
      %v2598 = vpop.permute.xlu0 %2597
      %2599 = vrot.lane.b32.xlu0 %v2034, 112
      %v2600 = vpop.permute.xlu0 %2599
      %2601 = vrot.lane.b32.xlu0 %v2029, 80
      %v2602 = vpop.permute.xlu0 %2601
      %2603 = vrot.lane.b32.xlu0 %v2034, 80
      %v2604 = vpop.permute.xlu0 %2603
      %v2605 = vsel %vm559, %v2598, 0
      %v2607 = vsel %vm559, %v2600, 0
      %v2609 = vsel %vm559, %v2602, 0
      %v2611 = vsel %vm559, %v2604, 0
      %2613 = vmatprep.subr.mxu0 0.0
      %2614 = vmatpush1.xpose.msra.mxu0 %v2609
      %2615 = vmatprep.subr.mxu0 0.0
      %2616 = vmatpush1.xpose.msra.mxu0 %v2611
      %2617 = vmatprep.subr.mxu0 0.0
      %2618 = vmatpush1.xpose.msra.mxu0 0.0
      %2619 = vmatprep.subr.mxu0 0.0
      %2620 = vmatpush1.xpose.msra.mxu0 0.0
      %2621 = vmatprep.subr.mxu0 0.0
      %2622 = vmatpush1.xpose.msra.mxu0 0.0
      %2623 = vmatprep.subr.mxu0 0.0
      %2624 = vmatpush1.xpose.msra.mxu0 0.0
      %2625 = vmatprep.subr.mxu0 0.0
      %2626 = vmatpush1.xpose.msra.mxu0 0.0
      %2627 = vmatprep.subr.mxu0 0.0
      %2628 = vmatpush1.xpose.msra.mxu0 0.0
      %2629 = vmatprep.subr.mxu0 0.0
      %2630 = vmatpush1.xpose.msra.mxu0 0.0
      %2631 = vmatprep.subr.mxu0 0.0
      %2632 = vmatpush1.xpose.msra.mxu0 0.0
      %2633 = vmatprep.subr.mxu0 0.0
      %2634 = vmatpush1.xpose.msra.mxu0 0.0
      %2635 = vmatprep.subr.mxu0 0.0
      %2636 = vmatpush1.xpose.msra.mxu0 0.0
      %2637 = vmatprep.subr.mxu0 0.0
      %2638 = vmatpush1.xpose.msra.mxu0 0.0
      %2639 = vmatprep.subr.mxu0 0.0
      %2640 = vmatpush1.xpose.msra.mxu0 0.0
      %2641 = vmatprep.subr.mxu0 0.0
      %2642 = vmatpush1.xpose.msra.mxu0 0.0
      %2643 = vmatprep.subr.mxu0 0.0
      %2644 = vmatpush1.xpose.msra.mxu0 0.0
      %2645 = vmatprep.subr.mxu0 0.0
      %2646 = vmatpush1.xpose.msra.mxu0 0.0
      %2647 = vmatprep.subr.mxu0 0.0
      %2648 = vmatpush1.xpose.msra.mxu0 0.0
      %2649 = vmatprep.subr.mxu0 0.0
      %2650 = vmatpush1.xpose.msra.mxu0 0.0
      %2651 = vmatprep.subr.mxu0 0.0
      %2652 = vmatpush1.xpose.msra.mxu0 0.0
      %2653 = vmatprep.subr.mxu0 0.0
      %2654 = vmatpush1.xpose.msra.mxu0 0.0
      %2655 = vmatprep.subr.mxu0 0.0
      %2656 = vmatpush1.xpose.msra.mxu0 0.0
      %2657 = vmatprep.subr.mxu0 0.0
      %2658 = vmatpush1.xpose.msra.mxu0 0.0
      %2659 = vmatprep.subr.mxu0 0.0
      %2660 = vmatpush1.xpose.msra.mxu0 0.0
      %2661 = vmatprep.subr.mxu0 0.0
      %2662 = vmatpush1.xpose.msra.mxu0 0.0
      %2663 = vmatprep.subr.mxu0 0.0
      %2664 = vmatpush1.xpose.msra.mxu0 0.0
      %2665 = vmatprep.subr.mxu0 0.0
      %2666 = vmatpush1.xpose.msra.mxu0 0.0
      %2667 = vmatprep.subr.mxu0 0.0
      %2668 = vmatpush1.xpose.msra.mxu0 0.0
      %2669 = vmatprep.subr.mxu0 0.0
      %2670 = vmatpush1.xpose.msra.mxu0 0.0
      %2671 = vmatprep.subr.mxu0 0.0
      %2672 = vmatpush1.xpose.msra.mxu0 0.0
      %2673 = vmatprep.subr.mxu0 0.0
      %2674 = vmatpush1.xpose.msra.mxu0 0.0
      %2675 = vmatprep.subr.mxu0 0.0
      %2676 = vmatpush1.xpose.msra.mxu0 0.0
      %2677 = vmatprep.mubr.f32.mxu0 0.0
      %2678 = vmatmul.mubr.f32.gmra.mrb[0].mxu0 %v2605
      %v2679 = vpop.f32.mrb[0].mxu0
      %v2680 = vadd.f32 %v338, %v2679
      %v2681 = vpop.f32.mrb[0].mxu0
      %2682 = vmatprep.mubr.f32.mxu0 0.0
      %2683 = vmatmul.mubr.f32.gmra.mrb[0].mxu0 %v2607
      %v2684 = vpop.f32.mrb[0].mxu0
      %v2685 = vadd.f32 %v339, %v2684
      %v2686 = vpop.f32.mrb[0].mxu0
      %2687 = vdwg.mxu0
      %v2688 = vsel %vm342, %v2680, -inf
      %2689 = vmax.xlane.f32.xlu0 %v2688
      %v2690 = vpop.xlane.xlu0 %2689
      %v2691 = vsel %vm342, %v2685, -inf
      %2692 = vmax.xlane.f32.xlu0 %v2691
      %v2693 = vpop.xlane.xlu0 %2692
      %v2694 = vsub.f32 %v2680, %v2690
      %v2695 = vsub.f32 %v2685, %v2693
      %v2696 = vmul.f32 %v2694, 1.442695
      %v2697 = vpow.pop %v2696
      %v2698 = vmul.f32 %v2695, 1.442695
      %v2699 = vpow.pop %v2698
      %v2700 = vsel %vm342, %v2697, 0.0
      %2701 = vadd.xlane.f32.xlu0 %v2700
      %v2702 = vpop.xlane.xlu0 %2701
      %v2703 = vsel %vm342, %v2699, 0.0
      %2704 = vadd.xlane.f32.xlu0 %v2703
      %v2705 = vpop.xlane.xlu0 %2704
      %v2706 = vrcp.pop %v2702
      %v2707 = vrcp.pop %v2705
      %v2708 = vmul.f32 %v2697, %v2706
      %v2709 = vmul.f32 %v2699, %v2707
      %2710 = vrot.lane.b32.xlu0 %v2029, 48
      %v2711 = vpop.permute.xlu0 %2710
      %2712 = vrot.lane.b32.xlu0 %v2034, 48
      %v2713 = vpop.permute.xlu0 %2712
      %v2717 = vsel %vm342, %v2708, 0
      %v2720 = vsel %vm342, %v2709, 0
      %2722 = vmatprep.subr.mxu0 0.0
      %2723 = vmatpush1.msra.mxu0 %v2711
      %2724 = vmatprep.subr.mxu0 0.0
      %2725 = vmatpush1.msra.mxu0 %v2713
      %2726 = vmatprep.subr.mxu0 0.0
      %2727 = vmatpush1.msra.mxu0 0.0
      %2728 = vmatprep.subr.mxu0 0.0
      %2729 = vmatpush1.msra.mxu0 0.0
      %2730 = vmatprep.subr.mxu0 0.0
      %2731 = vmatpush1.msra.mxu0 0.0
      %2732 = vmatprep.subr.mxu0 0.0
      %2733 = vmatpush1.msra.mxu0 0.0
      %2734 = vmatprep.subr.mxu0 0.0
      %2735 = vmatpush1.msra.mxu0 0.0
      %2736 = vmatprep.subr.mxu0 0.0
      %2737 = vmatpush1.msra.mxu0 0.0
      %2738 = vmatprep.subr.mxu0 0.0
      %2739 = vmatpush1.msra.mxu0 0.0
      %2740 = vmatprep.subr.mxu0 0.0
      %2741 = vmatpush1.msra.mxu0 0.0
      %2742 = vmatprep.subr.mxu0 0.0
      %2743 = vmatpush1.msra.mxu0 0.0
      %2744 = vmatprep.subr.mxu0 0.0
      %2745 = vmatpush1.msra.mxu0 0.0
      %2746 = vmatprep.subr.mxu0 0.0
      %2747 = vmatpush1.msra.mxu0 0.0
      %2748 = vmatprep.subr.mxu0 0.0
      %2749 = vmatpush1.msra.mxu0 0.0
      %2750 = vmatprep.subr.mxu0 0.0
      %2751 = vmatpush1.msra.mxu0 0.0
      %2752 = vmatprep.subr.mxu0 0.0
      %2753 = vmatpush1.msra.mxu0 0.0
      %2754 = vmatprep.subr.mxu0 0.0
      %2755 = vmatpush1.msra.mxu0 0.0
      %2756 = vmatprep.subr.mxu0 0.0
      %2757 = vmatpush1.msra.mxu0 0.0
      %2758 = vmatprep.subr.mxu0 0.0
      %2759 = vmatpush1.msra.mxu0 0.0
      %2760 = vmatprep.subr.mxu0 0.0
      %2761 = vmatpush1.msra.mxu0 0.0
      %2762 = vmatprep.subr.mxu0 0.0
      %2763 = vmatpush1.msra.mxu0 0.0
      %2764 = vmatprep.subr.mxu0 0.0
      %2765 = vmatpush1.msra.mxu0 0.0
      %2766 = vmatprep.subr.mxu0 0.0
      %2767 = vmatpush1.msra.mxu0 0.0
      %2768 = vmatprep.subr.mxu0 0.0
      %2769 = vmatpush1.msra.mxu0 0.0
      %2770 = vmatprep.subr.mxu0 0.0
      %2771 = vmatpush1.msra.mxu0 0.0
      %2772 = vmatprep.subr.mxu0 0.0
      %2773 = vmatpush1.msra.mxu0 0.0
      %2774 = vmatprep.subr.mxu0 0.0
      %2775 = vmatpush1.msra.mxu0 0.0
      %2776 = vmatprep.subr.mxu0 0.0
      %2777 = vmatpush1.msra.mxu0 0.0
      %2778 = vmatprep.subr.mxu0 0.0
      %2779 = vmatpush1.msra.mxu0 0.0
      %2780 = vmatprep.subr.mxu0 0.0
      %2781 = vmatpush1.msra.mxu0 0.0
      %2782 = vmatprep.subr.mxu0 0.0
      %2783 = vmatpush1.msra.mxu0 0.0
      %2784 = vmatprep.subr.mxu0 0.0
      %2785 = vmatpush1.msra.mxu0 0.0
      %2786 = vmatprep.mubr.f32.mxu0 0.0
      %2787 = vmatmul.mubr.f32.gmra.mrb[0].mxu0 %v2717
      %v2788 = vpop.f32.mrb[0].mxu0
      %v2789 = vadd.f32 0.0, %v2788
      %v2790 = vpop.f32.mrb[0].mxu0
      %2791 = vmatprep.mubr.f32.mxu0 0.0
      %2792 = vmatmul.mubr.f32.gmra.mrb[0].mxu0 %v2720
      %v2793 = vpop.f32.mrb[0].mxu0
      %v2794 = vadd.f32 0.0, %v2793
      %v2795 = vpop.f32.mrb[0].mxu0
      %2796 = vdwg.mxu0
      %v2798 = vsel %vm559, %v2789, 0
      %v2801 = vsel %vm559, %v2794, 0
      %2803 = vmatprep.subr.mxu0 0.0
      %2804 = vmatpush1.msra.mxu0 %v324
      %2805 = vmatprep.subr.mxu0 0.0
      %2806 = vmatpush1.msra.mxu0 0.0
      %2807 = vmatprep.subr.mxu0 0.0
      %2808 = vmatpush1.msra.mxu0 0.0
      %2809 = vmatprep.subr.mxu0 0.0
      %2810 = vmatpush1.msra.mxu0 0.0
      %2811 = vmatprep.subr.mxu0 0.0
      %2812 = vmatpush1.msra.mxu0 0.0
      %2813 = vmatprep.subr.mxu0 0.0
      %2814 = vmatpush1.msra.mxu0 0.0
      %2815 = vmatprep.subr.mxu0 0.0
      %2816 = vmatpush1.msra.mxu0 0.0
      %2817 = vmatprep.subr.mxu0 0.0
      %2818 = vmatpush1.msra.mxu0 0.0
      %2819 = vmatprep.subr.mxu0 0.0
      %2820 = vmatpush1.msra.mxu0 0.0
      %2821 = vmatprep.subr.mxu0 0.0
      %2822 = vmatpush1.msra.mxu0 0.0
      %2823 = vmatprep.subr.mxu0 0.0
      %2824 = vmatpush1.msra.mxu0 0.0
      %2825 = vmatprep.subr.mxu0 0.0
      %2826 = vmatpush1.msra.mxu0 0.0
      %2827 = vmatprep.subr.mxu0 0.0
      %2828 = vmatpush1.msra.mxu0 0.0
      %2829 = vmatprep.subr.mxu0 0.0
      %2830 = vmatpush1.msra.mxu0 0.0
      %2831 = vmatprep.subr.mxu0 0.0
      %2832 = vmatpush1.msra.mxu0 0.0
      %2833 = vmatprep.subr.mxu0 0.0
      %2834 = vmatpush1.msra.mxu0 0.0
      %2835 = vmatprep.subr.mxu0 0.0
      %2836 = vmatpush1.msra.mxu0 0.0
      %2837 = vmatprep.subr.mxu0 0.0
      %2838 = vmatpush1.msra.mxu0 0.0
      %2839 = vmatprep.subr.mxu0 0.0
      %2840 = vmatpush1.msra.mxu0 0.0
      %2841 = vmatprep.subr.mxu0 0.0
      %2842 = vmatpush1.msra.mxu0 0.0
      %2843 = vmatprep.subr.mxu0 0.0
      %2844 = vmatpush1.msra.mxu0 0.0
      %2845 = vmatprep.subr.mxu0 0.0
      %2846 = vmatpush1.msra.mxu0 0.0
      %2847 = vmatprep.subr.mxu0 0.0
      %2848 = vmatpush1.msra.mxu0 0.0
      %2849 = vmatprep.subr.mxu0 0.0
      %2850 = vmatpush1.msra.mxu0 0.0
      %2851 = vmatprep.subr.mxu0 0.0
      %2852 = vmatpush1.msra.mxu0 0.0
      %2853 = vmatprep.subr.mxu0 0.0
      %2854 = vmatpush1.msra.mxu0 0.0
      %2855 = vmatprep.subr.mxu0 0.0
      %2856 = vmatpush1.msra.mxu0 0.0
      %2857 = vmatprep.subr.mxu0 0.0
      %2858 = vmatpush1.msra.mxu0 0.0
      %2859 = vmatprep.subr.mxu0 0.0
      %2860 = vmatpush1.msra.mxu0 0.0
      %2861 = vmatprep.subr.mxu0 0.0
      %2862 = vmatpush1.msra.mxu0 0.0
      %2863 = vmatprep.subr.mxu0 0.0
      %2864 = vmatpush1.msra.mxu0 0.0
      %2865 = vmatprep.subr.mxu0 0.0
      %2866 = vmatpush1.msra.mxu0 0.0
      %2867 = vmatprep.mubr.f32.mxu0 0.0
      %2868 = vmatmul.mubr.f32.gmra.mrb[0].mxu0 %v2798
      %v2869 = vpop.f32.mrb[0].mxu0
      %v2870 = vadd.f32 0.0, %v2869
      %v2871 = vpop.f32.mrb[0].mxu0
      %2872 = vmatprep.mubr.f32.mxu0 0.0
      %2873 = vmatmul.mubr.f32.gmra.mrb[0].mxu0 %v2801
      %v2874 = vpop.f32.mrb[0].mxu0
      %v2875 = vadd.f32 0.0, %v2874
      %v2876 = vpop.f32.mrb[0].mxu0
      %2877 = vdwg.mxu0
      %v2878 = vadd.f32 %v2589, %v2870
      %v2879 = vadd.f32 %v2594, %v2875
      %2880 = vrot.lane.b32.xlu0 %v2029, 104
      %v2881 = vpop.permute.xlu0 %2880
      %2882 = vrot.lane.b32.xlu0 %v2034, 104
      %v2883 = vpop.permute.xlu0 %2882
      %2884 = vrot.lane.b32.xlu0 %v2029, 72
      %v2885 = vpop.permute.xlu0 %2884
      %2886 = vrot.lane.b32.xlu0 %v2034, 72
      %v2887 = vpop.permute.xlu0 %2886
      %v2888 = vsel %vm559, %v2881, 0
      %v2890 = vsel %vm559, %v2883, 0
      %v2892 = vsel %vm559, %v2885, 0
      %v2894 = vsel %vm559, %v2887, 0
      %2896 = vmatprep.subr.mxu0 0.0
      %2897 = vmatpush1.xpose.msra.mxu0 %v2892
      %2898 = vmatprep.subr.mxu0 0.0
      %2899 = vmatpush1.xpose.msra.mxu0 %v2894
      %2900 = vmatprep.subr.mxu0 0.0
      %2901 = vmatpush1.xpose.msra.mxu0 0.0
      %2902 = vmatprep.subr.mxu0 0.0
      %2903 = vmatpush1.xpose.msra.mxu0 0.0
      %2904 = vmatprep.subr.mxu0 0.0
      %2905 = vmatpush1.xpose.msra.mxu0 0.0
      %2906 = vmatprep.subr.mxu0 0.0
      %2907 = vmatpush1.xpose.msra.mxu0 0.0
      %2908 = vmatprep.subr.mxu0 0.0
      %2909 = vmatpush1.xpose.msra.mxu0 0.0
      %2910 = vmatprep.subr.mxu0 0.0
      %2911 = vmatpush1.xpose.msra.mxu0 0.0
      %2912 = vmatprep.subr.mxu0 0.0
      %2913 = vmatpush1.xpose.msra.mxu0 0.0
      %2914 = vmatprep.subr.mxu0 0.0
      %2915 = vmatpush1.xpose.msra.mxu0 0.0
      %2916 = vmatprep.subr.mxu0 0.0
      %2917 = vmatpush1.xpose.msra.mxu0 0.0
      %2918 = vmatprep.subr.mxu0 0.0
      %2919 = vmatpush1.xpose.msra.mxu0 0.0
      %2920 = vmatprep.subr.mxu0 0.0
      %2921 = vmatpush1.xpose.msra.mxu0 0.0
      %2922 = vmatprep.subr.mxu0 0.0
      %2923 = vmatpush1.xpose.msra.mxu0 0.0
      %2924 = vmatprep.subr.mxu0 0.0
      %2925 = vmatpush1.xpose.msra.mxu0 0.0
      %2926 = vmatprep.subr.mxu0 0.0
      %2927 = vmatpush1.xpose.msra.mxu0 0.0
      %2928 = vmatprep.subr.mxu0 0.0
      %2929 = vmatpush1.xpose.msra.mxu0 0.0
      %2930 = vmatprep.subr.mxu0 0.0
      %2931 = vmatpush1.xpose.msra.mxu0 0.0
      %2932 = vmatprep.subr.mxu0 0.0
      %2933 = vmatpush1.xpose.msra.mxu0 0.0
      %2934 = vmatprep.subr.mxu0 0.0
      %2935 = vmatpush1.xpose.msra.mxu0 0.0
      %2936 = vmatprep.subr.mxu0 0.0
      %2937 = vmatpush1.xpose.msra.mxu0 0.0
      %2938 = vmatprep.subr.mxu0 0.0
      %2939 = vmatpush1.xpose.msra.mxu0 0.0
      %2940 = vmatprep.subr.mxu0 0.0
      %2941 = vmatpush1.xpose.msra.mxu0 0.0
      %2942 = vmatprep.subr.mxu0 0.0
      %2943 = vmatpush1.xpose.msra.mxu0 0.0
      %2944 = vmatprep.subr.mxu0 0.0
      %2945 = vmatpush1.xpose.msra.mxu0 0.0
      %2946 = vmatprep.subr.mxu0 0.0
      %2947 = vmatpush1.xpose.msra.mxu0 0.0
      %2948 = vmatprep.subr.mxu0 0.0
      %2949 = vmatpush1.xpose.msra.mxu0 0.0
      %2950 = vmatprep.subr.mxu0 0.0
      %2951 = vmatpush1.xpose.msra.mxu0 0.0
      %2952 = vmatprep.subr.mxu0 0.0
      %2953 = vmatpush1.xpose.msra.mxu0 0.0
      %2954 = vmatprep.subr.mxu0 0.0
      %2955 = vmatpush1.xpose.msra.mxu0 0.0
      %2956 = vmatprep.subr.mxu0 0.0
      %2957 = vmatpush1.xpose.msra.mxu0 0.0
      %2958 = vmatprep.subr.mxu0 0.0
      %2959 = vmatpush1.xpose.msra.mxu0 0.0
      %2960 = vmatprep.mubr.f32.mxu0 0.0
      %2961 = vmatmul.mubr.f32.gmra.mrb[0].mxu0 %v2888
      %v2962 = vpop.f32.mrb[0].mxu0
      %v2963 = vadd.f32 %v338, %v2962
      %v2964 = vpop.f32.mrb[0].mxu0
      %2965 = vmatprep.mubr.f32.mxu0 0.0
      %2966 = vmatmul.mubr.f32.gmra.mrb[0].mxu0 %v2890
      %v2967 = vpop.f32.mrb[0].mxu0
      %v2968 = vadd.f32 %v339, %v2967
      %v2969 = vpop.f32.mrb[0].mxu0
      %2970 = vdwg.mxu0
      %v2971 = vsel %vm342, %v2963, -inf
      %2972 = vmax.xlane.f32.xlu0 %v2971
      %v2973 = vpop.xlane.xlu0 %2972
      %v2974 = vsel %vm342, %v2968, -inf
      %2975 = vmax.xlane.f32.xlu0 %v2974
      %v2976 = vpop.xlane.xlu0 %2975
      %v2977 = vsub.f32 %v2963, %v2973
      %v2978 = vsub.f32 %v2968, %v2976
      %v2979 = vmul.f32 %v2977, 1.442695
      %v2980 = vpow.pop %v2979
      %v2981 = vmul.f32 %v2978, 1.442695
      %v2982 = vpow.pop %v2981
      %v2983 = vsel %vm342, %v2980, 0.0
      %2984 = vadd.xlane.f32.xlu0 %v2983
      %v2985 = vpop.xlane.xlu0 %2984
      %v2986 = vsel %vm342, %v2982, 0.0
      %2987 = vadd.xlane.f32.xlu0 %v2986
      %v2988 = vpop.xlane.xlu0 %2987
      %v2989 = vrcp.pop %v2985
      %v2990 = vrcp.pop %v2988
      %v2991 = vmul.f32 %v2980, %v2989
      %v2992 = vmul.f32 %v2982, %v2990
      %2993 = vrot.lane.b32.xlu0 %v2029, 40
      %v2994 = vpop.permute.xlu0 %2993
      %2995 = vrot.lane.b32.xlu0 %v2034, 40
      %v2996 = vpop.permute.xlu0 %2995
      %v3000 = vsel %vm342, %v2991, 0
      %v3003 = vsel %vm342, %v2992, 0
      %3005 = vmatprep.subr.mxu0 0.0
      %3006 = vmatpush1.msra.mxu0 %v2994
      %3007 = vmatprep.subr.mxu0 0.0
      %3008 = vmatpush1.msra.mxu0 %v2996
      %3009 = vmatprep.subr.mxu0 0.0
      %3010 = vmatpush1.msra.mxu0 0.0
      %3011 = vmatprep.subr.mxu0 0.0
      %3012 = vmatpush1.msra.mxu0 0.0
      %3013 = vmatprep.subr.mxu0 0.0
      %3014 = vmatpush1.msra.mxu0 0.0
      %3015 = vmatprep.subr.mxu0 0.0
      %3016 = vmatpush1.msra.mxu0 0.0
      %3017 = vmatprep.subr.mxu0 0.0
      %3018 = vmatpush1.msra.mxu0 0.0
      %3019 = vmatprep.subr.mxu0 0.0
      %3020 = vmatpush1.msra.mxu0 0.0
      %3021 = vmatprep.subr.mxu0 0.0
      %3022 = vmatpush1.msra.mxu0 0.0
      %3023 = vmatprep.subr.mxu0 0.0
      %3024 = vmatpush1.msra.mxu0 0.0
      %3025 = vmatprep.subr.mxu0 0.0
      %3026 = vmatpush1.msra.mxu0 0.0
      %3027 = vmatprep.subr.mxu0 0.0
      %3028 = vmatpush1.msra.mxu0 0.0
      %3029 = vmatprep.subr.mxu0 0.0
      %3030 = vmatpush1.msra.mxu0 0.0
      %3031 = vmatprep.subr.mxu0 0.0
      %3032 = vmatpush1.msra.mxu0 0.0
      %3033 = vmatprep.subr.mxu0 0.0
      %3034 = vmatpush1.msra.mxu0 0.0
      %3035 = vmatprep.subr.mxu0 0.0
      %3036 = vmatpush1.msra.mxu0 0.0
      %3037 = vmatprep.subr.mxu0 0.0
      %3038 = vmatpush1.msra.mxu0 0.0
      %3039 = vmatprep.subr.mxu0 0.0
      %3040 = vmatpush1.msra.mxu0 0.0
      %3041 = vmatprep.subr.mxu0 0.0
      %3042 = vmatpush1.msra.mxu0 0.0
      %3043 = vmatprep.subr.mxu0 0.0
      %3044 = vmatpush1.msra.mxu0 0.0
      %3045 = vmatprep.subr.mxu0 0.0
      %3046 = vmatpush1.msra.mxu0 0.0
      %3047 = vmatprep.subr.mxu0 0.0
      %3048 = vmatpush1.msra.mxu0 0.0
      %3049 = vmatprep.subr.mxu0 0.0
      %3050 = vmatpush1.msra.mxu0 0.0
      %3051 = vmatprep.subr.mxu0 0.0
      %3052 = vmatpush1.msra.mxu0 0.0
      %3053 = vmatprep.subr.mxu0 0.0
      %3054 = vmatpush1.msra.mxu0 0.0
      %3055 = vmatprep.subr.mxu0 0.0
      %3056 = vmatpush1.msra.mxu0 0.0
      %3057 = vmatprep.subr.mxu0 0.0
      %3058 = vmatpush1.msra.mxu0 0.0
      %3059 = vmatprep.subr.mxu0 0.0
      %3060 = vmatpush1.msra.mxu0 0.0
      %3061 = vmatprep.subr.mxu0 0.0
      %3062 = vmatpush1.msra.mxu0 0.0
      %3063 = vmatprep.subr.mxu0 0.0
      %3064 = vmatpush1.msra.mxu0 0.0
      %3065 = vmatprep.subr.mxu0 0.0
      %3066 = vmatpush1.msra.mxu0 0.0
      %3067 = vmatprep.subr.mxu0 0.0
      %3068 = vmatpush1.msra.mxu0 0.0
      %3069 = vmatprep.mubr.f32.mxu0 0.0
      %3070 = vmatmul.mubr.f32.gmra.mrb[0].mxu0 %v3000
      %v3071 = vpop.f32.mrb[0].mxu0
      %v3072 = vadd.f32 0.0, %v3071
      %v3073 = vpop.f32.mrb[0].mxu0
      %3074 = vmatprep.mubr.f32.mxu0 0.0
      %3075 = vmatmul.mubr.f32.gmra.mrb[0].mxu0 %v3003
      %v3076 = vpop.f32.mrb[0].mxu0
      %v3077 = vadd.f32 0.0, %v3076
      %v3078 = vpop.f32.mrb[0].mxu0
      %3079 = vdwg.mxu0
      %v3081 = vsel %vm559, %v3072, 0
      %v3084 = vsel %vm559, %v3077, 0
      %3086 = vmatprep.subr.mxu0 0.0
      %3087 = vmatpush1.msra.mxu0 %v325
      %3088 = vmatprep.subr.mxu0 0.0
      %3089 = vmatpush1.msra.mxu0 0.0
      %3090 = vmatprep.subr.mxu0 0.0
      %3091 = vmatpush1.msra.mxu0 0.0
      %3092 = vmatprep.subr.mxu0 0.0
      %3093 = vmatpush1.msra.mxu0 0.0
      %3094 = vmatprep.subr.mxu0 0.0
      %3095 = vmatpush1.msra.mxu0 0.0
      %3096 = vmatprep.subr.mxu0 0.0
      %3097 = vmatpush1.msra.mxu0 0.0
      %3098 = vmatprep.subr.mxu0 0.0
      %3099 = vmatpush1.msra.mxu0 0.0
      %3100 = vmatprep.subr.mxu0 0.0
      %3101 = vmatpush1.msra.mxu0 0.0
      %3102 = vmatprep.subr.mxu0 0.0
      %3103 = vmatpush1.msra.mxu0 0.0
      %3104 = vmatprep.subr.mxu0 0.0
      %3105 = vmatpush1.msra.mxu0 0.0
      %3106 = vmatprep.subr.mxu0 0.0
      %3107 = vmatpush1.msra.mxu0 0.0
      %3108 = vmatprep.subr.mxu0 0.0
      %3109 = vmatpush1.msra.mxu0 0.0
      %3110 = vmatprep.subr.mxu0 0.0
      %3111 = vmatpush1.msra.mxu0 0.0
      %3112 = vmatprep.subr.mxu0 0.0
      %3113 = vmatpush1.msra.mxu0 0.0
      %3114 = vmatprep.subr.mxu0 0.0
      %3115 = vmatpush1.msra.mxu0 0.0
      %3116 = vmatprep.subr.mxu0 0.0
      %3117 = vmatpush1.msra.mxu0 0.0
      %3118 = vmatprep.subr.mxu0 0.0
      %3119 = vmatpush1.msra.mxu0 0.0
      %3120 = vmatprep.subr.mxu0 0.0
      %3121 = vmatpush1.msra.mxu0 0.0
      %3122 = vmatprep.subr.mxu0 0.0
      %3123 = vmatpush1.msra.mxu0 0.0
      %3124 = vmatprep.subr.mxu0 0.0
      %3125 = vmatpush1.msra.mxu0 0.0
      %3126 = vmatprep.subr.mxu0 0.0
      %3127 = vmatpush1.msra.mxu0 0.0
      %3128 = vmatprep.subr.mxu0 0.0
      %3129 = vmatpush1.msra.mxu0 0.0
      %3130 = vmatprep.subr.mxu0 0.0
      %3131 = vmatpush1.msra.mxu0 0.0
      %3132 = vmatprep.subr.mxu0 0.0
      %3133 = vmatpush1.msra.mxu0 0.0
      %3134 = vmatprep.subr.mxu0 0.0
      %3135 = vmatpush1.msra.mxu0 0.0
      %3136 = vmatprep.subr.mxu0 0.0
      %3137 = vmatpush1.msra.mxu0 0.0
      %3138 = vmatprep.subr.mxu0 0.0
      %3139 = vmatpush1.msra.mxu0 0.0
      %3140 = vmatprep.subr.mxu0 0.0
      %3141 = vmatpush1.msra.mxu0 0.0
      %3142 = vmatprep.subr.mxu0 0.0
      %3143 = vmatpush1.msra.mxu0 0.0
      %3144 = vmatprep.subr.mxu0 0.0
      %3145 = vmatpush1.msra.mxu0 0.0
      %3146 = vmatprep.subr.mxu0 0.0
      %3147 = vmatpush1.msra.mxu0 0.0
      %3148 = vmatprep.subr.mxu0 0.0
      %3149 = vmatpush1.msra.mxu0 0.0
      %3150 = vmatprep.mubr.f32.mxu0 0.0
      %3151 = vmatmul.mubr.f32.gmra.mrb[0].mxu0 %v3081
      %v3152 = vpop.f32.mrb[0].mxu0
      %v3153 = vadd.f32 0.0, %v3152
      %v3154 = vpop.f32.mrb[0].mxu0
      %3155 = vmatprep.mubr.f32.mxu0 0.0
      %3156 = vmatmul.mubr.f32.gmra.mrb[0].mxu0 %v3084
      %v3157 = vpop.f32.mrb[0].mxu0
      %v3158 = vadd.f32 0.0, %v3157
      %v3159 = vpop.f32.mrb[0].mxu0
      %3160 = vdwg.mxu0
      %v3161 = vadd.f32 %v2878, %v3153
      %v3162 = vadd.f32 %v2879, %v3158
      %v3163 = vadd.f32 %v3161, %v1683
      %v3164 = vadd.f32 %v3162, %v1683
      %v3165 = vadd.f32 %v3163, %v1954
      %v3166 = vadd.f32 %v3164, %v1955
      %v3167 = vsel %vm471, %v3165, 0.0
      %3168 = vadd.xlane.f32.xlu0 %v3167
      %v3169 = vpop.xlane.xlu0 %3168
      %v3170 = vsel %vm471, %v3166, 0.0
      %3171 = vadd.xlane.f32.xlu0 %v3170
      %v3172 = vpop.xlane.xlu0 %3171
      %v3173 = vmul.f32 %v3169, %v1694
      %v3174 = vmul.f32 %v3172, %v1694
      %v3175 = vsub.f32 %v3165, %v3173
      %v3176 = vsub.f32 %v3166, %v3174
      %v3177 = vmul.f32 %v3175, %v3175
      %v3178 = vmul.f32 %v3176, %v3176
      %v3179 = vsel %vm471, %v3177, 0.0
      %3180 = vadd.xlane.f32.xlu0 %v3179
      %v3181 = vpop.xlane.xlu0 %3180
      %v3182 = vsel %vm471, %v3178, 0.0
      %3183 = vadd.xlane.f32.xlu0 %v3182
      %v3184 = vpop.xlane.xlu0 %3183
      %v3185 = vmul.f32 %v3181, %v1694
      %v3186 = vmul.f32 %v3184, %v1694
      %v3187 = vadd.f32 %v3185, 1e-12
      %v3188 = vadd.f32 %v3186, 1e-12
      %v3189 = vrsqrt.pop %v3187
      %v3190 = vrsqrt.pop %v3188
      %v3191 = vmul.f32 %v3175, %v3189
      %v3192 = vmul.f32 %v3176, %v3190
      %v3193 = vmul.f32 %v3191, %v1718
      %v3194 = vmul.f32 %v3192, %v1718
      %v3195 = vadd.f32 %v3193, %v1724
      %v3196 = vadd.f32 %v3194, %v1724
      %v3198 = vsel %vm471, %v3195, 0
      %v3201 = vsel %vm471, %v3196, 0
      %3203 = vmatprep.subr.mxu0 0.0
      %3204 = vmatpush1.msra.mxu0 %v326
      %3205 = vmatprep.subr.mxu0 0.0
      %3206 = vmatpush1.msra.mxu0 %v327
      %3207 = vmatprep.subr.mxu0 0.0
      %3208 = vmatpush1.msra.mxu0 %v328
      %3209 = vmatprep.subr.mxu0 0.0
      %3210 = vmatpush1.msra.mxu0 %v329
      %3211 = vmatprep.subr.mxu0 0.0
      %3212 = vmatpush1.msra.mxu0 0.0
      %3213 = vmatprep.subr.mxu0 0.0
      %3214 = vmatpush1.msra.mxu0 0.0
      %3215 = vmatprep.subr.mxu0 0.0
      %3216 = vmatpush1.msra.mxu0 0.0
      %3217 = vmatprep.subr.mxu0 0.0
      %3218 = vmatpush1.msra.mxu0 0.0
      %3219 = vmatprep.subr.mxu0 0.0
      %3220 = vmatpush1.msra.mxu0 0.0
      %3221 = vmatprep.subr.mxu0 0.0
      %3222 = vmatpush1.msra.mxu0 0.0
      %3223 = vmatprep.subr.mxu0 0.0
      %3224 = vmatpush1.msra.mxu0 0.0
      %3225 = vmatprep.subr.mxu0 0.0
      %3226 = vmatpush1.msra.mxu0 0.0
      %3227 = vmatprep.subr.mxu0 0.0
      %3228 = vmatpush1.msra.mxu0 0.0
      %3229 = vmatprep.subr.mxu0 0.0
      %3230 = vmatpush1.msra.mxu0 0.0
      %3231 = vmatprep.subr.mxu0 0.0
      %3232 = vmatpush1.msra.mxu0 0.0
      %3233 = vmatprep.subr.mxu0 0.0
      %3234 = vmatpush1.msra.mxu0 0.0
      %3235 = vmatprep.subr.mxu0 0.0
      %3236 = vmatpush1.msra.mxu0 0.0
      %3237 = vmatprep.subr.mxu0 0.0
      %3238 = vmatpush1.msra.mxu0 0.0
      %3239 = vmatprep.subr.mxu0 0.0
      %3240 = vmatpush1.msra.mxu0 0.0
      %3241 = vmatprep.subr.mxu0 0.0
      %3242 = vmatpush1.msra.mxu0 0.0
      %3243 = vmatprep.subr.mxu0 0.0
      %3244 = vmatpush1.msra.mxu0 0.0
      %3245 = vmatprep.subr.mxu0 0.0
      %3246 = vmatpush1.msra.mxu0 0.0
      %3247 = vmatprep.subr.mxu0 0.0
      %3248 = vmatpush1.msra.mxu0 0.0
      %3249 = vmatprep.subr.mxu0 0.0
      %3250 = vmatpush1.msra.mxu0 0.0
      %3251 = vmatprep.subr.mxu0 0.0
      %3252 = vmatpush1.msra.mxu0 0.0
      %3253 = vmatprep.subr.mxu0 0.0
      %3254 = vmatpush1.msra.mxu0 0.0
      %3255 = vmatprep.subr.mxu0 0.0
      %3256 = vmatpush1.msra.mxu0 0.0
      %3257 = vmatprep.subr.mxu0 0.0
      %3258 = vmatpush1.msra.mxu0 0.0
      %3259 = vmatprep.subr.mxu0 0.0
      %3260 = vmatpush1.msra.mxu0 0.0
      %3261 = vmatprep.subr.mxu0 0.0
      %3262 = vmatpush1.msra.mxu0 0.0
      %3263 = vmatprep.subr.mxu0 0.0
      %3264 = vmatpush1.msra.mxu0 0.0
      %3265 = vmatprep.subr.mxu0 0.0
      %3266 = vmatpush1.msra.mxu0 0.0
      %3267 = vmatprep.mubr.f32.mxu0 0.0
      %3268 = vmatmul.mubr.f32.gmra.mrb[0].mxu0 %v3198
      %v3269 = vpop.f32.mrb[0].mxu0
      %v3270 = vadd.f32 %v1730, %v3269
      %v3271 = vpop.f32.mrb[0].mxu0
      %3272 = vmatprep.mubr.f32.mxu0 0.0
      %3273 = vmatmul.mubr.f32.gmra.mrb[0].mxu0 %v3201
      %v3274 = vpop.f32.mrb[0].mxu0
      %v3275 = vadd.f32 %v1730, %v3274
      %v3276 = vpop.f32.mrb[0].mxu0
      %3277 = vdwg.mxu0
      %v3278 = vmul.f32 %v3270, 0.5
      %v3279 = vmul.f32 %v3275, 0.5
      %v3280 = vmul.f32 %v3270, 0.044715
      %v3281 = vmul.f32 %v3275, 0.044715
      %v3282 = vmul.f32 %v3280, %v3270
      %v3283 = vmul.f32 %v3281, %v3275
      %v3284 = vmul.f32 %v3282, %v3270
      %v3285 = vmul.f32 %v3283, %v3275
      %v3286 = vadd.f32 %v3270, %v3284
      %v3287 = vadd.f32 %v3275, %v3285
      %v3288 = vmul.f32 %v3286, 0.7978846
      %v3289 = vmul.f32 %v3287, 0.7978846
      %v3290 = vtanh.pop %v3288
      %v3291 = vtanh.pop %v3289
      %v3292 = vadd.f32 %v3290, 1.0
      %v3293 = vadd.f32 %v3291, 1.0
      %v3294 = vmul.f32 %v3278, %v3292
      %v3295 = vmul.f32 %v3279, %v3293
      %v3297 = vsel %vm1834, %v3294, 0
      %v3300 = vsel %vm1834, %v3295, 0
      %3302 = vmatprep.subr.mxu0 0.0
      %3303 = vmatpush1.msra.mxu0 %v330
      %3304 = vmatprep.subr.mxu0 0.0
      %3305 = vmatpush1.msra.mxu0 %v331
      %3306 = vmatprep.subr.mxu0 0.0
      %3307 = vmatpush1.msra.mxu0 %v332
      %3308 = vmatprep.subr.mxu0 0.0
      %3309 = vmatpush1.msra.mxu0 %v333
      %3310 = vmatprep.subr.mxu0 0.0
      %3311 = vmatpush1.msra.mxu0 %v334
      %3312 = vmatprep.subr.mxu0 0.0
      %3313 = vmatpush1.msra.mxu0 %v335
      %3314 = vmatprep.subr.mxu0 0.0
      %3315 = vmatpush1.msra.mxu0 %v336
      %3316 = vmatprep.subr.mxu0 0.0
      %3317 = vmatpush1.msra.mxu0 %v337
      %3318 = vmatprep.subr.mxu0 0.0
      %3319 = vmatpush1.msra.mxu0 0.0
      %3320 = vmatprep.subr.mxu0 0.0
      %3321 = vmatpush1.msra.mxu0 0.0
      %3322 = vmatprep.subr.mxu0 0.0
      %3323 = vmatpush1.msra.mxu0 0.0
      %3324 = vmatprep.subr.mxu0 0.0
      %3325 = vmatpush1.msra.mxu0 0.0
      %3326 = vmatprep.subr.mxu0 0.0
      %3327 = vmatpush1.msra.mxu0 0.0
      %3328 = vmatprep.subr.mxu0 0.0
      %3329 = vmatpush1.msra.mxu0 0.0
      %3330 = vmatprep.subr.mxu0 0.0
      %3331 = vmatpush1.msra.mxu0 0.0
      %3332 = vmatprep.subr.mxu0 0.0
      %3333 = vmatpush1.msra.mxu0 0.0
      %3334 = vmatprep.subr.mxu0 0.0
      %3335 = vmatpush1.msra.mxu0 0.0
      %3336 = vmatprep.subr.mxu0 0.0
      %3337 = vmatpush1.msra.mxu0 0.0
      %3338 = vmatprep.subr.mxu0 0.0
      %3339 = vmatpush1.msra.mxu0 0.0
      %3340 = vmatprep.subr.mxu0 0.0
      %3341 = vmatpush1.msra.mxu0 0.0
      %3342 = vmatprep.subr.mxu0 0.0
      %3343 = vmatpush1.msra.mxu0 0.0
      %3344 = vmatprep.subr.mxu0 0.0
      %3345 = vmatpush1.msra.mxu0 0.0
      %3346 = vmatprep.subr.mxu0 0.0
      %3347 = vmatpush1.msra.mxu0 0.0
      %3348 = vmatprep.subr.mxu0 0.0
      %3349 = vmatpush1.msra.mxu0 0.0
      %3350 = vmatprep.subr.mxu0 0.0
      %3351 = vmatpush1.msra.mxu0 0.0
      %3352 = vmatprep.subr.mxu0 0.0
      %3353 = vmatpush1.msra.mxu0 0.0
      %3354 = vmatprep.subr.mxu0 0.0
      %3355 = vmatpush1.msra.mxu0 0.0
      %3356 = vmatprep.subr.mxu0 0.0
      %3357 = vmatpush1.msra.mxu0 0.0
      %3358 = vmatprep.subr.mxu0 0.0
      %3359 = vmatpush1.msra.mxu0 0.0
      %3360 = vmatprep.subr.mxu0 0.0
      %3361 = vmatpush1.msra.mxu0 0.0
      %3362 = vmatprep.subr.mxu0 0.0
      %3363 = vmatpush1.msra.mxu0 0.0
      %3364 = vmatprep.subr.mxu0 0.0
      %3365 = vmatpush1.msra.mxu0 0.0
      %3366 = vmatprep.mubr.f32.mxu0 0.0
      %3367 = vmatmul.mubr.f32.gmra.mrb[0].mxu0 %v3297
      %v3368 = vpop.f32.mrb[0].mxu0
      %v3369 = vadd.f32 %v1833, %v3368
      %v3370 = vpop.f32.mrb[0].mxu0
      %3371 = vmatprep.mubr.f32.mxu0 0.0
      %3372 = vmatmul.mubr.f32.gmra.mrb[0].mxu0 %v3300
      %v3373 = vpop.f32.mrb[0].mxu0
      %v3374 = vadd.f32 %v1833, %v3373
      %v3375 = vpop.f32.mrb[0].mxu0
      %3376 = vdwg.mxu0
      %v3377 = vadd.f32 %v3369, %v3195
      %v3378 = vadd.f32 %v3374, %v3196
      %v3379 = vsel %vm471, %v3377, 0.0
      %3380 = vadd.xlane.f32.xlu0 %v3379
      %v3381 = vpop.xlane.xlu0 %3380
      %v3382 = vsel %vm471, %v3378, 0.0
      %3383 = vadd.xlane.f32.xlu0 %v3382
      %v3384 = vpop.xlane.xlu0 %3383
      %v3385 = vmul.f32 %v3381, %v1694
      %v3386 = vmul.f32 %v3384, %v1694
      %v3387 = vsub.f32 %v3377, %v3385
      %v3388 = vsub.f32 %v3378, %v3386
      %v3389 = vmul.f32 %v3387, %v3387
      %v3390 = vmul.f32 %v3388, %v3388
      %v3391 = vsel %vm471, %v3389, 0.0
      %3392 = vadd.xlane.f32.xlu0 %v3391
      %v3393 = vpop.xlane.xlu0 %3392
      %v3394 = vsel %vm471, %v3390, 0.0
      %3395 = vadd.xlane.f32.xlu0 %v3394
      %v3396 = vpop.xlane.xlu0 %3395
      %v3397 = vmul.f32 %v3393, %v1694
      %v3398 = vmul.f32 %v3396, %v1694
      %v3399 = vadd.f32 %v3397, 1e-12
      %v3400 = vadd.f32 %v3398, 1e-12
      %v3401 = vrsqrt.pop %v3399
      %v3402 = vrsqrt.pop %v3400
      %v3403 = vmul.f32 %v3387, %v3401
      %v3404 = vmul.f32 %v3388, %v3402
      %v3405 = vmul.f32 %v3403, %v1947
      %v3406 = vmul.f32 %v3404, %v1947
      %v3407 = vadd.f32 %v3405, %v1953
      %v3408 = vadd.f32 %v3406, %v1953
      %v3409 = vlaneseq
      %v3410 = vshrl.u32 %v3409, 7
      %v3411 = vlaneseq
      %v3412 = vand.u32 %v3411, 127
      %v3413 = vmul.u32 %v3410, 8
      %vm3414 = vcmp.eq.s32.totalorder %v3412, %v3413
      %v3415 = vsel %vm3414, 1, 0
      %v3416 = vcvt.s32.f32 %v3415
      %v3418 = vsel %vm342, %v3416, 0
      %3420 = vmatprep.subr.mxu0 0.0
      %3421 = vmatpush1.msra.mxu0 %v3407
      %3422 = vmatprep.subr.mxu0 0.0
      %3423 = vmatpush1.msra.mxu0 %v3408
      %3424 = vmatprep.subr.mxu0 0.0
      %3425 = vmatpush1.msra.mxu0 0.0
      %3426 = vmatprep.subr.mxu0 0.0
      %3427 = vmatpush1.msra.mxu0 0.0
      %3428 = vmatprep.subr.mxu0 0.0
      %3429 = vmatpush1.msra.mxu0 0.0
      %3430 = vmatprep.subr.mxu0 0.0
      %3431 = vmatpush1.msra.mxu0 0.0
      %3432 = vmatprep.subr.mxu0 0.0
      %3433 = vmatpush1.msra.mxu0 0.0
      %3434 = vmatprep.subr.mxu0 0.0
      %3435 = vmatpush1.msra.mxu0 0.0
      %3436 = vmatprep.subr.mxu0 0.0
      %3437 = vmatpush1.msra.mxu0 0.0
      %3438 = vmatprep.subr.mxu0 0.0
      %3439 = vmatpush1.msra.mxu0 0.0
      %3440 = vmatprep.subr.mxu0 0.0
      %3441 = vmatpush1.msra.mxu0 0.0
      %3442 = vmatprep.subr.mxu0 0.0
      %3443 = vmatpush1.msra.mxu0 0.0
      %3444 = vmatprep.subr.mxu0 0.0
      %3445 = vmatpush1.msra.mxu0 0.0
      %3446 = vmatprep.subr.mxu0 0.0
      %3447 = vmatpush1.msra.mxu0 0.0
      %3448 = vmatprep.subr.mxu0 0.0
      %3449 = vmatpush1.msra.mxu0 0.0
      %3450 = vmatprep.subr.mxu0 0.0
      %3451 = vmatpush1.msra.mxu0 0.0
      %3452 = vmatprep.subr.mxu0 0.0
      %3453 = vmatpush1.msra.mxu0 0.0
      %3454 = vmatprep.subr.mxu0 0.0
      %3455 = vmatpush1.msra.mxu0 0.0
      %3456 = vmatprep.subr.mxu0 0.0
      %3457 = vmatpush1.msra.mxu0 0.0
      %3458 = vmatprep.subr.mxu0 0.0
      %3459 = vmatpush1.msra.mxu0 0.0
      %3460 = vmatprep.subr.mxu0 0.0
      %3461 = vmatpush1.msra.mxu0 0.0
      %3462 = vmatprep.subr.mxu0 0.0
      %3463 = vmatpush1.msra.mxu0 0.0
      %3464 = vmatprep.subr.mxu0 0.0
      %3465 = vmatpush1.msra.mxu0 0.0
      %3466 = vmatprep.subr.mxu0 0.0
      %3467 = vmatpush1.msra.mxu0 0.0
      %3468 = vmatprep.subr.mxu0 0.0
      %3469 = vmatpush1.msra.mxu0 0.0
      %3470 = vmatprep.subr.mxu0 0.0
      %3471 = vmatpush1.msra.mxu0 0.0
      %3472 = vmatprep.subr.mxu0 0.0
      %3473 = vmatpush1.msra.mxu0 0.0
      %3474 = vmatprep.subr.mxu0 0.0
      %3475 = vmatpush1.msra.mxu0 0.0
      %3476 = vmatprep.subr.mxu0 0.0
      %3477 = vmatpush1.msra.mxu0 0.0
      %3478 = vmatprep.subr.mxu0 0.0
      %3479 = vmatpush1.msra.mxu0 0.0
      %3480 = vmatprep.subr.mxu0 0.0
      %3481 = vmatpush1.msra.mxu0 0.0
      %3482 = vmatprep.subr.mxu0 0.0
      %3483 = vmatpush1.msra.mxu0 0.0
      %3484 = vmatprep.mubr.f32.mxu0 0.0
      %3485 = vmatmul.mubr.f32.gmra.mrb[0].mxu0 %v3418
      %v3486 = vpop.f32.mrb[0].mxu0
      %v3487 = vadd.f32 0.0, %v3486
      %v3488 = vpop.f32.mrb[0].mxu0
      %3489 = vdwg.mxu0
      %v3490 = vlaneseq
      %v3491 = vshrl.u32 %v3490, 7
      %v3492 = vsub.s32 3, %v3491
      %v3493 = vrot.slane %v307, %v3492
      %v3495 = vsel %vm471, %v3487, 0
      %3497 = vmatprep.subr.mxu0 0.0
      %3498 = vmatpush1.msra.mxu0 %v310
      %3499 = vmatprep.subr.mxu0 0.0
      %3500 = vmatpush1.msra.mxu0 %v311
      %3501 = vmatprep.subr.mxu0 0.0
      %3502 = vmatpush1.msra.mxu0 %v312
      %3503 = vmatprep.subr.mxu0 0.0
      %3504 = vmatpush1.msra.mxu0 %v313
      %3505 = vmatprep.subr.mxu0 0.0
      %3506 = vmatpush1.msra.mxu0 0.0
      %3507 = vmatprep.subr.mxu0 0.0
      %3508 = vmatpush1.msra.mxu0 0.0
      %3509 = vmatprep.subr.mxu0 0.0
      %3510 = vmatpush1.msra.mxu0 0.0
      %3511 = vmatprep.subr.mxu0 0.0
      %3512 = vmatpush1.msra.mxu0 0.0
      %3513 = vmatprep.subr.mxu0 0.0
      %3514 = vmatpush1.msra.mxu0 0.0
      %3515 = vmatprep.subr.mxu0 0.0
      %3516 = vmatpush1.msra.mxu0 0.0
      %3517 = vmatprep.subr.mxu0 0.0
      %3518 = vmatpush1.msra.mxu0 0.0
      %3519 = vmatprep.subr.mxu0 0.0
      %3520 = vmatpush1.msra.mxu0 0.0
      %3521 = vmatprep.subr.mxu0 0.0
      %3522 = vmatpush1.msra.mxu0 0.0
      %3523 = vmatprep.subr.mxu0 0.0
      %3524 = vmatpush1.msra.mxu0 0.0
      %3525 = vmatprep.subr.mxu0 0.0
      %3526 = vmatpush1.msra.mxu0 0.0
      %3527 = vmatprep.subr.mxu0 0.0
      %3528 = vmatpush1.msra.mxu0 0.0
      %3529 = vmatprep.subr.mxu0 0.0
      %3530 = vmatpush1.msra.mxu0 0.0
      %3531 = vmatprep.subr.mxu0 0.0
      %3532 = vmatpush1.msra.mxu0 0.0
      %3533 = vmatprep.subr.mxu0 0.0
      %3534 = vmatpush1.msra.mxu0 0.0
      %3535 = vmatprep.subr.mxu0 0.0
      %3536 = vmatpush1.msra.mxu0 0.0
      %3537 = vmatprep.subr.mxu0 0.0
      %3538 = vmatpush1.msra.mxu0 0.0
      %3539 = vmatprep.subr.mxu0 0.0
      %3540 = vmatpush1.msra.mxu0 0.0
      %3541 = vmatprep.subr.mxu0 0.0
      %3542 = vmatpush1.msra.mxu0 0.0
      %3543 = vmatprep.subr.mxu0 0.0
      %3544 = vmatpush1.msra.mxu0 0.0
      %3545 = vmatprep.subr.mxu0 0.0
      %3546 = vmatpush1.msra.mxu0 0.0
      %3547 = vmatprep.subr.mxu0 0.0
      %3548 = vmatpush1.msra.mxu0 0.0
      %3549 = vmatprep.subr.mxu0 0.0
      %3550 = vmatpush1.msra.mxu0 0.0
      %3551 = vmatprep.subr.mxu0 0.0
      %3552 = vmatpush1.msra.mxu0 0.0
      %3553 = vmatprep.subr.mxu0 0.0
      %3554 = vmatpush1.msra.mxu0 0.0
      %3555 = vmatprep.subr.mxu0 0.0
      %3556 = vmatpush1.msra.mxu0 0.0
      %3557 = vmatprep.subr.mxu0 0.0
      %3558 = vmatpush1.msra.mxu0 0.0
      %3559 = vmatprep.subr.mxu0 0.0
      %3560 = vmatpush1.msra.mxu0 0.0
      %3561 = vmatprep.mubr.f32.mxu0 0.0
      %3562 = vmatmul.mubr.f32.gmra.mrb[0].mxu0 %v3495
      %v3563 = vpop.f32.mrb[0].mxu0
      %v3564 = vadd.f32 %v3493, %v3563
      %v3565 = vpop.f32.mrb[0].mxu0
      %3566 = vdwg.mxu0
      %v3567 = vtanh.pop %v3564
      %v3568 = vlaneseq
      %v3569 = vshrl.u32 %v3568, 7
      %v3570 = vsub.s32 4, %v3569
      %v3571 = vrot.slane %v307, %v3570
      %v3573 = vsel %vm471, %v3567, 0
      %3575 = vmatprep.subr.mxu0 0.0
      %3576 = vmatpush1.msra.mxu0 %v314
      %3577 = vmatprep.subr.mxu0 0.0
      %3578 = vmatpush1.msra.mxu0 %v315
      %3579 = vmatprep.subr.mxu0 0.0
      %3580 = vmatpush1.msra.mxu0 %v316
      %3581 = vmatprep.subr.mxu0 0.0
      %3582 = vmatpush1.msra.mxu0 %v317
      %3583 = vmatprep.subr.mxu0 0.0
      %3584 = vmatpush1.msra.mxu0 0.0
      %3585 = vmatprep.subr.mxu0 0.0
      %3586 = vmatpush1.msra.mxu0 0.0
      %3587 = vmatprep.subr.mxu0 0.0
      %3588 = vmatpush1.msra.mxu0 0.0
      %3589 = vmatprep.subr.mxu0 0.0
      %3590 = vmatpush1.msra.mxu0 0.0
      %3591 = vmatprep.subr.mxu0 0.0
      %3592 = vmatpush1.msra.mxu0 0.0
      %3593 = vmatprep.subr.mxu0 0.0
      %3594 = vmatpush1.msra.mxu0 0.0
      %3595 = vmatprep.subr.mxu0 0.0
      %3596 = vmatpush1.msra.mxu0 0.0
      %3597 = vmatprep.subr.mxu0 0.0
      %3598 = vmatpush1.msra.mxu0 0.0
      %3599 = vmatprep.subr.mxu0 0.0
      %3600 = vmatpush1.msra.mxu0 0.0
      %3601 = vmatprep.subr.mxu0 0.0
      %3602 = vmatpush1.msra.mxu0 0.0
      %3603 = vmatprep.subr.mxu0 0.0
      %3604 = vmatpush1.msra.mxu0 0.0
      %3605 = vmatprep.subr.mxu0 0.0
      %3606 = vmatpush1.msra.mxu0 0.0
      %3607 = vmatprep.subr.mxu0 0.0
      %3608 = vmatpush1.msra.mxu0 0.0
      %3609 = vmatprep.subr.mxu0 0.0
      %3610 = vmatpush1.msra.mxu0 0.0
      %3611 = vmatprep.subr.mxu0 0.0
      %3612 = vmatpush1.msra.mxu0 0.0
      %3613 = vmatprep.subr.mxu0 0.0
      %3614 = vmatpush1.msra.mxu0 0.0
      %3615 = vmatprep.subr.mxu0 0.0
      %3616 = vmatpush1.msra.mxu0 0.0
      %3617 = vmatprep.subr.mxu0 0.0
      %3618 = vmatpush1.msra.mxu0 0.0
      %3619 = vmatprep.subr.mxu0 0.0
      %3620 = vmatpush1.msra.mxu0 0.0
      %3621 = vmatprep.subr.mxu0 0.0
      %3622 = vmatpush1.msra.mxu0 0.0
      %3623 = vmatprep.subr.mxu0 0.0
      %3624 = vmatpush1.msra.mxu0 0.0
      %3625 = vmatprep.subr.mxu0 0.0
      %3626 = vmatpush1.msra.mxu0 0.0
      %3627 = vmatprep.subr.mxu0 0.0
      %3628 = vmatpush1.msra.mxu0 0.0
      %3629 = vmatprep.subr.mxu0 0.0
      %3630 = vmatpush1.msra.mxu0 0.0
      %3631 = vmatprep.subr.mxu0 0.0
      %3632 = vmatpush1.msra.mxu0 0.0
      %3633 = vmatprep.subr.mxu0 0.0
      %3634 = vmatpush1.msra.mxu0 0.0
      %3635 = vmatprep.subr.mxu0 0.0
      %3636 = vmatpush1.msra.mxu0 0.0
      %3637 = vmatprep.subr.mxu0 0.0
      %3638 = vmatpush1.msra.mxu0 0.0
      %3639 = vmatprep.mubr.f32.mxu0 0.0
      %3640 = vmatmul.mubr.f32.gmra.mrb[0].mxu0 %v3573
      %v3641 = vpop.f32.mrb[0].mxu0
      %v3642 = vadd.f32 %v3571, %v3641
      %v3643 = vpop.f32.mrb[0].mxu0
      %3644 = vdwg.mxu0
      %3645 = vst [vmem:[%s305] sm:$0x3] %v3642
      %p3646 = scmp.lt.s32.totalorder %s19, 1
      %s3647 = scalar_select %p3646, %s19, 1
      %s3648 = smul.addr %s3647, 2
      %s3649 = scalar_lea.vmem %s8, %s3648
      // Predicated region
      $region53: #{ascc_albert_forward.1} parent=51 // pred_check
        %p3650 = pneg %p210
      $region54: #{ascc_albert_forward.1} parent=51 // pred_check_branch
        %3652 = sbr.rel (%p3650) target = $region56
      $region55: #{ascc_albert_forward.1} parent=51 // pred_region
        _
      $region56: #{ascc_albert_forward.1} parent=51 // pred_fallthru
        _
    $region52: #{ascc_albert_forward.1} parent=5 // pred_fallthru
      _
    %p3653 = scmp.le.s32.totalorder 2, %s14
    // Predicated region
    $region57: #{ascc_albert_forward.1} parent=5 // pred_check
      %p3654 = pneg %p3653
    $region58: #{ascc_albert_forward.1} parent=5 // pred_check_branch
      %3656 = sbr.rel (%p3654) target = $region60
    $region59: #{ascc_albert_forward.1} parent=5 // pred_region
      %s3657 = ssub.s32 %s14, 2
      // Predicated region
      $region61: #{ascc_albert_forward.1} parent=59 // pred_check
        %p3658 = pneg %p216
      $region62: #{ascc_albert_forward.1} parent=59 // pred_check_branch
        %3660 = sbr.rel (%p3658) target = $region64
      $region63: #{ascc_albert_forward.1} parent=59 // pred_region
        %p3661 = scmp.lt.s32.totalorder %s20, 1
        %s3662 = scalar_select %p3661, %s20, 1
        %s3663 = smul.addr %s3662, 2
        %s3664 = scalar_lea.vmem %s8, %s3663
      $region64: #{ascc_albert_forward.1} parent=59 // pred_fallthru
        _
    $region60: #{ascc_albert_forward.1} parent=5 // pred_fallthru
      _
  $region6: #{ascc_albert_forward.1} parent=0 // loop_footer
    %s18 = sadd.s32 1, %s14
  $region7: #{ascc_albert_forward.1} parent=0 // loop_footer_branch
    %13 = sbr.rel target = $region3
  $region8: #{ascc_albert_forward.1} parent=0 // loop_exit
    _

</llo_original>
